<compile_context>
chip_gen: v6e
topology: v6e:2x2x1
jax: 0.10.0
libtpu: 0.0.40
codegen_flags: <defaults>
</compile_context>

<pallas_src>
import functools

import jax
import jax.numpy as jnp
from jax.experimental import pallas as pl
from jax.experimental.pallas import tpu as pltpu


# ----------------------------------------------------------------------------
# Fused forward kernel
# ----------------------------------------------------------------------------
def _fused_forward_kernel(x_ref, adjb_ref, w_sq_ref, w_lr_ref, b_lr_ref,
                          attblk_ref, postw_ref, headsel_ref, vecs_ref, o_ref,
                          *, hidden, heads, layer_num):
    f32 = jnp.float32
    bf16 = jnp.bfloat16
    C = hidden
    H = heads
    HC = H * C
    N = x_ref.shape[0]

    vecs = vecs_ref[...]                       # [R, C] f32 — all bias / LN row vectors
    head_sel = headsel_ref[...]                # [H, H*C] f32, head_sel[h, h*C+c] = 1

    def vrow(k):                               # [1, C] row vector (static row k)
        return vecs[k:k + 1, :]

    def mm(a, w):                              # bf16 MXU matmul, f32 accumulate
        return jnp.dot(a.astype(bf16), w, preferred_element_type=f32)

    def leaky01(v):                            # nn.LeakyReLU default slope
        return jnp.where(v >= 0.0, v, 0.01 * v)

    def layernorm(v, g, b):                    # nn.LayerNorm(hidden), eps=1e-5, f32
        mean = jnp.mean(v, axis=-1, keepdims=True)
        vc = v - mean
        var = jnp.mean(vc * vc, axis=-1, keepdims=True)
        return vc * jax.lax.rsqrt(var + 1e-5) * g + b

    # ---- embed_fc: Linear -> LeakyReLU -> Linear ----
    h = leaky01(mm(x_ref[...], w_sq_ref[0]) + vrow(0))
    h = mm(h, w_sq_ref[1]) + vrow(1)

    # Additive edge mask (0 on edges / -1e9 elsewhere), broadcast ONCE (hoisted out of loop).
    adj_bias = jnp.broadcast_to(adjb_ref[...], (N, N, H))          # [Ndst, Nsrc, H]

    for l in range(layer_num):
        base = 2 + 7 * l
        residual = h

        # Merged lin_l / lin_r: one [N, 2*H*C] MXU matmul, split at lane-aligned midpoint.
        xlr = mm(h, w_lr_ref[l]) + b_lr_ref[l]                     # [N, 2*H*C]
        xl2d = xlr[:, :HC]                                         # source transform [N, H*C]
        xr2d = xlr[:, HC:]                                         # target transform [N, H*C]

        # GATv2 attention, lane-dense all-heads form.
        s = xr2d[:, None, :] + xl2d[None, :, :]                    # [Ndst, Nsrc, H*C]
        s = jnp.where(s >= 0.0, s, 0.2 * s)                        # GATv2 leaky_relu(0.2)
        # attention logits via MXU against block-diagonal att matrix [H*C, H]
        e = mm(s.reshape(N * N, HC), attblk_ref[l]).reshape(N, N, H)
        e = e + adj_bias
        e = e - jnp.max(e, axis=1, keepdims=True)                  # softmax over sources
        p = jnp.exp(e)                                             # masked entries -> 0
        alpha = p * pl.reciprocal(jnp.sum(p, axis=1, keepdims=True), approx=True)

        # Expand alpha per head over its C channels (one matmul vs 0/1 selection matrix),
        # then aggregate sources:  gat[i, h*C+c] = sum_j alpha[i,j,h] * xl[j, h*C+c].
        alpha_exp = jnp.dot(alpha.reshape(N * N, H), head_sel,
                            preferred_element_type=f32).reshape(N, N, HC)
        gat2d = jnp.sum(alpha_exp * xl2d[None, :, :], axis=1)      # [N, H*C]

        # Post-conv Linear(heads*hidden -> hidden): ONE matmul (gat bias folded in host-side).
        h2 = mm(gat2d, postw_ref[l]) + vrow(base + 0)
        h = layernorm(h2 + residual, vrow(base + 1), vrow(base + 2))   # gatnorm(x + residual)

        residual = h
        h2 = leaky01(mm(h, w_sq_ref[2 + 2 * l]) + vrow(base + 3))      # fc block
        h2 = mm(h2, w_sq_ref[3 + 2 * l]) + vrow(base + 4)
        h = layernorm(h2 + residual, vrow(base + 5), vrow(base + 6))   # fcnorm(x + residual)

    # ---- readout: Linear -> LeakyReLU -> Linear -> LeakyReLU -> Linear -> Sigmoid ----
    rb = 2 + 7 * layer_num
    y = leaky01(mm(h, w_sq_ref[2 + 2 * layer_num]) + vrow(rb + 0))
    y = leaky01(mm(y, w_sq_ref[3 + 2 * layer_num]) + vrow(rb + 1))
    y = mm(y, w_sq_ref[4 + 2 * layer_num]) + vrow(rb + 2)              # col 0 is the logit
    o_ref[...] = 0.5 * (jnp.tanh(0.5 * y[:, 0:1]) + 1.0)               # stable sigmoid (EUP)


# ----------------------------------------------------------------------------
# Parameter init (deterministic, synthetic — PyTorch-like natural shapes)
# ----------------------------------------------------------------------------
def init_params(key, input_dim, hidden_dim, heads, layer_num=2):
    keys = iter(jax.random.split(key, 128))

    def lin(in_d, out_d):
        w = jax.random.normal(next(keys), (in_d, out_d), jnp.float32) / jnp.sqrt(
            jnp.float32(in_d))
        b = jax.random.normal(next(keys), (1, out_d), jnp.float32) * 0.01
        return w, b

    p = {}
    p["embed_w1"], p["embed_b1"] = lin(input_dim, hidden_dim)
    p["embed_w2"], p["embed_b2"] = lin(hidden_dim, hidden_dim)

    layers = []
    for _ in range(layer_num):
        lp = {}
        lp["lin_l_w"], lp["lin_l_b"] = lin(hidden_dim, heads * hidden_dim)
        lp["lin_r_w"], lp["lin_r_b"] = lin(hidden_dim, heads * hidden_dim)
        lp["att"] = jax.random.normal(next(keys), (heads, hidden_dim),
                                      jnp.float32) / jnp.sqrt(jnp.float32(hidden_dim))
        lp["gat_bias"] = jnp.zeros((1, heads * hidden_dim), jnp.float32)
        lp["post_w"], lp["post_b"] = lin(heads * hidden_dim, hidden_dim)
        lp["gatnorm_g"] = jnp.ones((1, hidden_dim), jnp.float32)
        lp["gatnorm_b"] = jnp.zeros((1, hidden_dim), jnp.float32)
        lp["fc_w1"], lp["fc_b1"] = lin(hidden_dim, hidden_dim)
        lp["fc_w2"], lp["fc_b2"] = lin(hidden_dim, hidden_dim)
        lp["fcnorm_g"] = jnp.ones((1, hidden_dim), jnp.float32)
        lp["fcnorm_b"] = jnp.zeros((1, hidden_dim), jnp.float32)
        layers.append(lp)
    p["layers"] = layers

    p["ro_w1"], p["ro_b1"] = lin(hidden_dim, hidden_dim)
    p["ro_w2"], p["ro_b2"] = lin(hidden_dim, hidden_dim)
    p["ro_w3"], p["ro_b3"] = lin(hidden_dim, 1)
    return p


# ----------------------------------------------------------------------------
# Host-side packing: 36 tiny params -> 7 lane-dense slabs (one DMA each)
# ----------------------------------------------------------------------------
def pack_params(params, hidden_dim, heads):
    f32, bf16 = jnp.float32, jnp.bfloat16
    H, C = heads, hidden_dim
    HC = H * C
    assert params["embed_w1"].shape[0] <= C, "packing assumes input_dim <= hidden_dim"

    def pad_rows(w, rows):
        return jnp.zeros((rows, w.shape[1]), f32).at[:w.shape[0], :].set(w)

    # square [C, C] weights: embed x2, per-layer fc x2, readout x3 (ro_w3 column-padded)
    sq = [pad_rows(params["embed_w1"], C), params["embed_w2"]]
    for lp in params["layers"]:
        sq += [lp["fc_w1"], lp["fc_w2"]]
    sq += [params["ro_w1"], params["ro_w2"],
           jnp.zeros((C, C), f32).at[:, :1].set(params["ro_w3"])]
    w_sq = jnp.stack(sq, axis=0).astype(bf16)                                # [K, C, C]

    # merged lin_l | lin_r weights / biases
    w_lr = jnp.stack([jnp.concatenate([lp["lin_l_w"], lp["lin_r_w"]], axis=1)
                      for lp in params["layers"]], axis=0).astype(bf16)      # [L, C, 2HC]
    b_lr = jnp.stack([jnp.concatenate([lp["lin_l_b"], lp["lin_r_b"]], axis=1)
                      for lp in params["layers"]], axis=0)                   # [L, 1, 2HC] f32

    # 0/1 head-selection matrix and per-layer block-diagonal attention matrices
    head_sel = jnp.repeat(jnp.eye(H, dtype=f32), C, axis=1)                  # [H, H*C]
    att_blk = jnp.stack([head_sel.T * lp["att"].reshape(HC, 1)
                         for lp in params["layers"]], axis=0).astype(bf16)   # [L, HC, H]

    # post-conv weights; GATv2 output bias folded into the post-Linear bias
    post_w = jnp.stack([lp["post_w"] for lp in params["layers"]],
                       axis=0).astype(bf16)                                  # [L, HC, C]

    # row-vector slab [R, C] f32 (biases, LN gammas/betas), fixed static row layout
    rows = [params["embed_b1"], params["embed_b2"]]
    for lp in params["layers"]:
        post_b_eff = lp["gat_bias"] @ lp["post_w"] + lp["post_b"]
        rows += [post_b_eff, lp["gatnorm_g"], lp["gatnorm_b"],
                 lp["fc_b1"], lp["fc_b2"], lp["fcnorm_g"], lp["fcnorm_b"]]
    rows += [params["ro_b1"], params["ro_b2"],
             jnp.zeros((1, C), f32).at[:, :1].set(params["ro_b3"])]
    vecs = jnp.concatenate(rows, axis=0)                                     # [R, C]

    return dict(w_sq=w_sq, w_lr=w_lr, b_lr=b_lr, att_blk=att_blk,
                post_w=post_w, head_sel=head_sel, vecs=vecs)


# ----------------------------------------------------------------------------
# Forward: dense additive adjacency mask in plain JAX, then one pallas_call
# ----------------------------------------------------------------------------
def build_adj_bias(edge_index, num_nodes):
    # adj[dst, src] = 1 for every edge src -> dst, plus self loops (PyG GATv2Conv
    # add_self_loops semantics).  Returned as an additive mask [Ndst, Nsrc, 1].
    src, dst = edge_index[0], edge_index[1]
    adj = jnp.zeros((num_nodes, num_nodes), jnp.float32)
    adj = adj.at[dst, src].set(1.0)
    adj = jnp.maximum(adj, jnp.eye(num_nodes, dtype=jnp.float32))
    return ((adj - 1.0) * 1e9)[:, :, None]


def network_finetuning_forward(packed, x, edge_index, *, hidden_dim, heads,
                               layer_num=2):
    n, d_in = x.shape
    assert d_in <= hidden_dim
    x_pad = jnp.zeros((n, hidden_dim), jnp.float32).at[:, :d_in].set(x)
    adj_bias = build_adj_bias(edge_index, n)
    kernel = functools.partial(_fused_forward_kernel, hidden=hidden_dim,
                               heads=heads, layer_num=layer_num)
    inputs = (x_pad, adj_bias, packed["w_sq"], packed["w_lr"], packed["b_lr"],
              packed["att_blk"], packed["post_w"], packed["head_sel"],
              packed["vecs"])
    return pl.pallas_call(
        kernel,
        out_shape=jax.ShapeDtypeStruct((n, 1), jnp.float32),
        in_specs=[pl.BlockSpec(memory_space=pltpu.MemorySpace.VMEM)] * len(inputs),
        out_specs=pl.BlockSpec(memory_space=pltpu.MemorySpace.VMEM),
    )(*inputs)


# ----------------------------------------------------------------------------
if __name__ == "__main__":
    INPUT_DIM = 16
    HIDDEN_DIM = 32
    HEADS = 8
    N_NODES = 8
    LAYER_NUM = 2

    key = jax.random.PRNGKey(0)
    k_params, k_x = jax.random.split(key)

    params = init_params(k_params, INPUT_DIM, HIDDEN_DIM, HEADS, layer_num=LAYER_NUM)
    packed = pack_params(params, HIDDEN_DIM, HEADS)

    # data.x: [N, input_dim]
    x = jax.random.normal(k_x, (N_NODES, INPUT_DIM), jnp.float32)
    # data.edge_index: [2, E] — bidirectional ring graph.
    src = jnp.arange(N_NODES, dtype=jnp.int32)
    dst = (src + 1) % N_NODES
    edge_index = jnp.concatenate(
        [jnp.stack([src, dst], axis=0), jnp.stack([dst, src], axis=0)], axis=1)

    fwd = jax.jit(functools.partial(network_finetuning_forward,
                                    hidden_dim=HIDDEN_DIM, heads=HEADS,
                                    layer_num=LAYER_NUM))
    y = fwd(packed, x, edge_index)
    jax.block_until_ready(y)
    assert y.shape == (N_NODES, 1)
    assert bool(jnp.all(jnp.isfinite(y)))
    assert bool(jnp.all((y >= 0.0) & (y <= 1.0)))
    print("KERNEL_OK")
</pallas_src>

<mosaic_0001>
module attributes {stable_mosaic.version = 11 : i64} {
  func.func @_fused_forward_kernel(%arg0: memref<8x32xf32, #tpu.memory_space<vmem>>, %arg1: memref<8x8x1xf32, #tpu.memory_space<vmem>>, %arg2: memref<9x32x32xbf16, #tpu.memory_space<vmem>>, %arg3: memref<2x32x512xbf16, #tpu.memory_space<vmem>>, %arg4: memref<2x1x512xf32, #tpu.memory_space<vmem>>, %arg5: memref<2x256x8xbf16, #tpu.memory_space<vmem>>, %arg6: memref<2x256x32xbf16, #tpu.memory_space<vmem>>, %arg7: memref<8x256xf32, #tpu.memory_space<vmem>>, %arg8: memref<19x32xf32, #tpu.memory_space<vmem>>, %arg9: memref<8x1xf32, #tpu.memory_space<vmem>>) attributes {dimension_semantics = [], scalar_prefetch = 0 : i64, scratch_operands = 0 : i64, tpu.core_type = #tpu.core_type<tc>} {
    %c0 = arith.constant 0 : index
    %c0_0 = arith.constant 0 : index
    %0 = vector.load %arg8[%c0, %c0_0] : memref<19x32xf32, #tpu.memory_space<vmem>>, vector<19x32xf32>
    %c0_1 = arith.constant 0 : index
    %c0_2 = arith.constant 0 : index
    %1 = vector.load %arg7[%c0_1, %c0_2] : memref<8x256xf32, #tpu.memory_space<vmem>>, vector<8x256xf32>
    %c0_3 = arith.constant 0 : index
    %c0_4 = arith.constant 0 : index
    %2 = vector.load %arg0[%c0_3, %c0_4] : memref<8x32xf32, #tpu.memory_space<vmem>>, vector<8x32xf32>
    %c0_5 = arith.constant 0 : index
    %c0_6 = arith.constant 0 : index
    %c0_7 = arith.constant 0 : index
    %3 = vector.load %arg2[%c0_5, %c0_6, %c0_7] : memref<9x32x32xbf16, #tpu.memory_space<vmem>>, vector<1x32x32xbf16>
    %4 = vector.shape_cast %3 : vector<1x32x32xbf16> to vector<32x32xbf16>
    %5 = arith.truncf %2 : vector<8x32xf32> to vector<8x32xbf16>
    %cst = arith.constant dense<0.000000e+00> : vector<8x32xf32>
    %6 = tpu.matmul %5, %4, %cst {dimension_numbers = #tpu.dot_dimension_numbers<[1], [0], [0], [1], [0, 0, 1, 1], [], []>} : vector<8x32xbf16>, vector<32x32xbf16>, vector<8x32xf32> -> vector<8x32xf32>
    %7 = vector.extract_strided_slice %0 {offsets = [0, 0], sizes = [1, 32], strides = [1, 1]} : vector<19x32xf32> to vector<1x32xf32>
    %8 = vector.broadcast %7 : vector<1x32xf32> to vector<8x32xf32>
    %9 = arith.addf %6, %8 : vector<8x32xf32>
    %cst_8 = arith.constant 0.000000e+00 : f32
    %10 = vector.broadcast %cst_8 : f32 to vector<8x32xf32>
    %11 = arith.cmpf oge, %9, %10 : vector<8x32xf32>
    %cst_9 = arith.constant 0.00999999977 : f32
    %12 = vector.broadcast %cst_9 : f32 to vector<8x32xf32>
    %13 = arith.mulf %12, %9 : vector<8x32xf32>
    %14 = arith.select %11, %9, %13 : vector<8x32xi1>, vector<8x32xf32>
    %c1 = arith.constant 1 : index
    %c0_10 = arith.constant 0 : index
    %c0_11 = arith.constant 0 : index
    %15 = vector.load %arg2[%c1, %c0_10, %c0_11] : memref<9x32x32xbf16, #tpu.memory_space<vmem>>, vector<1x32x32xbf16>
    %16 = vector.shape_cast %15 : vector<1x32x32xbf16> to vector<32x32xbf16>
    %17 = arith.truncf %14 : vector<8x32xf32> to vector<8x32xbf16>
    %cst_12 = arith.constant dense<0.000000e+00> : vector<8x32xf32>
    %18 = tpu.matmul %17, %16, %cst_12 {dimension_numbers = #tpu.dot_dimension_numbers<[1], [0], [0], [1], [0, 0, 1, 1], [], []>} : vector<8x32xbf16>, vector<32x32xbf16>, vector<8x32xf32> -> vector<8x32xf32>
    %19 = vector.extract_strided_slice %0 {offsets = [1, 0], sizes = [1, 32], strides = [1, 1]} : vector<19x32xf32> to vector<1x32xf32>
    %20 = vector.broadcast %19 : vector<1x32xf32> to vector<8x32xf32>
    %21 = arith.addf %18, %20 : vector<8x32xf32>
    %c0_13 = arith.constant 0 : index
    %c0_14 = arith.constant 0 : index
    %c0_15 = arith.constant 0 : index
    %22 = vector.load %arg1[%c0_13, %c0_14, %c0_15] : memref<8x8x1xf32, #tpu.memory_space<vmem>>, vector<8x8x1xf32>
    %23 = vector.shape_cast %22 : vector<8x8x1xf32> to vector<8x8x1xf32>
    %24 = vector.broadcast %23 : vector<8x8x1xf32> to vector<8x8x8xf32>
    %c0_16 = arith.constant 0 : index
    %c0_17 = arith.constant 0 : index
    %c0_18 = arith.constant 0 : index
    %25 = vector.load %arg3[%c0_16, %c0_17, %c0_18] : memref<2x32x512xbf16, #tpu.memory_space<vmem>>, vector<1x32x512xbf16>
    %26 = vector.shape_cast %25 : vector<1x32x512xbf16> to vector<32x512xbf16>
    %27 = arith.truncf %21 : vector<8x32xf32> to vector<8x32xbf16>
    %cst_19 = arith.constant dense<0.000000e+00> : vector<8x512xf32>
    %28 = tpu.matmul %27, %26, %cst_19 {dimension_numbers = #tpu.dot_dimension_numbers<[1], [0], [0], [1], [0, 0, 1, 1], [], []>} : vector<8x32xbf16>, vector<32x512xbf16>, vector<8x512xf32> -> vector<8x512xf32>
    %c0_20 = arith.constant 0 : index
    %c0_21 = arith.constant 0 : index
    %c0_22 = arith.constant 0 : index
    %29 = vector.load %arg4[%c0_20, %c0_21, %c0_22] : memref<2x1x512xf32, #tpu.memory_space<vmem>>, vector<1x1x512xf32>
    %30 = vector.shape_cast %29 : vector<1x1x512xf32> to vector<1x512xf32>
    %31 = vector.broadcast %30 : vector<1x512xf32> to vector<8x512xf32>
    %32 = arith.addf %28, %31 : vector<8x512xf32>
    %33 = vector.extract_strided_slice %32 {offsets = [0, 0], sizes = [8, 256], strides = [1, 1]} : vector<8x512xf32> to vector<8x256xf32>
    %34 = vector.extract_strided_slice %32 {offsets = [0, 256], sizes = [8, 256], strides = [1, 1]} : vector<8x512xf32> to vector<8x256xf32>
    %35 = vector.shape_cast %34 : vector<8x256xf32> to vector<8x1x256xf32>
    %36 = vector.shape_cast %33 : vector<8x256xf32> to vector<1x8x256xf32>
    %37 = vector.broadcast %35 : vector<8x1x256xf32> to vector<8x8x256xf32>
    %38 = vector.broadcast %36 : vector<1x8x256xf32> to vector<8x8x256xf32>
    %39 = arith.addf %37, %38 : vector<8x8x256xf32>
    %cst_23 = arith.constant 0.000000e+00 : f32
    %40 = vector.broadcast %cst_23 : f32 to vector<8x8x256xf32>
    %41 = arith.cmpf oge, %39, %40 : vector<8x8x256xf32>
    %cst_24 = arith.constant 2.000000e-01 : f32
    %42 = vector.broadcast %cst_24 : f32 to vector<8x8x256xf32>
    %43 = arith.mulf %42, %39 : vector<8x8x256xf32>
    %44 = arith.select %41, %39, %43 : vector<8x8x256xi1>, vector<8x8x256xf32>
    %45 = vector.shape_cast %44 : vector<8x8x256xf32> to vector<64x256xf32>
    %c0_25 = arith.constant 0 : index
    %c0_26 = arith.constant 0 : index
    %c0_27 = arith.constant 0 : index
    %46 = vector.load %arg5[%c0_25, %c0_26, %c0_27] : memref<2x256x8xbf16, #tpu.memory_space<vmem>>, vector<1x256x8xbf16>
    %47 = vector.shape_cast %46 : vector<1x256x8xbf16> to vector<256x8xbf16>
    %48 = arith.truncf %45 : vector<64x256xf32> to vector<64x256xbf16>
    %cst_28 = arith.constant dense<0.000000e+00> : vector<64x8xf32>
    %49 = tpu.matmul %48, %47, %cst_28 {dimension_numbers = #tpu.dot_dimension_numbers<[1], [0], [0], [1], [0, 0, 1, 1], [], []>} : vector<64x256xbf16>, vector<256x8xbf16>, vector<64x8xf32> -> vector<64x8xf32>
    %50 = vector.shape_cast %49 : vector<64x8xf32> to vector<8x8x8xf32>
    %51 = arith.addf %50, %24 : vector<8x8x8xf32>
    %cst_29 = arith.constant dense<0xFF800000> : vector<8x8xf32>
    %52 = vector.multi_reduction <maximumf>, %51, %cst_29 [1] : vector<8x8x8xf32> to vector<8x8xf32>
    %53 = vector.shape_cast %52 : vector<8x8xf32> to vector<8x1x8xf32>
    %54 = vector.broadcast %53 : vector<8x1x8xf32> to vector<8x8x8xf32>
    %55 = arith.subf %51, %54 : vector<8x8x8xf32>
    %56 = math.exp %55 : vector<8x8x8xf32>
    %cst_30 = arith.constant dense<0.000000e+00> : vector<8x8xf32>
    %57 = vector.multi_reduction <add>, %56, %cst_30 [1] : vector<8x8x8xf32> to vector<8x8xf32>
    %58 = vector.shape_cast %57 : vector<8x8xf32> to vector<8x1x8xf32>
    %59 = tpu.reciprocal %58 {approx = true} : vector<8x1x8xf32> -> vector<8x1x8xf32>
    %60 = vector.broadcast %59 : vector<8x1x8xf32> to vector<8x8x8xf32>
    %61 = arith.mulf %56, %60 : vector<8x8x8xf32>
    %62 = vector.shape_cast %61 : vector<8x8x8xf32> to vector<64x8xf32>
    %cst_31 = arith.constant dense<0.000000e+00> : vector<64x256xf32>
    %63 = tpu.matmul %62, %1, %cst_31 {dimension_numbers = #tpu.dot_dimension_numbers<[1], [0], [0], [1], [0, 0, 1, 1], [], []>} : vector<64x8xf32>, vector<8x256xf32>, vector<64x256xf32> -> vector<64x256xf32>
    %64 = vector.shape_cast %63 : vector<64x256xf32> to vector<8x8x256xf32>
    %65 = vector.shape_cast %33 : vector<8x256xf32> to vector<1x8x256xf32>
    %66 = vector.broadcast %65 : vector<1x8x256xf32> to vector<8x8x256xf32>
    %67 = arith.mulf %64, %66 : vector<8x8x256xf32>
    %cst_32 = arith.constant dense<0.000000e+00> : vector<8x256xf32>
    %68 = vector.multi_reduction <add>, %67, %cst_32 [1] : vector<8x8x256xf32> to vector<8x256xf32>
    %c0_33 = arith.constant 0 : index
    %c0_34 = arith.constant 0 : index
    %c0_35 = arith.constant 0 : index
    %69 = vector.load %arg6[%c0_33, %c0_34, %c0_35] : memref<2x256x32xbf16, #tpu.memory_space<vmem>>, vector<1x256x32xbf16>
    %70 = vector.shape_cast %69 : vector<1x256x32xbf16> to vector<256x32xbf16>
    %71 = arith.truncf %68 : vector<8x256xf32> to vector<8x256xbf16>
    %cst_36 = arith.constant dense<0.000000e+00> : vector<8x32xf32>
    %72 = tpu.matmul %71, %70, %cst_36 {dimension_numbers = #tpu.dot_dimension_numbers<[1], [0], [0], [1], [0, 0, 1, 1], [], []>} : vector<8x256xbf16>, vector<256x32xbf16>, vector<8x32xf32> -> vector<8x32xf32>
    %73 = vector.extract_strided_slice %0 {offsets = [2, 0], sizes = [1, 32], strides = [1, 1]} : vector<19x32xf32> to vector<1x32xf32>
    %74 = vector.broadcast %73 : vector<1x32xf32> to vector<8x32xf32>
    %75 = arith.addf %72, %74 : vector<8x32xf32>
    %76 = arith.addf %75, %21 : vector<8x32xf32>
    %77 = vector.extract_strided_slice %0 {offsets = [3, 0], sizes = [1, 32], strides = [1, 1]} : vector<19x32xf32> to vector<1x32xf32>
    %78 = vector.extract_strided_slice %0 {offsets = [4, 0], sizes = [1, 32], strides = [1, 1]} : vector<19x32xf32> to vector<1x32xf32>
    %cst_37 = arith.constant dense<0.000000e+00> : vector<8xf32>
    %79 = vector.multi_reduction <add>, %76, %cst_37 [1] : vector<8x32xf32> to vector<8xf32>
    %80 = vector.shape_cast %79 : vector<8xf32> to vector<8x1xf32>
    %cst_38 = arith.constant 3.200000e+01 : f32
    %81 = vector.broadcast %cst_38 : f32 to vector<8x1xf32>
    %82 = arith.divf %80, %81 : vector<8x1xf32>
    %83 = vector.broadcast %82 : vector<8x1xf32> to vector<8x32xf32>
    %84 = arith.subf %76, %83 : vector<8x32xf32>
    %85 = arith.mulf %84, %84 : vector<8x32xf32>
    %cst_39 = arith.constant dense<0.000000e+00> : vector<8xf32>
    %86 = vector.multi_reduction <add>, %85, %cst_39 [1] : vector<8x32xf32> to vector<8xf32>
    %87 = vector.shape_cast %86 : vector<8xf32> to vector<8x1xf32>
    %cst_40 = arith.constant 3.200000e+01 : f32
    %88 = vector.broadcast %cst_40 : f32 to vector<8x1xf32>
    %89 = arith.divf %87, %88 : vector<8x1xf32>
    %cst_41 = arith.constant 9.99999974E-6 : f32
    %90 = vector.broadcast %cst_41 : f32 to vector<8x1xf32>
    %91 = arith.addf %89, %90 : vector<8x1xf32>
    %92 = math.rsqrt %91 : vector<8x1xf32>
    %93 = vector.broadcast %92 : vector<8x1xf32> to vector<8x32xf32>
    %94 = arith.mulf %84, %93 : vector<8x32xf32>
    %95 = vector.broadcast %77 : vector<1x32xf32> to vector<8x32xf32>
    %96 = arith.mulf %94, %95 : vector<8x32xf32>
    %97 = vector.broadcast %78 : vector<1x32xf32> to vector<8x32xf32>
    %98 = arith.addf %96, %97 : vector<8x32xf32>
    %c2 = arith.constant 2 : index
    %c0_42 = arith.constant 0 : index
    %c0_43 = arith.constant 0 : index
    %99 = vector.load %arg2[%c2, %c0_42, %c0_43] : memref<9x32x32xbf16, #tpu.memory_space<vmem>>, vector<1x32x32xbf16>
    %100 = vector.shape_cast %99 : vector<1x32x32xbf16> to vector<32x32xbf16>
    %101 = arith.truncf %98 : vector<8x32xf32> to vector<8x32xbf16>
    %cst_44 = arith.constant dense<0.000000e+00> : vector<8x32xf32>
    %102 = tpu.matmul %101, %100, %cst_44 {dimension_numbers = #tpu.dot_dimension_numbers<[1], [0], [0], [1], [0, 0, 1, 1], [], []>} : vector<8x32xbf16>, vector<32x32xbf16>, vector<8x32xf32> -> vector<8x32xf32>
    %103 = vector.extract_strided_slice %0 {offsets = [5, 0], sizes = [1, 32], strides = [1, 1]} : vector<19x32xf32> to vector<1x32xf32>
    %104 = vector.broadcast %103 : vector<1x32xf32> to vector<8x32xf32>
    %105 = arith.addf %102, %104 : vector<8x32xf32>
    %cst_45 = arith.constant 0.000000e+00 : f32
    %106 = vector.broadcast %cst_45 : f32 to vector<8x32xf32>
    %107 = arith.cmpf oge, %105, %106 : vector<8x32xf32>
    %cst_46 = arith.constant 0.00999999977 : f32
    %108 = vector.broadcast %cst_46 : f32 to vector<8x32xf32>
    %109 = arith.mulf %108, %105 : vector<8x32xf32>
    %110 = arith.select %107, %105, %109 : vector<8x32xi1>, vector<8x32xf32>
    %c3 = arith.constant 3 : index
    %c0_47 = arith.constant 0 : index
    %c0_48 = arith.constant 0 : index
    %111 = vector.load %arg2[%c3, %c0_47, %c0_48] : memref<9x32x32xbf16, #tpu.memory_space<vmem>>, vector<1x32x32xbf16>
    %112 = vector.shape_cast %111 : vector<1x32x32xbf16> to vector<32x32xbf16>
    %113 = arith.truncf %110 : vector<8x32xf32> to vector<8x32xbf16>
    %cst_49 = arith.constant dense<0.000000e+00> : vector<8x32xf32>
    %114 = tpu.matmul %113, %112, %cst_49 {dimension_numbers = #tpu.dot_dimension_numbers<[1], [0], [0], [1], [0, 0, 1, 1], [], []>} : vector<8x32xbf16>, vector<32x32xbf16>, vector<8x32xf32> -> vector<8x32xf32>
    %115 = vector.extract_strided_slice %0 {offsets = [6, 0], sizes = [1, 32], strides = [1, 1]} : vector<19x32xf32> to vector<1x32xf32>
    %116 = vector.broadcast %115 : vector<1x32xf32> to vector<8x32xf32>
    %117 = arith.addf %114, %116 : vector<8x32xf32>
    %118 = arith.addf %117, %98 : vector<8x32xf32>
    %119 = vector.extract_strided_slice %0 {offsets = [7, 0], sizes = [1, 32], strides = [1, 1]} : vector<19x32xf32> to vector<1x32xf32>
    %120 = vector.extract_strided_slice %0 {offsets = [8, 0], sizes = [1, 32], strides = [1, 1]} : vector<19x32xf32> to vector<1x32xf32>
    %cst_50 = arith.constant dense<0.000000e+00> : vector<8xf32>
    %121 = vector.multi_reduction <add>, %118, %cst_50 [1] : vector<8x32xf32> to vector<8xf32>
    %122 = vector.shape_cast %121 : vector<8xf32> to vector<8x1xf32>
    %cst_51 = arith.constant 3.200000e+01 : f32
    %123 = vector.broadcast %cst_51 : f32 to vector<8x1xf32>
    %124 = arith.divf %122, %123 : vector<8x1xf32>
    %125 = vector.broadcast %124 : vector<8x1xf32> to vector<8x32xf32>
    %126 = arith.subf %118, %125 : vector<8x32xf32>
    %127 = arith.mulf %126, %126 : vector<8x32xf32>
    %cst_52 = arith.constant dense<0.000000e+00> : vector<8xf32>
    %128 = vector.multi_reduction <add>, %127, %cst_52 [1] : vector<8x32xf32> to vector<8xf32>
    %129 = vector.shape_cast %128 : vector<8xf32> to vector<8x1xf32>
    %cst_53 = arith.constant 3.200000e+01 : f32
    %130 = vector.broadcast %cst_53 : f32 to vector<8x1xf32>
    %131 = arith.divf %129, %130 : vector<8x1xf32>
    %cst_54 = arith.constant 9.99999974E-6 : f32
    %132 = vector.broadcast %cst_54 : f32 to vector<8x1xf32>
    %133 = arith.addf %131, %132 : vector<8x1xf32>
    %134 = math.rsqrt %133 : vector<8x1xf32>
    %135 = vector.broadcast %134 : vector<8x1xf32> to vector<8x32xf32>
    %136 = arith.mulf %126, %135 : vector<8x32xf32>
    %137 = vector.broadcast %119 : vector<1x32xf32> to vector<8x32xf32>
    %138 = arith.mulf %136, %137 : vector<8x32xf32>
    %139 = vector.broadcast %120 : vector<1x32xf32> to vector<8x32xf32>
    %140 = arith.addf %138, %139 : vector<8x32xf32>
    %c1_55 = arith.constant 1 : index
    %c0_56 = arith.constant 0 : index
    %c0_57 = arith.constant 0 : index
    %141 = vector.load %arg3[%c1_55, %c0_56, %c0_57] : memref<2x32x512xbf16, #tpu.memory_space<vmem>>, vector<1x32x512xbf16>
    %142 = vector.shape_cast %141 : vector<1x32x512xbf16> to vector<32x512xbf16>
    %143 = arith.truncf %140 : vector<8x32xf32> to vector<8x32xbf16>
    %cst_58 = arith.constant dense<0.000000e+00> : vector<8x512xf32>
    %144 = tpu.matmul %143, %142, %cst_58 {dimension_numbers = #tpu.dot_dimension_numbers<[1], [0], [0], [1], [0, 0, 1, 1], [], []>} : vector<8x32xbf16>, vector<32x512xbf16>, vector<8x512xf32> -> vector<8x512xf32>
    %c1_59 = arith.constant 1 : index
    %c0_60 = arith.constant 0 : index
    %c0_61 = arith.constant 0 : index
    %145 = vector.load %arg4[%c1_59, %c0_60, %c0_61] : memref<2x1x512xf32, #tpu.memory_space<vmem>>, vector<1x1x512xf32>
    %146 = vector.shape_cast %145 : vector<1x1x512xf32> to vector<1x512xf32>
    %147 = vector.broadcast %146 : vector<1x512xf32> to vector<8x512xf32>
    %148 = arith.addf %144, %147 : vector<8x512xf32>
    %149 = vector.extract_strided_slice %148 {offsets = [0, 0], sizes = [8, 256], strides = [1, 1]} : vector<8x512xf32> to vector<8x256xf32>
    %150 = vector.extract_strided_slice %148 {offsets = [0, 256], sizes = [8, 256], strides = [1, 1]} : vector<8x512xf32> to vector<8x256xf32>
    %151 = vector.shape_cast %150 : vector<8x256xf32> to vector<8x1x256xf32>
    %152 = vector.shape_cast %149 : vector<8x256xf32> to vector<1x8x256xf32>
    %153 = vector.broadcast %151 : vector<8x1x256xf32> to vector<8x8x256xf32>
    %154 = vector.broadcast %152 : vector<1x8x256xf32> to vector<8x8x256xf32>
    %155 = arith.addf %153, %154 : vector<8x8x256xf32>
    %cst_62 = arith.constant 0.000000e+00 : f32
    %156 = vector.broadcast %cst_62 : f32 to vector<8x8x256xf32>
    %157 = arith.cmpf oge, %155, %156 : vector<8x8x256xf32>
    %cst_63 = arith.constant 2.000000e-01 : f32
    %158 = vector.broadcast %cst_63 : f32 to vector<8x8x256xf32>
    %159 = arith.mulf %158, %155 : vector<8x8x256xf32>
    %160 = arith.select %157, %155, %159 : vector<8x8x256xi1>, vector<8x8x256xf32>
    %161 = vector.shape_cast %160 : vector<8x8x256xf32> to vector<64x256xf32>
    %c1_64 = arith.constant 1 : index
    %c0_65 = arith.constant 0 : index
    %c0_66 = arith.constant 0 : index
    %162 = vector.load %arg5[%c1_64, %c0_65, %c0_66] : memref<2x256x8xbf16, #tpu.memory_space<vmem>>, vector<1x256x8xbf16>
    %163 = vector.shape_cast %162 : vector<1x256x8xbf16> to vector<256x8xbf16>
    %164 = arith.truncf %161 : vector<64x256xf32> to vector<64x256xbf16>
    %cst_67 = arith.constant dense<0.000000e+00> : vector<64x8xf32>
    %165 = tpu.matmul %164, %163, %cst_67 {dimension_numbers = #tpu.dot_dimension_numbers<[1], [0], [0], [1], [0, 0, 1, 1], [], []>} : vector<64x256xbf16>, vector<256x8xbf16>, vector<64x8xf32> -> vector<64x8xf32>
    %166 = vector.shape_cast %165 : vector<64x8xf32> to vector<8x8x8xf32>
    %167 = arith.addf %166, %24 : vector<8x8x8xf32>
    %cst_68 = arith.constant dense<0xFF800000> : vector<8x8xf32>
    %168 = vector.multi_reduction <maximumf>, %167, %cst_68 [1] : vector<8x8x8xf32> to vector<8x8xf32>
    %169 = vector.shape_cast %168 : vector<8x8xf32> to vector<8x1x8xf32>
    %170 = vector.broadcast %169 : vector<8x1x8xf32> to vector<8x8x8xf32>
    %171 = arith.subf %167, %170 : vector<8x8x8xf32>
    %172 = math.exp %171 : vector<8x8x8xf32>
    %cst_69 = arith.constant dense<0.000000e+00> : vector<8x8xf32>
    %173 = vector.multi_reduction <add>, %172, %cst_69 [1] : vector<8x8x8xf32> to vector<8x8xf32>
    %174 = vector.shape_cast %173 : vector<8x8xf32> to vector<8x1x8xf32>
    %175 = tpu.reciprocal %174 {approx = true} : vector<8x1x8xf32> -> vector<8x1x8xf32>
    %176 = vector.broadcast %175 : vector<8x1x8xf32> to vector<8x8x8xf32>
    %177 = arith.mulf %172, %176 : vector<8x8x8xf32>
    %178 = vector.shape_cast %177 : vector<8x8x8xf32> to vector<64x8xf32>
    %cst_70 = arith.constant dense<0.000000e+00> : vector<64x256xf32>
    %179 = tpu.matmul %178, %1, %cst_70 {dimension_numbers = #tpu.dot_dimension_numbers<[1], [0], [0], [1], [0, 0, 1, 1], [], []>} : vector<64x8xf32>, vector<8x256xf32>, vector<64x256xf32> -> vector<64x256xf32>
    %180 = vector.shape_cast %179 : vector<64x256xf32> to vector<8x8x256xf32>
    %181 = vector.shape_cast %149 : vector<8x256xf32> to vector<1x8x256xf32>
    %182 = vector.broadcast %181 : vector<1x8x256xf32> to vector<8x8x256xf32>
    %183 = arith.mulf %180, %182 : vector<8x8x256xf32>
    %cst_71 = arith.constant dense<0.000000e+00> : vector<8x256xf32>
    %184 = vector.multi_reduction <add>, %183, %cst_71 [1] : vector<8x8x256xf32> to vector<8x256xf32>
    %c1_72 = arith.constant 1 : index
    %c0_73 = arith.constant 0 : index
    %c0_74 = arith.constant 0 : index
    %185 = vector.load %arg6[%c1_72, %c0_73, %c0_74] : memref<2x256x32xbf16, #tpu.memory_space<vmem>>, vector<1x256x32xbf16>
    %186 = vector.shape_cast %185 : vector<1x256x32xbf16> to vector<256x32xbf16>
    %187 = arith.truncf %184 : vector<8x256xf32> to vector<8x256xbf16>
    %cst_75 = arith.constant dense<0.000000e+00> : vector<8x32xf32>
    %188 = tpu.matmul %187, %186, %cst_75 {dimension_numbers = #tpu.dot_dimension_numbers<[1], [0], [0], [1], [0, 0, 1, 1], [], []>} : vector<8x256xbf16>, vector<256x32xbf16>, vector<8x32xf32> -> vector<8x32xf32>
    %189 = vector.extract_strided_slice %0 {offsets = [9, 0], sizes = [1, 32], strides = [1, 1]} : vector<19x32xf32> to vector<1x32xf32>
    %190 = vector.broadcast %189 : vector<1x32xf32> to vector<8x32xf32>
    %191 = arith.addf %188, %190 : vector<8x32xf32>
    %192 = arith.addf %191, %140 : vector<8x32xf32>
    %193 = vector.extract_strided_slice %0 {offsets = [10, 0], sizes = [1, 32], strides = [1, 1]} : vector<19x32xf32> to vector<1x32xf32>
    %194 = vector.extract_strided_slice %0 {offsets = [11, 0], sizes = [1, 32], strides = [1, 1]} : vector<19x32xf32> to vector<1x32xf32>
    %cst_76 = arith.constant dense<0.000000e+00> : vector<8xf32>
    %195 = vector.multi_reduction <add>, %192, %cst_76 [1] : vector<8x32xf32> to vector<8xf32>
    %196 = vector.shape_cast %195 : vector<8xf32> to vector<8x1xf32>
    %cst_77 = arith.constant 3.200000e+01 : f32
    %197 = vector.broadcast %cst_77 : f32 to vector<8x1xf32>
    %198 = arith.divf %196, %197 : vector<8x1xf32>
    %199 = vector.broadcast %198 : vector<8x1xf32> to vector<8x32xf32>
    %200 = arith.subf %192, %199 : vector<8x32xf32>
    %201 = arith.mulf %200, %200 : vector<8x32xf32>
    %cst_78 = arith.constant dense<0.000000e+00> : vector<8xf32>
    %202 = vector.multi_reduction <add>, %201, %cst_78 [1] : vector<8x32xf32> to vector<8xf32>
    %203 = vector.shape_cast %202 : vector<8xf32> to vector<8x1xf32>
    %cst_79 = arith.constant 3.200000e+01 : f32
    %204 = vector.broadcast %cst_79 : f32 to vector<8x1xf32>
    %205 = arith.divf %203, %204 : vector<8x1xf32>
    %cst_80 = arith.constant 9.99999974E-6 : f32
    %206 = vector.broadcast %cst_80 : f32 to vector<8x1xf32>
    %207 = arith.addf %205, %206 : vector<8x1xf32>
    %208 = math.rsqrt %207 : vector<8x1xf32>
    %209 = vector.broadcast %208 : vector<8x1xf32> to vector<8x32xf32>
    %210 = arith.mulf %200, %209 : vector<8x32xf32>
    %211 = vector.broadcast %193 : vector<1x32xf32> to vector<8x32xf32>
    %212 = arith.mulf %210, %211 : vector<8x32xf32>
    %213 = vector.broadcast %194 : vector<1x32xf32> to vector<8x32xf32>
    %214 = arith.addf %212, %213 : vector<8x32xf32>
    %c4 = arith.constant 4 : index
    %c0_81 = arith.constant 0 : index
    %c0_82 = arith.constant 0 : index
    %215 = vector.load %arg2[%c4, %c0_81, %c0_82] : memref<9x32x32xbf16, #tpu.memory_space<vmem>>, vector<1x32x32xbf16>
    %216 = vector.shape_cast %215 : vector<1x32x32xbf16> to vector<32x32xbf16>
    %217 = arith.truncf %214 : vector<8x32xf32> to vector<8x32xbf16>
    %cst_83 = arith.constant dense<0.000000e+00> : vector<8x32xf32>
    %218 = tpu.matmul %217, %216, %cst_83 {dimension_numbers = #tpu.dot_dimension_numbers<[1], [0], [0], [1], [0, 0, 1, 1], [], []>} : vector<8x32xbf16>, vector<32x32xbf16>, vector<8x32xf32> -> vector<8x32xf32>
    %219 = vector.extract_strided_slice %0 {offsets = [12, 0], sizes = [1, 32], strides = [1, 1]} : vector<19x32xf32> to vector<1x32xf32>
    %220 = vector.broadcast %219 : vector<1x32xf32> to vector<8x32xf32>
    %221 = arith.addf %218, %220 : vector<8x32xf32>
    %cst_84 = arith.constant 0.000000e+00 : f32
    %222 = vector.broadcast %cst_84 : f32 to vector<8x32xf32>
    %223 = arith.cmpf oge, %221, %222 : vector<8x32xf32>
    %cst_85 = arith.constant 0.00999999977 : f32
    %224 = vector.broadcast %cst_85 : f32 to vector<8x32xf32>
    %225 = arith.mulf %224, %221 : vector<8x32xf32>
    %226 = arith.select %223, %221, %225 : vector<8x32xi1>, vector<8x32xf32>
    %c5 = arith.constant 5 : index
    %c0_86 = arith.constant 0 : index
    %c0_87 = arith.constant 0 : index
    %227 = vector.load %arg2[%c5, %c0_86, %c0_87] : memref<9x32x32xbf16, #tpu.memory_space<vmem>>, vector<1x32x32xbf16>
    %228 = vector.shape_cast %227 : vector<1x32x32xbf16> to vector<32x32xbf16>
    %229 = arith.truncf %226 : vector<8x32xf32> to vector<8x32xbf16>
    %cst_88 = arith.constant dense<0.000000e+00> : vector<8x32xf32>
    %230 = tpu.matmul %229, %228, %cst_88 {dimension_numbers = #tpu.dot_dimension_numbers<[1], [0], [0], [1], [0, 0, 1, 1], [], []>} : vector<8x32xbf16>, vector<32x32xbf16>, vector<8x32xf32> -> vector<8x32xf32>
    %231 = vector.extract_strided_slice %0 {offsets = [13, 0], sizes = [1, 32], strides = [1, 1]} : vector<19x32xf32> to vector<1x32xf32>
    %232 = vector.broadcast %231 : vector<1x32xf32> to vector<8x32xf32>
    %233 = arith.addf %230, %232 : vector<8x32xf32>
    %234 = arith.addf %233, %214 : vector<8x32xf32>
    %235 = vector.extract_strided_slice %0 {offsets = [14, 0], sizes = [1, 32], strides = [1, 1]} : vector<19x32xf32> to vector<1x32xf32>
    %236 = vector.extract_strided_slice %0 {offsets = [15, 0], sizes = [1, 32], strides = [1, 1]} : vector<19x32xf32> to vector<1x32xf32>
    %cst_89 = arith.constant dense<0.000000e+00> : vector<8xf32>
    %237 = vector.multi_reduction <add>, %234, %cst_89 [1] : vector<8x32xf32> to vector<8xf32>
    %238 = vector.shape_cast %237 : vector<8xf32> to vector<8x1xf32>
    %cst_90 = arith.constant 3.200000e+01 : f32
    %239 = vector.broadcast %cst_90 : f32 to vector<8x1xf32>
    %240 = arith.divf %238, %239 : vector<8x1xf32>
    %241 = vector.broadcast %240 : vector<8x1xf32> to vector<8x32xf32>
    %242 = arith.subf %234, %241 : vector<8x32xf32>
    %243 = arith.mulf %242, %242 : vector<8x32xf32>
    %cst_91 = arith.constant dense<0.000000e+00> : vector<8xf32>
    %244 = vector.multi_reduction <add>, %243, %cst_91 [1] : vector<8x32xf32> to vector<8xf32>
    %245 = vector.shape_cast %244 : vector<8xf32> to vector<8x1xf32>
    %cst_92 = arith.constant 3.200000e+01 : f32
    %246 = vector.broadcast %cst_92 : f32 to vector<8x1xf32>
    %247 = arith.divf %245, %246 : vector<8x1xf32>
    %cst_93 = arith.constant 9.99999974E-6 : f32
    %248 = vector.broadcast %cst_93 : f32 to vector<8x1xf32>
    %249 = arith.addf %247, %248 : vector<8x1xf32>
    %250 = math.rsqrt %249 : vector<8x1xf32>
    %251 = vector.broadcast %250 : vector<8x1xf32> to vector<8x32xf32>
    %252 = arith.mulf %242, %251 : vector<8x32xf32>
    %253 = vector.broadcast %235 : vector<1x32xf32> to vector<8x32xf32>
    %254 = arith.mulf %252, %253 : vector<8x32xf32>
    %255 = vector.broadcast %236 : vector<1x32xf32> to vector<8x32xf32>
    %256 = arith.addf %254, %255 : vector<8x32xf32>
    %c6 = arith.constant 6 : index
    %c0_94 = arith.constant 0 : index
    %c0_95 = arith.constant 0 : index
    %257 = vector.load %arg2[%c6, %c0_94, %c0_95] : memref<9x32x32xbf16, #tpu.memory_space<vmem>>, vector<1x32x32xbf16>
    %258 = vector.shape_cast %257 : vector<1x32x32xbf16> to vector<32x32xbf16>
    %259 = arith.truncf %256 : vector<8x32xf32> to vector<8x32xbf16>
    %cst_96 = arith.constant dense<0.000000e+00> : vector<8x32xf32>
    %260 = tpu.matmul %259, %258, %cst_96 {dimension_numbers = #tpu.dot_dimension_numbers<[1], [0], [0], [1], [0, 0, 1, 1], [], []>} : vector<8x32xbf16>, vector<32x32xbf16>, vector<8x32xf32> -> vector<8x32xf32>
    %261 = vector.extract_strided_slice %0 {offsets = [16, 0], sizes = [1, 32], strides = [1, 1]} : vector<19x32xf32> to vector<1x32xf32>
    %262 = vector.broadcast %261 : vector<1x32xf32> to vector<8x32xf32>
    %263 = arith.addf %260, %262 : vector<8x32xf32>
    %cst_97 = arith.constant 0.000000e+00 : f32
    %264 = vector.broadcast %cst_97 : f32 to vector<8x32xf32>
    %265 = arith.cmpf oge, %263, %264 : vector<8x32xf32>
    %cst_98 = arith.constant 0.00999999977 : f32
    %266 = vector.broadcast %cst_98 : f32 to vector<8x32xf32>
    %267 = arith.mulf %266, %263 : vector<8x32xf32>
    %268 = arith.select %265, %263, %267 : vector<8x32xi1>, vector<8x32xf32>
    %c7 = arith.constant 7 : index
    %c0_99 = arith.constant 0 : index
    %c0_100 = arith.constant 0 : index
    %269 = vector.load %arg2[%c7, %c0_99, %c0_100] : memref<9x32x32xbf16, #tpu.memory_space<vmem>>, vector<1x32x32xbf16>
    %270 = vector.shape_cast %269 : vector<1x32x32xbf16> to vector<32x32xbf16>
    %271 = arith.truncf %268 : vector<8x32xf32> to vector<8x32xbf16>
    %cst_101 = arith.constant dense<0.000000e+00> : vector<8x32xf32>
    %272 = tpu.matmul %271, %270, %cst_101 {dimension_numbers = #tpu.dot_dimension_numbers<[1], [0], [0], [1], [0, 0, 1, 1], [], []>} : vector<8x32xbf16>, vector<32x32xbf16>, vector<8x32xf32> -> vector<8x32xf32>
    %273 = vector.extract_strided_slice %0 {offsets = [17, 0], sizes = [1, 32], strides = [1, 1]} : vector<19x32xf32> to vector<1x32xf32>
    %274 = vector.broadcast %273 : vector<1x32xf32> to vector<8x32xf32>
    %275 = arith.addf %272, %274 : vector<8x32xf32>
    %cst_102 = arith.constant 0.000000e+00 : f32
    %276 = vector.broadcast %cst_102 : f32 to vector<8x32xf32>
    %277 = arith.cmpf oge, %275, %276 : vector<8x32xf32>
    %cst_103 = arith.constant 0.00999999977 : f32
    %278 = vector.broadcast %cst_103 : f32 to vector<8x32xf32>
    %279 = arith.mulf %278, %275 : vector<8x32xf32>
    %280 = arith.select %277, %275, %279 : vector<8x32xi1>, vector<8x32xf32>
    %c8 = arith.constant 8 : index
    %c0_104 = arith.constant 0 : index
    %c0_105 = arith.constant 0 : index
    %281 = vector.load %arg2[%c8, %c0_104, %c0_105] : memref<9x32x32xbf16, #tpu.memory_space<vmem>>, vector<1x32x32xbf16>
    %282 = vector.shape_cast %281 : vector<1x32x32xbf16> to vector<32x32xbf16>
    %283 = arith.truncf %280 : vector<8x32xf32> to vector<8x32xbf16>
    %cst_106 = arith.constant dense<0.000000e+00> : vector<8x32xf32>
    %284 = tpu.matmul %283, %282, %cst_106 {dimension_numbers = #tpu.dot_dimension_numbers<[1], [0], [0], [1], [0, 0, 1, 1], [], []>} : vector<8x32xbf16>, vector<32x32xbf16>, vector<8x32xf32> -> vector<8x32xf32>
    %285 = vector.extract_strided_slice %0 {offsets = [18, 0], sizes = [1, 32], strides = [1, 1]} : vector<19x32xf32> to vector<1x32xf32>
    %286 = vector.broadcast %285 : vector<1x32xf32> to vector<8x32xf32>
    %287 = arith.addf %284, %286 : vector<8x32xf32>
    %288 = vector.extract_strided_slice %287 {offsets = [0, 0], sizes = [8, 1], strides = [1, 1]} : vector<8x32xf32> to vector<8x1xf32>
    %cst_107 = arith.constant 5.000000e-01 : f32
    %289 = vector.broadcast %cst_107 : f32 to vector<8x1xf32>
    %290 = arith.mulf %289, %288 : vector<8x1xf32>
    %291 = math.tanh %290 : vector<8x1xf32>
    %cst_108 = arith.constant 1.000000e+00 : f32
    %292 = vector.broadcast %cst_108 : f32 to vector<8x1xf32>
    %293 = arith.addf %291, %292 : vector<8x1xf32>
    %cst_109 = arith.constant 5.000000e-01 : f32
    %294 = vector.broadcast %cst_109 : f32 to vector<8x1xf32>
    %295 = arith.mulf %294, %293 : vector<8x1xf32>
    %c0_110 = arith.constant 0 : index
    %c0_111 = arith.constant 0 : index
    %296 = vector.load %arg9[%c0_110, %c0_111] : memref<8x1xf32, #tpu.memory_space<vmem>>, vector<8x1xf32>
    tpu.vector_store %arg9[%c0_110, %c0_111], %295 {strides = array<i32>} : memref<8x1xf32, #tpu.memory_space<vmem>>, vector<8x1xf32>,
    return
  }
}

</mosaic_0001>

<llo_original>
// kernel: network_finetuning_forward.1
$region0: #{network_finetuning_forward.1}
  #allocation0 [shape = 'u32[]', space=smem, size = 0x4, offset = 0x4, fixed_abs, tag = 'smem constant byte address 0x4 - core index']
  #allocation1 [shape = 'u32[144,128]{1,0:T(1,128)}', space=vmem, size = 0x12000, scoped, tag = 'internal scratch']
  %s0 = inlined_call_operand.vmem [shape: f32[8,32], index: 0, kind: input, shape index: {}]
  %s1 = inlined_call_operand.vmem [shape: f32[8,8,1], index: 1, kind: input, shape index: {}]
  %s2 = inlined_call_operand.vmem [shape: bf16[9,32,32], index: 2, kind: input, shape index: {}]
  %s3 = inlined_call_operand.vmem [shape: bf16[2,32,512], index: 3, kind: input, shape index: {}]
  %s4 = inlined_call_operand.vmem [shape: f32[2,1,512], index: 4, kind: input, shape index: {}]
  %s5 = inlined_call_operand.vmem [shape: bf16[2,256,8], index: 5, kind: input, shape index: {}]
  %s6 = inlined_call_operand.vmem [shape: bf16[2,256,32], index: 6, kind: input, shape index: {}]
  %s7 = inlined_call_operand.vmem [shape: f32[8,256], index: 7, kind: input, shape index: {}]
  %s8 = inlined_call_operand.vmem [shape: f32[19,32], index: 8, kind: input, shape index: {}]
  %s9 = inlined_call_operand.vmem [shape: f32[8,1], index: 9, kind: output, shape index: {}]
  %s10 = sld [smem:[#allocation0]]
  $region46: #{network_finetuning_forward.1} parent=0
    _
  %s12 = ssub.s32 1, %s10
  %s13 = scalar_select 0, %s12, %s10
  // Predicated region
  $region2: #{network_finetuning_forward.1} parent=0 // pred_check
    _
  $region3: #{network_finetuning_forward.1} parent=0 // pred_check_branch
    %15 = sbr.rel (0) target = $region5
  $region4: #{network_finetuning_forward.1} parent=0 // pred_region
    _
  $region5: #{network_finetuning_forward.1} parent=0 // pred_fallthru
    _
  // Predicated region
  $region6: #{network_finetuning_forward.1} parent=0 // pred_check
    _
  $region7: #{network_finetuning_forward.1} parent=0 // pred_check_branch
    %17 = sbr.rel (0) target = $region9
  $region8: #{network_finetuning_forward.1} parent=0 // pred_region
    _
  $region9: #{network_finetuning_forward.1} parent=0 // pred_fallthru
    _
  // Predicated region
  $region10: #{network_finetuning_forward.1} parent=0 // pred_check
    _
  $region11: #{network_finetuning_forward.1} parent=0 // pred_check_branch
    %19 = sbr.rel (0) target = $region13
  $region12: #{network_finetuning_forward.1} parent=0 // pred_region
    _
  $region13: #{network_finetuning_forward.1} parent=0 // pred_fallthru
    _
  // Predicated region
  $region14: #{network_finetuning_forward.1} parent=0 // pred_check
    _
  $region15: #{network_finetuning_forward.1} parent=0 // pred_check_branch
    %21 = sbr.rel (0) target = $region17
  $region16: #{network_finetuning_forward.1} parent=0 // pred_region
    _
  $region17: #{network_finetuning_forward.1} parent=0 // pred_fallthru
    _
  // Predicated region
  $region18: #{network_finetuning_forward.1} parent=0 // pred_check
    _
  $region19: #{network_finetuning_forward.1} parent=0 // pred_check_branch
    %23 = sbr.rel (0) target = $region21
  $region20: #{network_finetuning_forward.1} parent=0 // pred_region
    _
  $region21: #{network_finetuning_forward.1} parent=0 // pred_fallthru
    _
  // Predicated region
  $region22: #{network_finetuning_forward.1} parent=0 // pred_check
    _
  $region23: #{network_finetuning_forward.1} parent=0 // pred_check_branch
    %25 = sbr.rel (0) target = $region25
  $region24: #{network_finetuning_forward.1} parent=0 // pred_region
    _
  $region25: #{network_finetuning_forward.1} parent=0 // pred_fallthru
    _
  // Predicated region
  $region26: #{network_finetuning_forward.1} parent=0 // pred_check
    _
  $region27: #{network_finetuning_forward.1} parent=0 // pred_check_branch
    %27 = sbr.rel (0) target = $region29
  $region28: #{network_finetuning_forward.1} parent=0 // pred_region
    _
  $region29: #{network_finetuning_forward.1} parent=0 // pred_fallthru
    _
  // Predicated region
  $region30: #{network_finetuning_forward.1} parent=0 // pred_check
    _
  $region31: #{network_finetuning_forward.1} parent=0 // pred_check_branch
    %29 = sbr.rel (0) target = $region33
  $region32: #{network_finetuning_forward.1} parent=0 // pred_region
    _
  $region33: #{network_finetuning_forward.1} parent=0 // pred_fallthru
    _
  // Predicated region
  $region34: #{network_finetuning_forward.1} parent=0 // pred_check
    _
  $region35: #{network_finetuning_forward.1} parent=0 // pred_check_branch
    %31 = sbr.rel (0) target = $region37
  $region36: #{network_finetuning_forward.1} parent=0 // pred_region
    _
  $region37: #{network_finetuning_forward.1} parent=0 // pred_fallthru
    _
  %v33 = vld [vmem:[%s8] sm:$0xff]
  %v34 = vld [vmem:[%s8 + $0x8] sm:$0xff]
  %v35 = vld [vmem:[%s8 + $0x10] sm:$0x7]
  %v36 = vld [vmem:[%s7] sm:$0xff]
  %v37 = vld [vmem:[%s7 + $0x8] sm:$0xff]
  %v38 = vld [vmem:[%s0] sm:$0xff]
  %v39 = vld [vmem:[%s2] sm:$0xf]
  %v40 = vld [vmem:[%s2 + $0x4] sm:$0xf]
  %v41 = vld [vmem:[%s2 + $0x8] sm:$0xf]
  %v42 = vld [vmem:[%s2 + $0xc] sm:$0xf]
  %v43 = vpack.c.bf16 %v38, %v38
  %v44 = vlaneseq
  %v45 = vshrl.u32 %v44, 7
  %v46 = vsub.s32 0, %v45
  %v47 = vrot.slane %v33, %v46
  %v52 = vunpack.c.l.b16 %v39
  %v53 = vunpack.c.l.b16 %v40
  %v54 = vunpack.c.l.b16 %v41
  %v55 = vunpack.c.l.b16 %v42
  %v56 = vpack.c.b16 %v53, %v52
  %v57 = vpack.c.b16 %v55, %v54
  %vm60 = vcmask 261120
  %v62 = vsel %vm60, %v43, 0
  %64 = vmatprep.subr.bf16.mxu0 0
  %65 = vmatpush1.bf16.msra.mxu0 0
  %66 = vmatprep.subr.bf16.mxu0 0
  %67 = vmatpush1.bf16.msra.mxu0 0
  %68 = vmatprep.subr.bf16.mxu0 0
  %69 = vmatpush1.bf16.msra.mxu0 0
  %70 = vmatprep.subr.bf16.mxu0 0
  %71 = vmatpush1.bf16.msra.mxu0 0
  %72 = vmatprep.subr.bf16.mxu0 0
  %73 = vmatpush1.bf16.msra.mxu0 0
  %74 = vmatprep.subr.bf16.mxu0 0
  %75 = vmatpush1.bf16.msra.mxu0 0
  %76 = vmatprep.subr.bf16.mxu0 0
  %77 = vmatpush1.bf16.msra.mxu0 %v57
  %78 = vmatprep.subr.bf16.mxu0 0
  %79 = vmatpush1.bf16.msra.mxu0 %v56
  %80 = vmatprep.subr.bf16.mxu0 0
  %81 = vmatpush2.bf16.msra.mxu0 0
  %82 = vmatprep.subr.bf16.mxu0 0
  %83 = vmatpush2.bf16.msra.mxu0 0
  %84 = vmatprep.subr.bf16.mxu0 0
  %85 = vmatpush2.bf16.msra.mxu0 0
  %86 = vmatprep.subr.bf16.mxu0 0
  %87 = vmatpush2.bf16.msra.mxu0 0
  %88 = vmatprep.subr.bf16.mxu0 0
  %89 = vmatpush2.bf16.msra.mxu0 0
  %90 = vmatprep.subr.bf16.mxu0 0
  %91 = vmatpush2.bf16.msra.mxu0 0
  %92 = vmatprep.subr.bf16.mxu0 0
  %93 = vmatpush2.bf16.msra.mxu0 0
  %94 = vmatprep.subr.bf16.mxu0 0
  %95 = vmatpush2.bf16.msra.mxu0 0
  %96 = vmatprep.mubr.bf16.mxu0 0
  %97 = vmatmul.mubr.bf16.gmra.mxu0 %v62
  %v98 = vpop.f32.mrf.mxu0
  %v99 = vadd.f32 %v47, %v98
  %v100 = vpop.f32.mrf.mxu0
  %v101 = vpop.f32.mrf.mxu0
  %v102 = vpop.f32.mrf.mxu0
  %103 = vdwg.mxu0
  %vm104 = vcmp.ge.f32.partialorder %v99, 0.0
  %v105 = vmul.f32 %v99, 0.01
  %v106 = vsel %vm104, %v99, %v105
  %s107 = scalar_lea.vmem %s2, 16
  %v108 = vld [vmem:[%s107] sm:$0xf]
  %v109 = vld [vmem:[%s107 + $0x4] sm:$0xf]
  %v110 = vld [vmem:[%s107 + $0x8] sm:$0xf]
  %v111 = vld [vmem:[%s107 + $0xc] sm:$0xf]
  %v112 = vpack.c.bf16 %v106, %v106
  %v113 = vlaneseq
  %v114 = vshrl.u32 %v113, 7
  %v115 = vsub.s32 1, %v114
  %v116 = vrot.slane %v33, %v115
  %v121 = vunpack.c.l.b16 %v108
  %v122 = vunpack.c.l.b16 %v109
  %v123 = vunpack.c.l.b16 %v110
  %v124 = vunpack.c.l.b16 %v111
  %v125 = vpack.c.b16 %v122, %v121
  %v126 = vpack.c.b16 %v124, %v123
  %v130 = vsel %vm60, %v112, 0
  %132 = vmatprep.subr.bf16.mxu0 0
  %133 = vmatpush1.bf16.msra.mxu0 0
  %134 = vmatprep.subr.bf16.mxu0 0
  %135 = vmatpush1.bf16.msra.mxu0 0
  %136 = vmatprep.subr.bf16.mxu0 0
  %137 = vmatpush1.bf16.msra.mxu0 0
  %138 = vmatprep.subr.bf16.mxu0 0
  %139 = vmatpush1.bf16.msra.mxu0 0
  %140 = vmatprep.subr.bf16.mxu0 0
  %141 = vmatpush1.bf16.msra.mxu0 0
  %142 = vmatprep.subr.bf16.mxu0 0
  %143 = vmatpush1.bf16.msra.mxu0 0
  %144 = vmatprep.subr.bf16.mxu0 0
  %145 = vmatpush1.bf16.msra.mxu0 %v126
  %146 = vmatprep.subr.bf16.mxu0 0
  %147 = vmatpush1.bf16.msra.mxu0 %v125
  %148 = vmatprep.subr.bf16.mxu0 0
  %149 = vmatpush2.bf16.msra.mxu0 0
  %150 = vmatprep.subr.bf16.mxu0 0
  %151 = vmatpush2.bf16.msra.mxu0 0
  %152 = vmatprep.subr.bf16.mxu0 0
  %153 = vmatpush2.bf16.msra.mxu0 0
  %154 = vmatprep.subr.bf16.mxu0 0
  %155 = vmatpush2.bf16.msra.mxu0 0
  %156 = vmatprep.subr.bf16.mxu0 0
  %157 = vmatpush2.bf16.msra.mxu0 0
  %158 = vmatprep.subr.bf16.mxu0 0
  %159 = vmatpush2.bf16.msra.mxu0 0
  %160 = vmatprep.subr.bf16.mxu0 0
  %161 = vmatpush2.bf16.msra.mxu0 0
  %162 = vmatprep.subr.bf16.mxu0 0
  %163 = vmatpush2.bf16.msra.mxu0 0
  %164 = vmatprep.mubr.bf16.mxu0 0
  %165 = vmatmul.mubr.bf16.gmra.mxu0 %v130
  %v166 = vpop.f32.mrf.mxu0
  %v167 = vadd.f32 %v116, %v166
  %v168 = vpop.f32.mrf.mxu0
  %v169 = vpop.f32.mrf.mxu0
  %v170 = vpop.f32.mrf.mxu0
  %171 = vdwg.mxu0
  %v172 = vld [vmem:[%s1] sm:$0xff]
  %v173 = vld [vmem:[%s1 + $0x8] sm:$0xff]
  %v174 = vld [vmem:[%s1 + $0x10] sm:$0xff]
  %v175 = vld [vmem:[%s1 + $0x18] sm:$0xff]
  %v176 = vld [vmem:[%s1 + $0x20] sm:$0xff]
  %v177 = vld [vmem:[%s1 + $0x28] sm:$0xff]
  %v178 = vld [vmem:[%s1 + $0x30] sm:$0xff]
  %v179 = vld [vmem:[%s1 + $0x38] sm:$0xff]
  %181 = vset.pattern.permute.xlu0 0
  %182 = vperm.xlu0 %181, %v172
  %v183 = vpop.permute.xlu0 %182
  %186 = vset.pattern.permute.xlu0 0
  %187 = vperm.xlu0 %186, %v173
  %v188 = vpop.permute.xlu0 %187
  %191 = vset.pattern.permute.xlu0 0
  %192 = vperm.xlu0 %191, %v174
  %v193 = vpop.permute.xlu0 %192
  %196 = vset.pattern.permute.xlu0 0
  %197 = vperm.xlu0 %196, %v175
  %v198 = vpop.permute.xlu0 %197
  %201 = vset.pattern.permute.xlu0 0
  %202 = vperm.xlu0 %201, %v176
  %v203 = vpop.permute.xlu0 %202
  %206 = vset.pattern.permute.xlu0 0
  %207 = vperm.xlu0 %206, %v177
  %v208 = vpop.permute.xlu0 %207
  %211 = vset.pattern.permute.xlu0 0
  %212 = vperm.xlu0 %211, %v178
  %v213 = vpop.permute.xlu0 %212
  %216 = vset.pattern.permute.xlu0 0
  %217 = vperm.xlu0 %216, %v179
  %v218 = vpop.permute.xlu0 %217
  %v220 = vld [vmem:[%s3] sm:$0xff]
  %v221 = vld [vmem:[%s3 + $0x8] sm:$0xff]
  %v222 = vld [vmem:[%s3 + $0x10] sm:$0xff]
  %v223 = vld [vmem:[%s3 + $0x18] sm:$0xff]
  %v224 = vld [vmem:[%s3 + $0x20] sm:$0xff]
  %v225 = vld [vmem:[%s3 + $0x28] sm:$0xff]
  %v226 = vld [vmem:[%s3 + $0x30] sm:$0xff]
  %v227 = vld [vmem:[%s3 + $0x38] sm:$0xff]
  %v228 = vpack.c.bf16 %v167, %v167
  %v229 = vld [vmem:[%s4] sm:$0xf]
  %v231 = vlaneseq
  %v232 = vshrl.u32 %v231, 7
  %v233 = vsub.s32 0, %v232
  %v234 = vrot.slane %v229, %v233
  %v235 = vlaneseq
  %v236 = vshrl.u32 %v235, 7
  %v237 = vsub.s32 1, %v236
  %v238 = vrot.slane %v229, %v237
  %v239 = vlaneseq
  %v240 = vshrl.u32 %v239, 7
  %v241 = vsub.s32 2, %v240
  %v242 = vrot.slane %v229, %v241
  %v243 = vlaneseq
  %v244 = vshrl.u32 %v243, 7
  %v245 = vsub.s32 3, %v244
  %v246 = vrot.slane %v229, %v245
  %v259 = vunpack.c.l.b16 %v220
  %v260 = vunpack.c.h.b16 %v220
  %v261 = vunpack.c.l.b16 %v221
  %v262 = vunpack.c.h.b16 %v221
  %v263 = vunpack.c.l.b16 %v222
  %v264 = vunpack.c.h.b16 %v222
  %v265 = vunpack.c.l.b16 %v223
  %v266 = vunpack.c.h.b16 %v223
  %v267 = vunpack.c.l.b16 %v224
  %v268 = vunpack.c.h.b16 %v224
  %v269 = vunpack.c.l.b16 %v225
  %v270 = vunpack.c.h.b16 %v225
  %v271 = vunpack.c.l.b16 %v226
  %v272 = vunpack.c.h.b16 %v226
  %v273 = vunpack.c.l.b16 %v227
  %v274 = vunpack.c.h.b16 %v227
  %v275 = vpack.c.b16 %v263, %v259
  %v276 = vpack.c.b16 %v264, %v260
  %v277 = vpack.c.b16 %v265, %v261
  %v278 = vpack.c.b16 %v266, %v262
  %v279 = vpack.c.b16 %v271, %v267
  %v280 = vpack.c.b16 %v272, %v268
  %v281 = vpack.c.b16 %v273, %v269
  %v282 = vpack.c.b16 %v274, %v270
  %v292 = vsel %vm60, %v228, 0
  %294 = vmatprep.subr.bf16.mxu0 0
  %295 = vmatpush1.bf16.msra.mxu0 0
  %296 = vmatprep.subr.bf16.mxu0 0
  %297 = vmatpush1.bf16.msra.mxu0 0
  %298 = vmatprep.subr.bf16.mxu0 0
  %299 = vmatpush1.bf16.msra.mxu0 0
  %300 = vmatprep.subr.bf16.mxu0 0
  %301 = vmatpush1.bf16.msra.mxu0 0
  %302 = vmatprep.subr.bf16.mxu0 0
  %303 = vmatpush1.bf16.msra.mxu0 0
  %304 = vmatprep.subr.bf16.mxu0 0
  %305 = vmatpush1.bf16.msra.mxu0 0
  %306 = vmatprep.subr.bf16.mxu0 %v280
  %307 = vmatpush1.bf16.msra.mxu0 %v279
  %308 = vmatprep.subr.bf16.mxu0 %v276
  %309 = vmatpush1.bf16.msra.mxu0 %v275
  %310 = vmatprep.subr.bf16.mxu0 0
  %311 = vmatpush2.bf16.msra.mxu0 0
  %312 = vmatprep.subr.bf16.mxu0 0
  %313 = vmatpush2.bf16.msra.mxu0 0
  %314 = vmatprep.subr.bf16.mxu0 0
  %315 = vmatpush2.bf16.msra.mxu0 0
  %316 = vmatprep.subr.bf16.mxu0 0
  %317 = vmatpush2.bf16.msra.mxu0 0
  %318 = vmatprep.subr.bf16.mxu0 0
  %319 = vmatpush2.bf16.msra.mxu0 0
  %320 = vmatprep.subr.bf16.mxu0 0
  %321 = vmatpush2.bf16.msra.mxu0 0
  %322 = vmatprep.subr.bf16.mxu0 0
  %323 = vmatpush2.bf16.msra.mxu0 0
  %324 = vmatprep.subr.bf16.mxu0 0
  %325 = vmatpush2.bf16.msra.mxu0 0
  %326 = vmatprep.mubr.bf16.mxu0 0
  %327 = vmatmul.mubr.bf16.gmra.mxu0 %v292
  %v328 = vpop.f32.mrf.mxu0
  %v329 = vadd.f32 %v234, %v328
  %v330 = vpop.f32.mrf.mxu0
  %v331 = vadd.f32 %v238, %v330
  %v332 = vpop.f32.mrf.mxu0
  %v333 = vpop.f32.mrf.mxu0
  %334 = vdwg.mxu0
  %335 = vmatprep.subr.bf16.mxu0 0
  %336 = vmatpush1.bf16.msra.mxu0 0
  %337 = vmatprep.subr.bf16.mxu0 0
  %338 = vmatpush1.bf16.msra.mxu0 0
  %339 = vmatprep.subr.bf16.mxu0 0
  %340 = vmatpush1.bf16.msra.mxu0 0
  %341 = vmatprep.subr.bf16.mxu0 0
  %342 = vmatpush1.bf16.msra.mxu0 0
  %343 = vmatprep.subr.bf16.mxu0 0
  %344 = vmatpush1.bf16.msra.mxu0 0
  %345 = vmatprep.subr.bf16.mxu0 0
  %346 = vmatpush1.bf16.msra.mxu0 0
  %347 = vmatprep.subr.bf16.mxu0 %v282
  %348 = vmatpush1.bf16.msra.mxu0 %v281
  %349 = vmatprep.subr.bf16.mxu0 %v278
  %350 = vmatpush1.bf16.msra.mxu0 %v277
  %351 = vmatprep.subr.bf16.mxu0 0
  %352 = vmatpush2.bf16.msra.mxu0 0
  %353 = vmatprep.subr.bf16.mxu0 0
  %354 = vmatpush2.bf16.msra.mxu0 0
  %355 = vmatprep.subr.bf16.mxu0 0
  %356 = vmatpush2.bf16.msra.mxu0 0
  %357 = vmatprep.subr.bf16.mxu0 0
  %358 = vmatpush2.bf16.msra.mxu0 0
  %359 = vmatprep.subr.bf16.mxu0 0
  %360 = vmatpush2.bf16.msra.mxu0 0
  %361 = vmatprep.subr.bf16.mxu0 0
  %362 = vmatpush2.bf16.msra.mxu0 0
  %363 = vmatprep.subr.bf16.mxu0 0
  %364 = vmatpush2.bf16.msra.mxu0 0
  %365 = vmatprep.subr.bf16.mxu0 0
  %366 = vmatpush2.bf16.msra.mxu0 0
  %367 = vmatprep.mubr.bf16.mxu0 0
  %368 = vmatmul.mubr.bf16.gmra.mxu0 %v292
  %v369 = vpop.f32.mrf.mxu0
  %v370 = vadd.f32 %v242, %v369
  %v371 = vpop.f32.mrf.mxu0
  %v372 = vadd.f32 %v246, %v371
  %v373 = vpop.f32.mrf.mxu0
  %v374 = vpop.f32.mrf.mxu0
  %375 = vdwg.mxu0
  %v378 = vcombine.low %v370, %v372
  %v379 = vcombine.high %v370, %v372
  %v381 = vunpack.c.l.s4 1966171168
  %v382 = vunpack.c.0.s8 %v381
  %v383 = vlaneseq
  %v384 = vshrl.u32 %v383, 7
  %v385 = vsub.s32 %v382, %v384
  %v386 = vrot.slane %v378, %v385
  %v388 = vunpack.c.l.s4 1966171168
  %v389 = vunpack.c.0.s8 %v388
  %v390 = vlaneseq
  %v391 = vshrl.u32 %v390, 7
  %v392 = vsub.s32 %v389, %v391
  %v393 = vrot.slane %v379, %v392
  %v394 = vcombine.high %v386, %v386
  %v395 = vcombine.high %v393, %v393
  %v397 = vunpack.c.l.s4 1966171168
  %v398 = vunpack.c.0.s8 %v397
  %v399 = vlaneseq
  %v400 = vshrl.u32 %v399, 7
  %v401 = vsub.s32 %v398, %v400
  %v402 = vrot.slane %v386, %v401
  %v404 = vunpack.c.l.s4 1966171168
  %v405 = vunpack.c.0.s8 %v404
  %v406 = vlaneseq
  %v407 = vshrl.u32 %v406, 7
  %v408 = vsub.s32 %v405, %v407
  %v409 = vrot.slane %v393, %v408
  %v411 = vunpack.c.l.s4 1966171168
  %v412 = vunpack.c.0.s8 %v411
  %v413 = vlaneseq
  %v414 = vshrl.u32 %v413, 7
  %v415 = vsub.s32 %v412, %v414
  %v416 = vrot.slane %v394, %v415
  %v418 = vunpack.c.l.s4 1966171168
  %v419 = vunpack.c.0.s8 %v418
  %v420 = vlaneseq
  %v421 = vshrl.u32 %v420, 7
  %v422 = vsub.s32 %v419, %v421
  %v423 = vrot.slane %v395, %v422
  %v424 = vcombine.high %v402, %v402
  %v425 = vcombine.high %v409, %v409
  %v426 = vcombine.high %v416, %v416
  %v427 = vcombine.high %v423, %v423
  %v428 = vlaneseq
  %v429 = vshrl.u32 %v428, 7
  %v430 = vsub.s32 0, %v429
  %v431 = vrot.slane %v402, %v430
  %v432 = vlaneseq
  %v433 = vshrl.u32 %v432, 7
  %v434 = vsub.s32 1, %v433
  %v435 = vrot.slane %v402, %v434
  %v436 = vlaneseq
  %v437 = vshrl.u32 %v436, 7
  %v438 = vsub.s32 0, %v437
  %v439 = vrot.slane %v416, %v438
  %v440 = vlaneseq
  %v441 = vshrl.u32 %v440, 7
  %v442 = vsub.s32 1, %v441
  %v443 = vrot.slane %v416, %v442
  %v444 = vlaneseq
  %v445 = vshrl.u32 %v444, 7
  %v446 = vsub.s32 0, %v445
  %v447 = vrot.slane %v424, %v446
  %v448 = vlaneseq
  %v449 = vshrl.u32 %v448, 7
  %v450 = vsub.s32 1, %v449
  %v451 = vrot.slane %v424, %v450
  %v452 = vlaneseq
  %v453 = vshrl.u32 %v452, 7
  %v454 = vsub.s32 0, %v453
  %v455 = vrot.slane %v426, %v454
  %v456 = vlaneseq
  %v457 = vshrl.u32 %v456, 7
  %v458 = vsub.s32 1, %v457
  %v459 = vrot.slane %v426, %v458
  %v460 = vlaneseq
  %v461 = vshrl.u32 %v460, 7
  %v462 = vsub.s32 0, %v461
  %v463 = vrot.slane %v409, %v462
  %v464 = vlaneseq
  %v465 = vshrl.u32 %v464, 7
  %v466 = vsub.s32 1, %v465
  %v467 = vrot.slane %v409, %v466
  %v468 = vlaneseq
  %v469 = vshrl.u32 %v468, 7
  %v470 = vsub.s32 0, %v469
  %v471 = vrot.slane %v423, %v470
  %v472 = vlaneseq
  %v473 = vshrl.u32 %v472, 7
  %v474 = vsub.s32 1, %v473
  %v475 = vrot.slane %v423, %v474
  %v476 = vlaneseq
  %v477 = vshrl.u32 %v476, 7
  %v478 = vsub.s32 0, %v477
  %v479 = vrot.slane %v425, %v478
  %v480 = vlaneseq
  %v481 = vshrl.u32 %v480, 7
  %v482 = vsub.s32 1, %v481
  %v483 = vrot.slane %v425, %v482
  %v484 = vlaneseq
  %v485 = vshrl.u32 %v484, 7
  %v486 = vsub.s32 0, %v485
  %v487 = vrot.slane %v427, %v486
  %v488 = vlaneseq
  %v489 = vshrl.u32 %v488, 7
  %v490 = vsub.s32 1, %v489
  %v491 = vrot.slane %v427, %v490
  %v508 = vadd.f32 %v431, %v329
  %v509 = vadd.f32 %v435, %v331
  %v510 = vadd.f32 %v439, %v329
  %v511 = vadd.f32 %v443, %v331
  %v512 = vadd.f32 %v447, %v329
  %v513 = vadd.f32 %v451, %v331
  %v514 = vadd.f32 %v455, %v329
  %v515 = vadd.f32 %v459, %v331
  %v516 = vadd.f32 %v463, %v329
  %v517 = vadd.f32 %v467, %v331
  %v518 = vadd.f32 %v471, %v329
  %v519 = vadd.f32 %v475, %v331
  %v520 = vadd.f32 %v479, %v329
  %v521 = vadd.f32 %v483, %v331
  %v522 = vadd.f32 %v487, %v329
  %v523 = vadd.f32 %v491, %v331
  %vm524 = vcmp.ge.f32.partialorder %v508, 0.0
  %vm525 = vcmp.ge.f32.partialorder %v509, 0.0
  %vm526 = vcmp.ge.f32.partialorder %v510, 0.0
  %vm527 = vcmp.ge.f32.partialorder %v511, 0.0
  %vm528 = vcmp.ge.f32.partialorder %v512, 0.0
  %vm529 = vcmp.ge.f32.partialorder %v513, 0.0
  %vm530 = vcmp.ge.f32.partialorder %v514, 0.0
  %vm531 = vcmp.ge.f32.partialorder %v515, 0.0
  %vm532 = vcmp.ge.f32.partialorder %v516, 0.0
  %vm533 = vcmp.ge.f32.partialorder %v517, 0.0
  %vm534 = vcmp.ge.f32.partialorder %v518, 0.0
  %vm535 = vcmp.ge.f32.partialorder %v519, 0.0
  %vm536 = vcmp.ge.f32.partialorder %v520, 0.0
  %vm537 = vcmp.ge.f32.partialorder %v521, 0.0
  %vm538 = vcmp.ge.f32.partialorder %v522, 0.0
  %vm539 = vcmp.ge.f32.partialorder %v523, 0.0
  %v540 = vmul.f32 %v508, 0.2
  %v541 = vmul.f32 %v509, 0.2
  %v542 = vmul.f32 %v510, 0.2
  %v543 = vmul.f32 %v511, 0.2
  %v544 = vmul.f32 %v512, 0.2
  %v545 = vmul.f32 %v513, 0.2
  %v546 = vmul.f32 %v514, 0.2
  %v547 = vmul.f32 %v515, 0.2
  %v548 = vmul.f32 %v516, 0.2
  %v549 = vmul.f32 %v517, 0.2
  %v550 = vmul.f32 %v518, 0.2
  %v551 = vmul.f32 %v519, 0.2
  %v552 = vmul.f32 %v520, 0.2
  %v553 = vmul.f32 %v521, 0.2
  %v554 = vmul.f32 %v522, 0.2
  %v555 = vmul.f32 %v523, 0.2
  %v556 = vsel %vm524, %v508, %v540
  %v557 = vsel %vm525, %v509, %v541
  %v558 = vsel %vm526, %v510, %v542
  %v559 = vsel %vm527, %v511, %v543
  %v560 = vsel %vm528, %v512, %v544
  %v561 = vsel %vm529, %v513, %v545
  %v562 = vsel %vm530, %v514, %v546
  %v563 = vsel %vm531, %v515, %v547
  %v564 = vsel %vm532, %v516, %v548
  %v565 = vsel %vm533, %v517, %v549
  %v566 = vsel %vm534, %v518, %v550
  %v567 = vsel %vm535, %v519, %v551
  %v568 = vsel %vm536, %v520, %v552
  %v569 = vsel %vm537, %v521, %v553
  %v570 = vsel %vm538, %v522, %v554
  %v571 = vsel %vm539, %v523, %v555
  %v572 = vld [vmem:[%s5] sm:$0xf]
  %v573 = vld [vmem:[%s5 + $0x4] sm:$0xf]
  %v574 = vld [vmem:[%s5 + $0x8] sm:$0xf]
  %v575 = vld [vmem:[%s5 + $0xc] sm:$0xf]
  %v576 = vld [vmem:[%s5 + $0x10] sm:$0xf]
  %v577 = vld [vmem:[%s5 + $0x14] sm:$0xf]
  %v578 = vld [vmem:[%s5 + $0x18] sm:$0xf]
  %v579 = vld [vmem:[%s5 + $0x1c] sm:$0xf]
  %v580 = vld [vmem:[%s5 + $0x20] sm:$0xf]
  %v581 = vld [vmem:[%s5 + $0x24] sm:$0xf]
  %v582 = vld [vmem:[%s5 + $0x28] sm:$0xf]
  %v583 = vld [vmem:[%s5 + $0x2c] sm:$0xf]
  %v584 = vld [vmem:[%s5 + $0x30] sm:$0xf]
  %v585 = vld [vmem:[%s5 + $0x34] sm:$0xf]
  %v586 = vld [vmem:[%s5 + $0x38] sm:$0xf]
  %v587 = vld [vmem:[%s5 + $0x3c] sm:$0xf]
  %v588 = vld [vmem:[%s5 + $0x40] sm:$0xf]
  %v589 = vld [vmem:[%s5 + $0x44] sm:$0xf]
  %v590 = vld [vmem:[%s5 + $0x48] sm:$0xf]
  %v591 = vld [vmem:[%s5 + $0x4c] sm:$0xf]
  %v592 = vld [vmem:[%s5 + $0x50] sm:$0xf]
  %v593 = vld [vmem:[%s5 + $0x54] sm:$0xf]
  %v594 = vld [vmem:[%s5 + $0x58] sm:$0xf]
  %v595 = vld [vmem:[%s5 + $0x5c] sm:$0xf]
  %v596 = vld [vmem:[%s5 + $0x60] sm:$0xf]
  %v597 = vld [vmem:[%s5 + $0x64] sm:$0xf]
  %v598 = vld [vmem:[%s5 + $0x68] sm:$0xf]
  %v599 = vld [vmem:[%s5 + $0x6c] sm:$0xf]
  %v600 = vld [vmem:[%s5 + $0x70] sm:$0xf]
  %v601 = vld [vmem:[%s5 + $0x74] sm:$0xf]
  %v602 = vld [vmem:[%s5 + $0x78] sm:$0xf]
  %v603 = vld [vmem:[%s5 + $0x7c] sm:$0xf]
  %v604 = vpack.c.bf16 %v558, %v556
  %v605 = vpack.c.bf16 %v559, %v557
  %v606 = vpack.c.bf16 %v562, %v560
  %v607 = vpack.c.bf16 %v563, %v561
  %v608 = vpack.c.bf16 %v566, %v564
  %v609 = vpack.c.bf16 %v567, %v565
  %v610 = vpack.c.bf16 %v570, %v568
  %v611 = vpack.c.bf16 %v571, %v569
  %v644 = vunpack.c.l.b16 %v572
  %v645 = vunpack.c.l.b16 %v573
  %v646 = vunpack.c.l.b16 %v574
  %v647 = vunpack.c.l.b16 %v575
  %v648 = vunpack.c.l.b16 %v576
  %v649 = vunpack.c.l.b16 %v577
  %v650 = vunpack.c.l.b16 %v578
  %v651 = vunpack.c.l.b16 %v579
  %v652 = vunpack.c.l.b16 %v580
  %v653 = vunpack.c.l.b16 %v581
  %v654 = vunpack.c.l.b16 %v582
  %v655 = vunpack.c.l.b16 %v583
  %v656 = vunpack.c.l.b16 %v584
  %v657 = vunpack.c.l.b16 %v585
  %v658 = vunpack.c.l.b16 %v586
  %v659 = vunpack.c.l.b16 %v587
  %v660 = vunpack.c.l.b16 %v588
  %v661 = vunpack.c.l.b16 %v589
  %v662 = vunpack.c.l.b16 %v590
  %v663 = vunpack.c.l.b16 %v591
  %v664 = vunpack.c.l.b16 %v592
  %v665 = vunpack.c.l.b16 %v593
  %v666 = vunpack.c.l.b16 %v594
  %v667 = vunpack.c.l.b16 %v595
  %v668 = vunpack.c.l.b16 %v596
  %v669 = vunpack.c.l.b16 %v597
  %v670 = vunpack.c.l.b16 %v598
  %v671 = vunpack.c.l.b16 %v599
  %v672 = vunpack.c.l.b16 %v600
  %v673 = vunpack.c.l.b16 %v601
  %v674 = vunpack.c.l.b16 %v602
  %v675 = vunpack.c.l.b16 %v603
  %v676 = vpack.c.b16 %v645, %v644
  %v677 = vpack.c.b16 %v647, %v646
  %v678 = vpack.c.b16 %v649, %v648
  %v679 = vpack.c.b16 %v651, %v650
  %v680 = vpack.c.b16 %v653, %v652
  %v681 = vpack.c.b16 %v655, %v654
  %v682 = vpack.c.b16 %v657, %v656
  %v683 = vpack.c.b16 %v659, %v658
  %v684 = vpack.c.b16 %v661, %v660
  %v685 = vpack.c.b16 %v663, %v662
  %v686 = vpack.c.b16 %v665, %v664
  %v687 = vpack.c.b16 %v667, %v666
  %v688 = vpack.c.b16 %v669, %v668
  %v689 = vpack.c.b16 %v671, %v670
  %v690 = vpack.c.b16 %v673, %v672
  %v691 = vpack.c.b16 %v675, %v674
  %708 = vmatprep.subr.bf16.mxu0 0
  %709 = vmatpush1.bf16.msra.mxu0 %v683
  %710 = vmatprep.subr.bf16.mxu0 0
  %711 = vmatpush1.bf16.msra.mxu0 %v682
  %712 = vmatprep.subr.bf16.mxu0 0
  %713 = vmatpush1.bf16.msra.mxu0 %v681
  %714 = vmatprep.subr.bf16.mxu0 0
  %715 = vmatpush1.bf16.msra.mxu0 %v680
  %716 = vmatprep.subr.bf16.mxu0 0
  %717 = vmatpush1.bf16.msra.mxu0 %v679
  %718 = vmatprep.subr.bf16.mxu0 0
  %719 = vmatpush1.bf16.msra.mxu0 %v678
  %720 = vmatprep.subr.bf16.mxu0 0
  %721 = vmatpush1.bf16.msra.mxu0 %v677
  %722 = vmatprep.subr.bf16.mxu0 0
  %723 = vmatpush1.bf16.msra.mxu0 %v676
  %724 = vmatprep.subr.bf16.mxu0 0
  %725 = vmatpush2.bf16.msra.mxu0 %v691
  %726 = vmatprep.subr.bf16.mxu0 0
  %727 = vmatpush2.bf16.msra.mxu0 %v690
  %728 = vmatprep.subr.bf16.mxu0 0
  %729 = vmatpush2.bf16.msra.mxu0 %v689
  %730 = vmatprep.subr.bf16.mxu0 0
  %731 = vmatpush2.bf16.msra.mxu0 %v688
  %732 = vmatprep.subr.bf16.mxu0 0
  %733 = vmatpush2.bf16.msra.mxu0 %v687
  %734 = vmatprep.subr.bf16.mxu0 0
  %735 = vmatpush2.bf16.msra.mxu0 %v686
  %736 = vmatprep.subr.bf16.mxu0 0
  %737 = vmatpush2.bf16.msra.mxu0 %v685
  %738 = vmatprep.subr.bf16.mxu0 0
  %739 = vmatpush2.bf16.msra.mxu0 %v684
  %740 = vmatprep.mubr.bf16.mxu0 %v605
  %741 = vmatmul.mubr.bf16.gmra.mxu0 %v604
  %v742 = vpop.f32.mrf.mxu0
  %v743 = vadd.f32 0.0, %v742
  %v744 = vpop.f32.mrf.mxu0
  %v745 = vpop.f32.mrf.mxu0
  %v746 = vadd.f32 0.0, %v745
  %v747 = vpop.f32.mrf.mxu0
  %748 = vmatprep.mubr.bf16.mxu0 %v607
  %749 = vmatmul.mubr.bf16.gmra.mxu0 %v606
  %v750 = vpop.f32.mrf.mxu0
  %v751 = vadd.f32 0.0, %v750
  %v752 = vpop.f32.mrf.mxu0
  %v753 = vpop.f32.mrf.mxu0
  %v754 = vadd.f32 0.0, %v753
  %v755 = vpop.f32.mrf.mxu0
  %756 = vmatprep.mubr.bf16.mxu0 %v609
  %757 = vmatmul.mubr.bf16.gmra.mxu0 %v608
  %v758 = vpop.f32.mrf.mxu0
  %v759 = vadd.f32 0.0, %v758
  %v760 = vpop.f32.mrf.mxu0
  %v761 = vpop.f32.mrf.mxu0
  %v762 = vadd.f32 0.0, %v761
  %v763 = vpop.f32.mrf.mxu0
  %764 = vmatprep.mubr.bf16.mxu0 %v611
  %765 = vmatmul.mubr.bf16.gmra.mxu0 %v610
  %v766 = vpop.f32.mrf.mxu0
  %v767 = vadd.f32 0.0, %v766
  %v768 = vpop.f32.mrf.mxu0
  %v769 = vpop.f32.mrf.mxu0
  %v770 = vadd.f32 0.0, %v769
  %v771 = vpop.f32.mrf.mxu0
  %772 = vdwg.mxu0
  %v773 = vadd.f32 %v743, %v183
  %v774 = vadd.f32 %v746, %v188
  %v775 = vadd.f32 %v751, %v193
  %v776 = vadd.f32 %v754, %v198
  %v777 = vadd.f32 %v759, %v203
  %v778 = vadd.f32 %v762, %v208
  %v779 = vadd.f32 %v767, %v213
  %v780 = vadd.f32 %v770, %v218
  %vm781 = vcmask 64512
  %v782 = vsel %vm781, %v773, -inf
  %v783 = vrot.slane %v782, 4
  %v784 = vmax.f32 %v782, %v783
  %v785 = vrot.slane %v784, 2
  %v786 = vmax.f32 %v784, %v785
  %v787 = vrot.slane %v786, 1
  %v788 = vmax.f32 %v786, %v787
  %v789 = vsel %vm781, %v774, -inf
  %v790 = vrot.slane %v789, 4
  %v791 = vmax.f32 %v789, %v790
  %v792 = vrot.slane %v791, 2
  %v793 = vmax.f32 %v791, %v792
  %v794 = vrot.slane %v793, 1
  %v795 = vmax.f32 %v793, %v794
  %v796 = vsel %vm781, %v775, -inf
  %v797 = vrot.slane %v796, 4
  %v798 = vmax.f32 %v796, %v797
  %v799 = vrot.slane %v798, 2
  %v800 = vmax.f32 %v798, %v799
  %v801 = vrot.slane %v800, 1
  %v802 = vmax.f32 %v800, %v801
  %v803 = vsel %vm781, %v776, -inf
  %v804 = vrot.slane %v803, 4
  %v805 = vmax.f32 %v803, %v804
  %v806 = vrot.slane %v805, 2
  %v807 = vmax.f32 %v805, %v806
  %v808 = vrot.slane %v807, 1
  %v809 = vmax.f32 %v807, %v808
  %v810 = vsel %vm781, %v777, -inf
  %v811 = vrot.slane %v810, 4
  %v812 = vmax.f32 %v810, %v811
  %v813 = vrot.slane %v812, 2
  %v814 = vmax.f32 %v812, %v813
  %v815 = vrot.slane %v814, 1
  %v816 = vmax.f32 %v814, %v815
  %v817 = vsel %vm781, %v778, -inf
  %v818 = vrot.slane %v817, 4
  %v819 = vmax.f32 %v817, %v818
  %v820 = vrot.slane %v819, 2
  %v821 = vmax.f32 %v819, %v820
  %v822 = vrot.slane %v821, 1
  %v823 = vmax.f32 %v821, %v822
  %v824 = vsel %vm781, %v779, -inf
  %v825 = vrot.slane %v824, 4
  %v826 = vmax.f32 %v824, %v825
  %v827 = vrot.slane %v826, 2
  %v828 = vmax.f32 %v826, %v827
  %v829 = vrot.slane %v828, 1
  %v830 = vmax.f32 %v828, %v829
  %v831 = vsel %vm781, %v780, -inf
  %v832 = vrot.slane %v831, 4
  %v833 = vmax.f32 %v831, %v832
  %v834 = vrot.slane %v833, 2
  %v835 = vmax.f32 %v833, %v834
  %v836 = vrot.slane %v835, 1
  %v837 = vmax.f32 %v835, %v836
  %v838 = vsub.f32 %v773, %v788
  %v839 = vsub.f32 %v774, %v795
  %v840 = vsub.f32 %v775, %v802
  %v841 = vsub.f32 %v776, %v809
  %v842 = vsub.f32 %v777, %v816
  %v843 = vsub.f32 %v778, %v823
  %v844 = vsub.f32 %v779, %v830
  %v845 = vsub.f32 %v780, %v837
  %v846 = vmul.f32 %v838, 1.442695
  %v847 = vpow.pop %v846
  %v848 = vmul.f32 %v839, 1.442695
  %v849 = vpow.pop %v848
  %v850 = vmul.f32 %v840, 1.442695
  %v851 = vpow.pop %v850
  %v852 = vmul.f32 %v841, 1.442695
  %v853 = vpow.pop %v852
  %v854 = vmul.f32 %v842, 1.442695
  %v855 = vpow.pop %v854
  %v856 = vmul.f32 %v843, 1.442695
  %v857 = vpow.pop %v856
  %v858 = vmul.f32 %v844, 1.442695
  %v859 = vpow.pop %v858
  %v860 = vmul.f32 %v845, 1.442695
  %v861 = vpow.pop %v860
  %v862 = vsel %vm781, %v847, 0.0
  %v863 = vrot.slane %v862, 4
  %v864 = vadd.f32 %v862, %v863
  %v865 = vrot.slane %v864, 2
  %v866 = vadd.f32 %v864, %v865
  %v867 = vrot.slane %v866, 1
  %v868 = vadd.f32 %v866, %v867
  %v869 = vsel %vm781, %v849, 0.0
  %v870 = vrot.slane %v869, 4
  %v871 = vadd.f32 %v869, %v870
  %v872 = vrot.slane %v871, 2
  %v873 = vadd.f32 %v871, %v872
  %v874 = vrot.slane %v873, 1
  %v875 = vadd.f32 %v873, %v874
  %v876 = vsel %vm781, %v851, 0.0
  %v877 = vrot.slane %v876, 4
  %v878 = vadd.f32 %v876, %v877
  %v879 = vrot.slane %v878, 2
  %v880 = vadd.f32 %v878, %v879
  %v881 = vrot.slane %v880, 1
  %v882 = vadd.f32 %v880, %v881
  %v883 = vsel %vm781, %v853, 0.0
  %v884 = vrot.slane %v883, 4
  %v885 = vadd.f32 %v883, %v884
  %v886 = vrot.slane %v885, 2
  %v887 = vadd.f32 %v885, %v886
  %v888 = vrot.slane %v887, 1
  %v889 = vadd.f32 %v887, %v888
  %v890 = vsel %vm781, %v855, 0.0
  %v891 = vrot.slane %v890, 4
  %v892 = vadd.f32 %v890, %v891
  %v893 = vrot.slane %v892, 2
  %v894 = vadd.f32 %v892, %v893
  %v895 = vrot.slane %v894, 1
  %v896 = vadd.f32 %v894, %v895
  %v897 = vsel %vm781, %v857, 0.0
  %v898 = vrot.slane %v897, 4
  %v899 = vadd.f32 %v897, %v898
  %v900 = vrot.slane %v899, 2
  %v901 = vadd.f32 %v899, %v900
  %v902 = vrot.slane %v901, 1
  %v903 = vadd.f32 %v901, %v902
  %v904 = vsel %vm781, %v859, 0.0
  %v905 = vrot.slane %v904, 4
  %v906 = vadd.f32 %v904, %v905
  %v907 = vrot.slane %v906, 2
  %v908 = vadd.f32 %v906, %v907
  %v909 = vrot.slane %v908, 1
  %v910 = vadd.f32 %v908, %v909
  %v911 = vsel %vm781, %v861, 0.0
  %v912 = vrot.slane %v911, 4
  %v913 = vadd.f32 %v911, %v912
  %v914 = vrot.slane %v913, 2
  %v915 = vadd.f32 %v913, %v914
  %v916 = vrot.slane %v915, 1
  %v917 = vadd.f32 %v915, %v916
  %v918 = vrcp.pop %v868
  %v919 = vrcp.pop %v875
  %v920 = vrcp.pop %v882
  %v921 = vrcp.pop %v889
  %v922 = vrcp.pop %v896
  %v923 = vrcp.pop %v903
  %v924 = vrcp.pop %v910
  %v925 = vrcp.pop %v917
  %v926 = vmul.f32 %v847, %v918
  %v927 = vmul.f32 %v849, %v919
  %v928 = vmul.f32 %v851, %v920
  %v929 = vmul.f32 %v853, %v921
  %v930 = vmul.f32 %v855, %v922
  %v931 = vmul.f32 %v857, %v923
  %v932 = vmul.f32 %v859, %v924
  %v933 = vmul.f32 %v861, %v925
  %v935 = vsel %vm781, %v926, 0
  %v938 = vsel %vm781, %v927, 0
  %v941 = vsel %vm781, %v928, 0
  %v944 = vsel %vm781, %v929, 0
  %v947 = vsel %vm781, %v930, 0
  %v950 = vsel %vm781, %v931, 0
  %v953 = vsel %vm781, %v932, 0
  %v956 = vsel %vm781, %v933, 0
  %958 = vmatprep.subr.mxu0 0.0
  %959 = vmatpush1.msra.mxu0 0.0
  %960 = vmatprep.subr.mxu0 0.0
  %961 = vmatpush1.msra.mxu0 0.0
  %962 = vmatprep.subr.mxu0 0.0
  %963 = vmatpush1.msra.mxu0 0.0
  %964 = vmatprep.subr.mxu0 0.0
  %965 = vmatpush1.msra.mxu0 0.0
  %966 = vmatprep.subr.mxu0 0.0
  %967 = vmatpush1.msra.mxu0 0.0
  %968 = vmatprep.subr.mxu0 0.0
  %969 = vmatpush1.msra.mxu0 0.0
  %970 = vmatprep.subr.mxu0 0.0
  %971 = vmatpush1.msra.mxu0 0.0
  %972 = vmatprep.subr.mxu0 0.0
  %973 = vmatpush1.msra.mxu0 0.0
  %974 = vmatprep.subr.mxu0 0.0
  %975 = vmatpush1.msra.mxu0 0.0
  %976 = vmatprep.subr.mxu0 0.0
  %977 = vmatpush1.msra.mxu0 0.0
  %978 = vmatprep.subr.mxu0 0.0
  %979 = vmatpush1.msra.mxu0 0.0
  %980 = vmatprep.subr.mxu0 0.0
  %981 = vmatpush1.msra.mxu0 0.0
  %982 = vmatprep.subr.mxu0 0.0
  %983 = vmatpush1.msra.mxu0 0.0
  %984 = vmatprep.subr.mxu0 0.0
  %985 = vmatpush1.msra.mxu0 0.0
  %986 = vmatprep.subr.mxu0 0.0
  %987 = vmatpush1.msra.mxu0 0.0
  %988 = vmatprep.subr.mxu0 %v37
  %989 = vmatpush1.msra.mxu0 %v36
  %990 = vmatprep.subr.mxu0 0.0
  %991 = vmatpush2.msra.mxu0 0.0
  %992 = vmatprep.subr.mxu0 0.0
  %993 = vmatpush2.msra.mxu0 0.0
  %994 = vmatprep.subr.mxu0 0.0
  %995 = vmatpush2.msra.mxu0 0.0
  %996 = vmatprep.subr.mxu0 0.0
  %997 = vmatpush2.msra.mxu0 0.0
  %998 = vmatprep.subr.mxu0 0.0
  %999 = vmatpush2.msra.mxu0 0.0
  %1000 = vmatprep.subr.mxu0 0.0
  %1001 = vmatpush2.msra.mxu0 0.0
  %1002 = vmatprep.subr.mxu0 0.0
  %1003 = vmatpush2.msra.mxu0 0.0
  %1004 = vmatprep.subr.mxu0 0.0
  %1005 = vmatpush2.msra.mxu0 0.0
  %1006 = vmatprep.subr.mxu0 0.0
  %1007 = vmatpush2.msra.mxu0 0.0
  %1008 = vmatprep.subr.mxu0 0.0
  %1009 = vmatpush2.msra.mxu0 0.0
  %1010 = vmatprep.subr.mxu0 0.0
  %1011 = vmatpush2.msra.mxu0 0.0
  %1012 = vmatprep.subr.mxu0 0.0
  %1013 = vmatpush2.msra.mxu0 0.0
  %1014 = vmatprep.subr.mxu0 0.0
  %1015 = vmatpush2.msra.mxu0 0.0
  %1016 = vmatprep.subr.mxu0 0.0
  %1017 = vmatpush2.msra.mxu0 0.0
  %1018 = vmatprep.subr.mxu0 0.0
  %1019 = vmatpush2.msra.mxu0 0.0
  %1020 = vmatprep.subr.mxu0 0.0
  %1021 = vmatpush2.msra.mxu0 0.0
  %1022 = vmatprep.mubr.f32.mxu0 0.0
  %1023 = vmatmul.mubr.f32.gmra.mxu0 %v935
  %v1024 = vpop.f32.mrf.mxu0
  %v1025 = vadd.f32 0.0, %v1024
  %v1026 = vpop.f32.mrf.mxu0
  %v1027 = vadd.f32 0.0, %v1026
  %1028 = vmatprep.mubr.f32.mxu0 0.0
  %1029 = vmatmul.mubr.f32.gmra.mxu0 %v938
  %v1030 = vpop.f32.mrf.mxu0
  %v1031 = vadd.f32 0.0, %v1030
  %v1032 = vpop.f32.mrf.mxu0
  %v1033 = vadd.f32 0.0, %v1032
  %1034 = vmatprep.mubr.f32.mxu0 0.0
  %1035 = vmatmul.mubr.f32.gmra.mxu0 %v941
  %v1036 = vpop.f32.mrf.mxu0
  %v1037 = vadd.f32 0.0, %v1036
  %v1038 = vpop.f32.mrf.mxu0
  %v1039 = vadd.f32 0.0, %v1038
  %1040 = vmatprep.mubr.f32.mxu0 0.0
  %1041 = vmatmul.mubr.f32.gmra.mxu0 %v944
  %v1042 = vpop.f32.mrf.mxu0
  %v1043 = vadd.f32 0.0, %v1042
  %v1044 = vpop.f32.mrf.mxu0
  %v1045 = vadd.f32 0.0, %v1044
  %1046 = vmatprep.mubr.f32.mxu0 0.0
  %1047 = vmatmul.mubr.f32.gmra.mxu0 %v947
  %v1048 = vpop.f32.mrf.mxu0
  %v1049 = vadd.f32 0.0, %v1048
  %v1050 = vpop.f32.mrf.mxu0
  %v1051 = vadd.f32 0.0, %v1050
  %1052 = vmatprep.mubr.f32.mxu0 0.0
  %1053 = vmatmul.mubr.f32.gmra.mxu0 %v950
  %v1054 = vpop.f32.mrf.mxu0
  %v1055 = vadd.f32 0.0, %v1054
  %v1056 = vpop.f32.mrf.mxu0
  %v1057 = vadd.f32 0.0, %v1056
  %1058 = vmatprep.mubr.f32.mxu0 0.0
  %1059 = vmatmul.mubr.f32.gmra.mxu0 %v953
  %v1060 = vpop.f32.mrf.mxu0
  %v1061 = vadd.f32 0.0, %v1060
  %v1062 = vpop.f32.mrf.mxu0
  %v1063 = vadd.f32 0.0, %v1062
  %1064 = vmatprep.mubr.f32.mxu0 0.0
  %1065 = vmatmul.mubr.f32.gmra.mxu0 %v956
  %v1066 = vpop.f32.mrf.mxu0
  %v1067 = vadd.f32 0.0, %v1066
  %v1068 = vpop.f32.mrf.mxu0
  %v1069 = vadd.f32 0.0, %v1068
  %1070 = vdwg.mxu0
  %v1071 = vmul.f32 %v1025, %v329
  %v1072 = vmul.f32 %v1027, %v331
  %v1073 = vmul.f32 %v1031, %v329
  %v1074 = vmul.f32 %v1033, %v331
  %v1075 = vmul.f32 %v1037, %v329
  %v1076 = vmul.f32 %v1039, %v331
  %v1077 = vmul.f32 %v1043, %v329
  %v1078 = vmul.f32 %v1045, %v331
  %v1079 = vmul.f32 %v1049, %v329
  %v1080 = vmul.f32 %v1051, %v331
  %v1081 = vmul.f32 %v1055, %v329
  %v1082 = vmul.f32 %v1057, %v331
  %v1083 = vmul.f32 %v1061, %v329
  %v1084 = vmul.f32 %v1063, %v331
  %v1085 = vmul.f32 %v1067, %v329
  %v1086 = vmul.f32 %v1069, %v331
  %v1087 = vrot.slane %v1071, 4
  %v1088 = vadd.f32 %v1071, %v1087
  %v1089 = vrot.slane %v1088, 2
  %v1090 = vadd.f32 %v1088, %v1089
  %v1091 = vrot.slane %v1090, 1
  %v1092 = vadd.f32 %v1090, %v1091
  %v1093 = vrot.slane %v1072, 4
  %v1094 = vadd.f32 %v1072, %v1093
  %v1095 = vrot.slane %v1094, 2
  %v1096 = vadd.f32 %v1094, %v1095
  %v1097 = vrot.slane %v1096, 1
  %v1098 = vadd.f32 %v1096, %v1097
  %v1099 = vrot.slane %v1073, 4
  %v1100 = vadd.f32 %v1073, %v1099
  %v1101 = vrot.slane %v1100, 2
  %v1102 = vadd.f32 %v1100, %v1101
  %v1103 = vrot.slane %v1102, 1
  %v1104 = vadd.f32 %v1102, %v1103
  %v1105 = vrot.slane %v1074, 4
  %v1106 = vadd.f32 %v1074, %v1105
  %v1107 = vrot.slane %v1106, 2
  %v1108 = vadd.f32 %v1106, %v1107
  %v1109 = vrot.slane %v1108, 1
  %v1110 = vadd.f32 %v1108, %v1109
  %v1111 = vrot.slane %v1075, 4
  %v1112 = vadd.f32 %v1075, %v1111
  %v1113 = vrot.slane %v1112, 2
  %v1114 = vadd.f32 %v1112, %v1113
  %v1115 = vrot.slane %v1114, 1
  %v1116 = vadd.f32 %v1114, %v1115
  %v1117 = vrot.slane %v1076, 4
  %v1118 = vadd.f32 %v1076, %v1117
  %v1119 = vrot.slane %v1118, 2
  %v1120 = vadd.f32 %v1118, %v1119
  %v1121 = vrot.slane %v1120, 1
  %v1122 = vadd.f32 %v1120, %v1121
  %v1123 = vrot.slane %v1077, 4
  %v1124 = vadd.f32 %v1077, %v1123
  %v1125 = vrot.slane %v1124, 2
  %v1126 = vadd.f32 %v1124, %v1125
  %v1127 = vrot.slane %v1126, 1
  %v1128 = vadd.f32 %v1126, %v1127
  %v1129 = vrot.slane %v1078, 4
  %v1130 = vadd.f32 %v1078, %v1129
  %v1131 = vrot.slane %v1130, 2
  %v1132 = vadd.f32 %v1130, %v1131
  %v1133 = vrot.slane %v1132, 1
  %v1134 = vadd.f32 %v1132, %v1133
  %v1135 = vrot.slane %v1079, 4
  %v1136 = vadd.f32 %v1079, %v1135
  %v1137 = vrot.slane %v1136, 2
  %v1138 = vadd.f32 %v1136, %v1137
  %v1139 = vrot.slane %v1138, 1
  %v1140 = vadd.f32 %v1138, %v1139
  %v1141 = vrot.slane %v1080, 4
  %v1142 = vadd.f32 %v1080, %v1141
  %v1143 = vrot.slane %v1142, 2
  %v1144 = vadd.f32 %v1142, %v1143
  %v1145 = vrot.slane %v1144, 1
  %v1146 = vadd.f32 %v1144, %v1145
  %v1147 = vrot.slane %v1081, 4
  %v1148 = vadd.f32 %v1081, %v1147
  %v1149 = vrot.slane %v1148, 2
  %v1150 = vadd.f32 %v1148, %v1149
  %v1151 = vrot.slane %v1150, 1
  %v1152 = vadd.f32 %v1150, %v1151
  %v1153 = vrot.slane %v1082, 4
  %v1154 = vadd.f32 %v1082, %v1153
  %v1155 = vrot.slane %v1154, 2
  %v1156 = vadd.f32 %v1154, %v1155
  %v1157 = vrot.slane %v1156, 1
  %v1158 = vadd.f32 %v1156, %v1157
  %v1159 = vrot.slane %v1083, 4
  %v1160 = vadd.f32 %v1083, %v1159
  %v1161 = vrot.slane %v1160, 2
  %v1162 = vadd.f32 %v1160, %v1161
  %v1163 = vrot.slane %v1162, 1
  %v1164 = vadd.f32 %v1162, %v1163
  %v1165 = vrot.slane %v1084, 4
  %v1166 = vadd.f32 %v1084, %v1165
  %v1167 = vrot.slane %v1166, 2
  %v1168 = vadd.f32 %v1166, %v1167
  %v1169 = vrot.slane %v1168, 1
  %v1170 = vadd.f32 %v1168, %v1169
  %v1171 = vrot.slane %v1085, 4
  %v1172 = vadd.f32 %v1085, %v1171
  %v1173 = vrot.slane %v1172, 2
  %v1174 = vadd.f32 %v1172, %v1173
  %v1175 = vrot.slane %v1174, 1
  %v1176 = vadd.f32 %v1174, %v1175
  %v1177 = vrot.slane %v1086, 4
  %v1178 = vadd.f32 %v1086, %v1177
  %v1179 = vrot.slane %v1178, 2
  %v1180 = vadd.f32 %v1178, %v1179
  %v1181 = vrot.slane %v1180, 1
  %v1182 = vadd.f32 %v1180, %v1181
  %v1183 = vld [vmem:[%s6] sm:$0xf]
  %v1184 = vld [vmem:[%s6 + $0x4] sm:$0xf]
  %v1185 = vld [vmem:[%s6 + $0x8] sm:$0xf]
  %v1186 = vld [vmem:[%s6 + $0xc] sm:$0xf]
  %v1187 = vld [vmem:[%s6 + $0x10] sm:$0xf]
  %v1188 = vld [vmem:[%s6 + $0x14] sm:$0xf]
  %v1189 = vld [vmem:[%s6 + $0x18] sm:$0xf]
  %v1190 = vld [vmem:[%s6 + $0x1c] sm:$0xf]
  %v1191 = vld [vmem:[%s6 + $0x20] sm:$0xf]
  %v1192 = vld [vmem:[%s6 + $0x24] sm:$0xf]
  %v1193 = vld [vmem:[%s6 + $0x28] sm:$0xf]
  %v1194 = vld [vmem:[%s6 + $0x2c] sm:$0xf]
  %v1195 = vld [vmem:[%s6 + $0x30] sm:$0xf]
  %v1196 = vld [vmem:[%s6 + $0x34] sm:$0xf]
  %v1197 = vld [vmem:[%s6 + $0x38] sm:$0xf]
  %v1198 = vld [vmem:[%s6 + $0x3c] sm:$0xf]
  %v1199 = vld [vmem:[%s6 + $0x40] sm:$0xf]
  %v1200 = vld [vmem:[%s6 + $0x44] sm:$0xf]
  %v1201 = vld [vmem:[%s6 + $0x48] sm:$0xf]
  %v1202 = vld [vmem:[%s6 + $0x4c] sm:$0xf]
  %v1203 = vld [vmem:[%s6 + $0x50] sm:$0xf]
  %v1204 = vld [vmem:[%s6 + $0x54] sm:$0xf]
  %v1205 = vld [vmem:[%s6 + $0x58] sm:$0xf]
  %v1206 = vld [vmem:[%s6 + $0x5c] sm:$0xf]
  %v1207 = vld [vmem:[%s6 + $0x60] sm:$0xf]
  %v1208 = vld [vmem:[%s6 + $0x64] sm:$0xf]
  %v1209 = vld [vmem:[%s6 + $0x68] sm:$0xf]
  %v1210 = vld [vmem:[%s6 + $0x6c] sm:$0xf]
  %v1211 = vld [vmem:[%s6 + $0x70] sm:$0xf]
  %v1212 = vld [vmem:[%s6 + $0x74] sm:$0xf]
  %v1213 = vld [vmem:[%s6 + $0x78] sm:$0xf]
  %v1214 = vld [vmem:[%s6 + $0x7c] sm:$0xf]
  %v1215 = vpack.c.bf16 %v1092, %v1092
  %v1216 = vpack.c.bf16 %v1098, %v1098
  %v1217 = vpack.c.bf16 %v1104, %v1104
  %v1218 = vpack.c.bf16 %v1110, %v1110
  %v1219 = vpack.c.bf16 %v1116, %v1116
  %v1220 = vpack.c.bf16 %v1122, %v1122
  %v1221 = vpack.c.bf16 %v1128, %v1128
  %v1222 = vpack.c.bf16 %v1134, %v1134
  %v1223 = vpack.c.bf16 %v1140, %v1140
  %v1224 = vpack.c.bf16 %v1146, %v1146
  %v1225 = vpack.c.bf16 %v1152, %v1152
  %v1226 = vpack.c.bf16 %v1158, %v1158
  %v1227 = vpack.c.bf16 %v1164, %v1164
  %v1228 = vpack.c.bf16 %v1170, %v1170
  %v1229 = vpack.c.bf16 %v1176, %v1176
  %v1230 = vpack.c.bf16 %v1182, %v1182
  %v1231 = vlaneseq
  %v1232 = vshrl.u32 %v1231, 7
  %v1233 = vsub.s32 2, %v1232
  %v1234 = vrot.slane %v33, %v1233
  %v1251 = vunpack.c.l.b16 %v1215
  %v1252 = vunpack.c.l.b16 %v1216
  %v1253 = vunpack.c.l.b16 %v1217
  %v1254 = vunpack.c.l.b16 %v1218
  %v1255 = vunpack.c.l.b16 %v1219
  %v1256 = vunpack.c.l.b16 %v1220
  %v1257 = vunpack.c.l.b16 %v1221
  %v1258 = vunpack.c.l.b16 %v1222
  %v1259 = vunpack.c.l.b16 %v1223
  %v1260 = vunpack.c.l.b16 %v1224
  %v1261 = vunpack.c.l.b16 %v1225
  %v1262 = vunpack.c.l.b16 %v1226
  %v1263 = vunpack.c.l.b16 %v1227
  %v1264 = vunpack.c.l.b16 %v1228
  %v1265 = vunpack.c.l.b16 %v1229
  %v1266 = vunpack.c.l.b16 %v1230
  %vm1267 = vcmask 1041409
  %v1268 = vsel %vm1267, %v1253, %v1251
  %vm1269 = vcmask 1042434
  %v1270 = vsel %vm1269, %v1255, %v1268
  %vm1271 = vcmask 1043459
  %v1272 = vsel %vm1271, %v1257, %v1270
  %vm1273 = vcmask 1044484
  %v1274 = vsel %vm1273, %v1259, %v1272
  %vm1275 = vcmask 1045509
  %v1276 = vsel %vm1275, %v1261, %v1274
  %vm1277 = vcmask 1046534
  %v1278 = vsel %vm1277, %v1263, %v1276
  %vm1279 = vcmask 1047559
  %v1280 = vsel %vm1279, %v1265, %v1278
  %v1281 = vsel %vm1267, %v1254, %v1252
  %v1282 = vsel %vm1269, %v1256, %v1281
  %v1283 = vsel %vm1271, %v1258, %v1282
  %v1284 = vsel %vm1273, %v1260, %v1283
  %v1285 = vsel %vm1275, %v1262, %v1284
  %v1286 = vsel %vm1277, %v1264, %v1285
  %v1287 = vsel %vm1279, %v1266, %v1286
  %v1288 = vpack.c.b16 %v1280, %v1280
  %v1289 = vpack.c.b16 %v1287, %v1287
  %v1324 = vunpack.c.l.b16 %v1183
  %v1325 = vunpack.c.l.b16 %v1184
  %v1326 = vunpack.c.l.b16 %v1185
  %v1327 = vunpack.c.l.b16 %v1186
  %v1328 = vunpack.c.l.b16 %v1187
  %v1329 = vunpack.c.l.b16 %v1188
  %v1330 = vunpack.c.l.b16 %v1189
  %v1331 = vunpack.c.l.b16 %v1190
  %v1332 = vunpack.c.l.b16 %v1191
  %v1333 = vunpack.c.l.b16 %v1192
  %v1334 = vunpack.c.l.b16 %v1193
  %v1335 = vunpack.c.l.b16 %v1194
  %v1336 = vunpack.c.l.b16 %v1195
  %v1337 = vunpack.c.l.b16 %v1196
  %v1338 = vunpack.c.l.b16 %v1197
  %v1339 = vunpack.c.l.b16 %v1198
  %v1340 = vunpack.c.l.b16 %v1199
  %v1341 = vunpack.c.l.b16 %v1200
  %v1342 = vunpack.c.l.b16 %v1201
  %v1343 = vunpack.c.l.b16 %v1202
  %v1344 = vunpack.c.l.b16 %v1203
  %v1345 = vunpack.c.l.b16 %v1204
  %v1346 = vunpack.c.l.b16 %v1205
  %v1347 = vunpack.c.l.b16 %v1206
  %v1348 = vunpack.c.l.b16 %v1207
  %v1349 = vunpack.c.l.b16 %v1208
  %v1350 = vunpack.c.l.b16 %v1209
  %v1351 = vunpack.c.l.b16 %v1210
  %v1352 = vunpack.c.l.b16 %v1211
  %v1353 = vunpack.c.l.b16 %v1212
  %v1354 = vunpack.c.l.b16 %v1213
  %v1355 = vunpack.c.l.b16 %v1214
  %v1356 = vpack.c.b16 %v1325, %v1324
  %v1357 = vpack.c.b16 %v1327, %v1326
  %v1358 = vpack.c.b16 %v1329, %v1328
  %v1359 = vpack.c.b16 %v1331, %v1330
  %v1360 = vpack.c.b16 %v1333, %v1332
  %v1361 = vpack.c.b16 %v1335, %v1334
  %v1362 = vpack.c.b16 %v1337, %v1336
  %v1363 = vpack.c.b16 %v1339, %v1338
  %v1364 = vpack.c.b16 %v1341, %v1340
  %v1365 = vpack.c.b16 %v1343, %v1342
  %v1366 = vpack.c.b16 %v1345, %v1344
  %v1367 = vpack.c.b16 %v1347, %v1346
  %v1368 = vpack.c.b16 %v1349, %v1348
  %v1369 = vpack.c.b16 %v1351, %v1350
  %v1370 = vpack.c.b16 %v1353, %v1352
  %v1371 = vpack.c.b16 %v1355, %v1354
  %1388 = vmatprep.subr.bf16.mxu0 0
  %1389 = vmatpush1.bf16.msra.mxu0 %v1363
  %1390 = vmatprep.subr.bf16.mxu0 0
  %1391 = vmatpush1.bf16.msra.mxu0 %v1362
  %1392 = vmatprep.subr.bf16.mxu0 0
  %1393 = vmatpush1.bf16.msra.mxu0 %v1361
  %1394 = vmatprep.subr.bf16.mxu0 0
  %1395 = vmatpush1.bf16.msra.mxu0 %v1360
  %1396 = vmatprep.subr.bf16.mxu0 0
  %1397 = vmatpush1.bf16.msra.mxu0 %v1359
  %1398 = vmatprep.subr.bf16.mxu0 0
  %1399 = vmatpush1.bf16.msra.mxu0 %v1358
  %1400 = vmatprep.subr.bf16.mxu0 0
  %1401 = vmatpush1.bf16.msra.mxu0 %v1357
  %1402 = vmatprep.subr.bf16.mxu0 0
  %1403 = vmatpush1.bf16.msra.mxu0 %v1356
  %1404 = vmatprep.subr.bf16.mxu0 0
  %1405 = vmatpush2.bf16.msra.mxu0 %v1371
  %1406 = vmatprep.subr.bf16.mxu0 0
  %1407 = vmatpush2.bf16.msra.mxu0 %v1370
  %1408 = vmatprep.subr.bf16.mxu0 0
  %1409 = vmatpush2.bf16.msra.mxu0 %v1369
  %1410 = vmatprep.subr.bf16.mxu0 0
  %1411 = vmatpush2.bf16.msra.mxu0 %v1368
  %1412 = vmatprep.subr.bf16.mxu0 0
  %1413 = vmatpush2.bf16.msra.mxu0 %v1367
  %1414 = vmatprep.subr.bf16.mxu0 0
  %1415 = vmatpush2.bf16.msra.mxu0 %v1366
  %1416 = vmatprep.subr.bf16.mxu0 0
  %1417 = vmatpush2.bf16.msra.mxu0 %v1365
  %1418 = vmatprep.subr.bf16.mxu0 0
  %1419 = vmatpush2.bf16.msra.mxu0 %v1364
  %1420 = vmatprep.mubr.bf16.mxu0 %v1289
  %1421 = vmatmul.mubr.bf16.gmra.mxu0 %v1288
  %v1422 = vpop.f32.mrf.mxu0
  %v1423 = vadd.f32 %v1234, %v1422
  %v1424 = vpop.f32.mrf.mxu0
  %v1425 = vpop.f32.mrf.mxu0
  %v1426 = vpop.f32.mrf.mxu0
  %1427 = vdwg.mxu0
  %v1428 = vadd.f32 %v1423, %v167
  %v1429 = vsel %vm60, %v1428, 0.0
  %1430 = vadd.xlane.f32.xlu0 %v1429
  %v1431 = vpop.xlane.xlu0 %1430
  %v1432 = vrcp.pop 32.0
  %v1433 = vmul.f32 %v1431, %v1432
  %v1434 = vsub.f32 %v1428, %v1433
  %v1435 = vmul.f32 %v1434, %v1434
  %v1436 = vsel %vm60, %v1435, 0.0
  %1437 = vadd.xlane.f32.xlu0 %v1436
  %v1438 = vpop.xlane.xlu0 %1437
  %v1439 = vmul.f32 %v1438, %v1432
  %v1440 = vadd.f32 %v1439, 1e-05
  %v1441 = vrsqrt.pop %v1440
  %v1442 = vmul.f32 %v1434, %v1441
  %v1443 = vlaneseq
  %v1444 = vshrl.u32 %v1443, 7
  %v1445 = vsub.s32 3, %v1444
  %v1446 = vrot.slane %v33, %v1445
  %v1447 = vmul.f32 %v1442, %v1446
  %v1448 = vlaneseq
  %v1449 = vshrl.u32 %v1448, 7
  %v1450 = vsub.s32 4, %v1449
  %v1451 = vrot.slane %v33, %v1450
  %v1452 = vadd.f32 %v1447, %v1451
  %s1453 = scalar_lea.vmem %s2, 32
  %v1454 = vld [vmem:[%s1453] sm:$0xf]
  %v1455 = vld [vmem:[%s1453 + $0x4] sm:$0xf]
  %v1456 = vld [vmem:[%s1453 + $0x8] sm:$0xf]
  %v1457 = vld [vmem:[%s1453 + $0xc] sm:$0xf]
  %v1458 = vpack.c.bf16 %v1452, %v1452
  %v1459 = vlaneseq
  %v1460 = vshrl.u32 %v1459, 7
  %v1461 = vsub.s32 5, %v1460
  %v1462 = vrot.slane %v33, %v1461
  %v1467 = vunpack.c.l.b16 %v1454
  %v1468 = vunpack.c.l.b16 %v1455
  %v1469 = vunpack.c.l.b16 %v1456
  %v1470 = vunpack.c.l.b16 %v1457
  %v1471 = vpack.c.b16 %v1468, %v1467
  %v1472 = vpack.c.b16 %v1470, %v1469
  %v1476 = vsel %vm60, %v1458, 0
  %1478 = vmatprep.subr.bf16.mxu0 0
  %1479 = vmatpush1.bf16.msra.mxu0 0
  %1480 = vmatprep.subr.bf16.mxu0 0
  %1481 = vmatpush1.bf16.msra.mxu0 0
  %1482 = vmatprep.subr.bf16.mxu0 0
  %1483 = vmatpush1.bf16.msra.mxu0 0
  %1484 = vmatprep.subr.bf16.mxu0 0
  %1485 = vmatpush1.bf16.msra.mxu0 0
  %1486 = vmatprep.subr.bf16.mxu0 0
  %1487 = vmatpush1.bf16.msra.mxu0 0
  %1488 = vmatprep.subr.bf16.mxu0 0
  %1489 = vmatpush1.bf16.msra.mxu0 0
  %1490 = vmatprep.subr.bf16.mxu0 0
  %1491 = vmatpush1.bf16.msra.mxu0 %v1472
  %1492 = vmatprep.subr.bf16.mxu0 0
  %1493 = vmatpush1.bf16.msra.mxu0 %v1471
  %1494 = vmatprep.subr.bf16.mxu0 0
  %1495 = vmatpush2.bf16.msra.mxu0 0
  %1496 = vmatprep.subr.bf16.mxu0 0
  %1497 = vmatpush2.bf16.msra.mxu0 0
  %1498 = vmatprep.subr.bf16.mxu0 0
  %1499 = vmatpush2.bf16.msra.mxu0 0
  %1500 = vmatprep.subr.bf16.mxu0 0
  %1501 = vmatpush2.bf16.msra.mxu0 0
  %1502 = vmatprep.subr.bf16.mxu0 0
  %1503 = vmatpush2.bf16.msra.mxu0 0
  %1504 = vmatprep.subr.bf16.mxu0 0
  %1505 = vmatpush2.bf16.msra.mxu0 0
  %1506 = vmatprep.subr.bf16.mxu0 0
  %1507 = vmatpush2.bf16.msra.mxu0 0
  %1508 = vmatprep.subr.bf16.mxu0 0
  %1509 = vmatpush2.bf16.msra.mxu0 0
  %1510 = vmatprep.mubr.bf16.mxu0 0
  %1511 = vmatmul.mubr.bf16.gmra.mxu0 %v1476
  %v1512 = vpop.f32.mrf.mxu0
  %v1513 = vadd.f32 %v1462, %v1512
  %v1514 = vpop.f32.mrf.mxu0
  %v1515 = vpop.f32.mrf.mxu0
  %v1516 = vpop.f32.mrf.mxu0
  %1517 = vdwg.mxu0
  %vm1518 = vcmp.ge.f32.partialorder %v1513, 0.0
  %v1519 = vmul.f32 %v1513, 0.01
  %v1520 = vsel %vm1518, %v1513, %v1519
  %s1521 = scalar_lea.vmem %s2, 48
  %v1522 = vld [vmem:[%s1521] sm:$0xf]
  %v1523 = vld [vmem:[%s1521 + $0x4] sm:$0xf]
  %v1524 = vld [vmem:[%s1521 + $0x8] sm:$0xf]
  %v1525 = vld [vmem:[%s1521 + $0xc] sm:$0xf]
  %v1526 = vpack.c.bf16 %v1520, %v1520
  %v1527 = vlaneseq
  %v1528 = vshrl.u32 %v1527, 7
  %v1529 = vsub.s32 6, %v1528
  %v1530 = vrot.slane %v33, %v1529
  %v1535 = vunpack.c.l.b16 %v1522
  %v1536 = vunpack.c.l.b16 %v1523
  %v1537 = vunpack.c.l.b16 %v1524
  %v1538 = vunpack.c.l.b16 %v1525
  %v1539 = vpack.c.b16 %v1536, %v1535
  %v1540 = vpack.c.b16 %v1538, %v1537
  %v1544 = vsel %vm60, %v1526, 0
  %1546 = vmatprep.subr.bf16.mxu0 0
  %1547 = vmatpush1.bf16.msra.mxu0 0
  %1548 = vmatprep.subr.bf16.mxu0 0
  %1549 = vmatpush1.bf16.msra.mxu0 0
  %1550 = vmatprep.subr.bf16.mxu0 0
  %1551 = vmatpush1.bf16.msra.mxu0 0
  %1552 = vmatprep.subr.bf16.mxu0 0
  %1553 = vmatpush1.bf16.msra.mxu0 0
  %1554 = vmatprep.subr.bf16.mxu0 0
  %1555 = vmatpush1.bf16.msra.mxu0 0
  %1556 = vmatprep.subr.bf16.mxu0 0
  %1557 = vmatpush1.bf16.msra.mxu0 0
  %1558 = vmatprep.subr.bf16.mxu0 0
  %1559 = vmatpush1.bf16.msra.mxu0 %v1540
  %1560 = vmatprep.subr.bf16.mxu0 0
  %1561 = vmatpush1.bf16.msra.mxu0 %v1539
  %1562 = vmatprep.subr.bf16.mxu0 0
  %1563 = vmatpush2.bf16.msra.mxu0 0
  %1564 = vmatprep.subr.bf16.mxu0 0
  %1565 = vmatpush2.bf16.msra.mxu0 0
  %1566 = vmatprep.subr.bf16.mxu0 0
  %1567 = vmatpush2.bf16.msra.mxu0 0
  %1568 = vmatprep.subr.bf16.mxu0 0
  %1569 = vmatpush2.bf16.msra.mxu0 0
  %1570 = vmatprep.subr.bf16.mxu0 0
  %1571 = vmatpush2.bf16.msra.mxu0 0
  %1572 = vmatprep.subr.bf16.mxu0 0
  %1573 = vmatpush2.bf16.msra.mxu0 0
  %1574 = vmatprep.subr.bf16.mxu0 0
  %1575 = vmatpush2.bf16.msra.mxu0 0
  %1576 = vmatprep.subr.bf16.mxu0 0
  %1577 = vmatpush2.bf16.msra.mxu0 0
  %1578 = vmatprep.mubr.bf16.mxu0 0
  %1579 = vmatmul.mubr.bf16.gmra.mxu0 %v1544
  %v1580 = vpop.f32.mrf.mxu0
  %v1581 = vadd.f32 %v1530, %v1580
  %v1582 = vpop.f32.mrf.mxu0
  %v1583 = vpop.f32.mrf.mxu0
  %v1584 = vpop.f32.mrf.mxu0
  %1585 = vdwg.mxu0
  %v1586 = vadd.f32 %v1581, %v1452
  %v1587 = vsel %vm60, %v1586, 0.0
  %1588 = vadd.xlane.f32.xlu0 %v1587
  %v1589 = vpop.xlane.xlu0 %1588
  %v1590 = vmul.f32 %v1589, %v1432
  %v1591 = vsub.f32 %v1586, %v1590
  %v1592 = vmul.f32 %v1591, %v1591
  %v1593 = vsel %vm60, %v1592, 0.0
  %1594 = vadd.xlane.f32.xlu0 %v1593
  %v1595 = vpop.xlane.xlu0 %1594
  %v1596 = vmul.f32 %v1595, %v1432
  %v1597 = vadd.f32 %v1596, 1e-05
  %v1598 = vrsqrt.pop %v1597
  %v1599 = vmul.f32 %v1591, %v1598
  %v1600 = vlaneseq
  %v1601 = vshrl.u32 %v1600, 7
  %v1602 = vsub.s32 7, %v1601
  %v1603 = vrot.slane %v33, %v1602
  %v1604 = vmul.f32 %v1599, %v1603
  %v1605 = vlaneseq
  %v1606 = vshrl.u32 %v1605, 7
  %v1607 = vsub.s32 0, %v1606
  %v1608 = vrot.slane %v34, %v1607
  %v1609 = vadd.f32 %v1604, %v1608
  %s1610 = scalar_lea.vmem %s3, 64
  %v1611 = vld [vmem:[%s1610] sm:$0xff]
  %v1612 = vld [vmem:[%s1610 + $0x8] sm:$0xff]
  %v1613 = vld [vmem:[%s1610 + $0x10] sm:$0xff]
  %v1614 = vld [vmem:[%s1610 + $0x18] sm:$0xff]
  %v1615 = vld [vmem:[%s1610 + $0x20] sm:$0xff]
  %v1616 = vld [vmem:[%s1610 + $0x28] sm:$0xff]
  %v1617 = vld [vmem:[%s1610 + $0x30] sm:$0xff]
  %v1618 = vld [vmem:[%s1610 + $0x38] sm:$0xff]
  %v1619 = vpack.c.bf16 %v1609, %v1609
  %s1620 = scalar_lea.vmem %s4, 4
  %v1621 = vld [vmem:[%s1620] sm:$0xf]
  %v1623 = vlaneseq
  %v1624 = vshrl.u32 %v1623, 7
  %v1625 = vsub.s32 0, %v1624
  %v1626 = vrot.slane %v1621, %v1625
  %v1627 = vlaneseq
  %v1628 = vshrl.u32 %v1627, 7
  %v1629 = vsub.s32 1, %v1628
  %v1630 = vrot.slane %v1621, %v1629
  %v1631 = vlaneseq
  %v1632 = vshrl.u32 %v1631, 7
  %v1633 = vsub.s32 2, %v1632
  %v1634 = vrot.slane %v1621, %v1633
  %v1635 = vlaneseq
  %v1636 = vshrl.u32 %v1635, 7
  %v1637 = vsub.s32 3, %v1636
  %v1638 = vrot.slane %v1621, %v1637
  %v1651 = vunpack.c.l.b16 %v1611
  %v1652 = vunpack.c.h.b16 %v1611
  %v1653 = vunpack.c.l.b16 %v1612
  %v1654 = vunpack.c.h.b16 %v1612
  %v1655 = vunpack.c.l.b16 %v1613
  %v1656 = vunpack.c.h.b16 %v1613
  %v1657 = vunpack.c.l.b16 %v1614
  %v1658 = vunpack.c.h.b16 %v1614
  %v1659 = vunpack.c.l.b16 %v1615
  %v1660 = vunpack.c.h.b16 %v1615
  %v1661 = vunpack.c.l.b16 %v1616
  %v1662 = vunpack.c.h.b16 %v1616
  %v1663 = vunpack.c.l.b16 %v1617
  %v1664 = vunpack.c.h.b16 %v1617
  %v1665 = vunpack.c.l.b16 %v1618
  %v1666 = vunpack.c.h.b16 %v1618
  %v1667 = vpack.c.b16 %v1655, %v1651
  %v1668 = vpack.c.b16 %v1656, %v1652
  %v1669 = vpack.c.b16 %v1657, %v1653
  %v1670 = vpack.c.b16 %v1658, %v1654
  %v1671 = vpack.c.b16 %v1663, %v1659
  %v1672 = vpack.c.b16 %v1664, %v1660
  %v1673 = vpack.c.b16 %v1665, %v1661
  %v1674 = vpack.c.b16 %v1666, %v1662
  %v1684 = vsel %vm60, %v1619, 0
  %1686 = vmatprep.subr.bf16.mxu0 0
  %1687 = vmatpush1.bf16.msra.mxu0 0
  %1688 = vmatprep.subr.bf16.mxu0 0
  %1689 = vmatpush1.bf16.msra.mxu0 0
  %1690 = vmatprep.subr.bf16.mxu0 0
  %1691 = vmatpush1.bf16.msra.mxu0 0
  %1692 = vmatprep.subr.bf16.mxu0 0
  %1693 = vmatpush1.bf16.msra.mxu0 0
  %1694 = vmatprep.subr.bf16.mxu0 0
  %1695 = vmatpush1.bf16.msra.mxu0 0
  %1696 = vmatprep.subr.bf16.mxu0 0
  %1697 = vmatpush1.bf16.msra.mxu0 0
  %1698 = vmatprep.subr.bf16.mxu0 %v1672
  %1699 = vmatpush1.bf16.msra.mxu0 %v1671
  %1700 = vmatprep.subr.bf16.mxu0 %v1668
  %1701 = vmatpush1.bf16.msra.mxu0 %v1667
  %1702 = vmatprep.subr.bf16.mxu0 0
  %1703 = vmatpush2.bf16.msra.mxu0 0
  %1704 = vmatprep.subr.bf16.mxu0 0
  %1705 = vmatpush2.bf16.msra.mxu0 0
  %1706 = vmatprep.subr.bf16.mxu0 0
  %1707 = vmatpush2.bf16.msra.mxu0 0
  %1708 = vmatprep.subr.bf16.mxu0 0
  %1709 = vmatpush2.bf16.msra.mxu0 0
  %1710 = vmatprep.subr.bf16.mxu0 0
  %1711 = vmatpush2.bf16.msra.mxu0 0
  %1712 = vmatprep.subr.bf16.mxu0 0
  %1713 = vmatpush2.bf16.msra.mxu0 0
  %1714 = vmatprep.subr.bf16.mxu0 0
  %1715 = vmatpush2.bf16.msra.mxu0 0
  %1716 = vmatprep.subr.bf16.mxu0 0
  %1717 = vmatpush2.bf16.msra.mxu0 0
  %1718 = vmatprep.mubr.bf16.mxu0 0
  %1719 = vmatmul.mubr.bf16.gmra.mxu0 %v1684
  %v1720 = vpop.f32.mrf.mxu0
  %v1721 = vadd.f32 %v1626, %v1720
  %v1722 = vpop.f32.mrf.mxu0
  %v1723 = vadd.f32 %v1630, %v1722
  %v1724 = vpop.f32.mrf.mxu0
  %v1725 = vpop.f32.mrf.mxu0
  %1726 = vdwg.mxu0
  %1727 = vmatprep.subr.bf16.mxu0 0
  %1728 = vmatpush1.bf16.msra.mxu0 0
  %1729 = vmatprep.subr.bf16.mxu0 0
  %1730 = vmatpush1.bf16.msra.mxu0 0
  %1731 = vmatprep.subr.bf16.mxu0 0
  %1732 = vmatpush1.bf16.msra.mxu0 0
  %1733 = vmatprep.subr.bf16.mxu0 0
  %1734 = vmatpush1.bf16.msra.mxu0 0
  %1735 = vmatprep.subr.bf16.mxu0 0
  %1736 = vmatpush1.bf16.msra.mxu0 0
  %1737 = vmatprep.subr.bf16.mxu0 0
  %1738 = vmatpush1.bf16.msra.mxu0 0
  %1739 = vmatprep.subr.bf16.mxu0 %v1674
  %1740 = vmatpush1.bf16.msra.mxu0 %v1673
  %1741 = vmatprep.subr.bf16.mxu0 %v1670
  %1742 = vmatpush1.bf16.msra.mxu0 %v1669
  %1743 = vmatprep.subr.bf16.mxu0 0
  %1744 = vmatpush2.bf16.msra.mxu0 0
  %1745 = vmatprep.subr.bf16.mxu0 0
  %1746 = vmatpush2.bf16.msra.mxu0 0
  %1747 = vmatprep.subr.bf16.mxu0 0
  %1748 = vmatpush2.bf16.msra.mxu0 0
  %1749 = vmatprep.subr.bf16.mxu0 0
  %1750 = vmatpush2.bf16.msra.mxu0 0
  %1751 = vmatprep.subr.bf16.mxu0 0
  %1752 = vmatpush2.bf16.msra.mxu0 0
  %1753 = vmatprep.subr.bf16.mxu0 0
  %1754 = vmatpush2.bf16.msra.mxu0 0
  %1755 = vmatprep.subr.bf16.mxu0 0
  %1756 = vmatpush2.bf16.msra.mxu0 0
  %1757 = vmatprep.subr.bf16.mxu0 0
  %1758 = vmatpush2.bf16.msra.mxu0 0
  %1759 = vmatprep.mubr.bf16.mxu0 0
  %1760 = vmatmul.mubr.bf16.gmra.mxu0 %v1684
  %v1761 = vpop.f32.mrf.mxu0
  %v1762 = vadd.f32 %v1634, %v1761
  %v1763 = vpop.f32.mrf.mxu0
  %v1764 = vadd.f32 %v1638, %v1763
  %v1765 = vpop.f32.mrf.mxu0
  %v1766 = vpop.f32.mrf.mxu0
  %1767 = vdwg.mxu0
  %v1770 = vcombine.low %v1762, %v1764
  %v1771 = vcombine.high %v1762, %v1764
  %v1773 = vunpack.c.l.s4 1966171168
  %v1774 = vunpack.c.0.s8 %v1773
  %v1775 = vlaneseq
  %v1776 = vshrl.u32 %v1775, 7
  %v1777 = vsub.s32 %v1774, %v1776
  %v1778 = vrot.slane %v1770, %v1777
  %v1780 = vunpack.c.l.s4 1966171168
  %v1781 = vunpack.c.0.s8 %v1780
  %v1782 = vlaneseq
  %v1783 = vshrl.u32 %v1782, 7
  %v1784 = vsub.s32 %v1781, %v1783
  %v1785 = vrot.slane %v1771, %v1784
  %v1786 = vcombine.high %v1778, %v1778
  %v1787 = vcombine.high %v1785, %v1785
  %v1789 = vunpack.c.l.s4 1966171168
  %v1790 = vunpack.c.0.s8 %v1789
  %v1791 = vlaneseq
  %v1792 = vshrl.u32 %v1791, 7
  %v1793 = vsub.s32 %v1790, %v1792
  %v1794 = vrot.slane %v1778, %v1793
  %v1796 = vunpack.c.l.s4 1966171168
  %v1797 = vunpack.c.0.s8 %v1796
  %v1798 = vlaneseq
  %v1799 = vshrl.u32 %v1798, 7
  %v1800 = vsub.s32 %v1797, %v1799
  %v1801 = vrot.slane %v1785, %v1800
  %v1803 = vunpack.c.l.s4 1966171168
  %v1804 = vunpack.c.0.s8 %v1803
  %v1805 = vlaneseq
  %v1806 = vshrl.u32 %v1805, 7
  %v1807 = vsub.s32 %v1804, %v1806
  %v1808 = vrot.slane %v1786, %v1807
  %v1810 = vunpack.c.l.s4 1966171168
  %v1811 = vunpack.c.0.s8 %v1810
  %v1812 = vlaneseq
  %v1813 = vshrl.u32 %v1812, 7
  %v1814 = vsub.s32 %v1811, %v1813
  %v1815 = vrot.slane %v1787, %v1814
  %v1816 = vcombine.high %v1794, %v1794
  %v1817 = vcombine.high %v1801, %v1801
  %v1818 = vcombine.high %v1808, %v1808
  %v1819 = vcombine.high %v1815, %v1815
  %v1820 = vlaneseq
  %v1821 = vshrl.u32 %v1820, 7
  %v1822 = vsub.s32 0, %v1821
  %v1823 = vrot.slane %v1794, %v1822
  %v1824 = vlaneseq
  %v1825 = vshrl.u32 %v1824, 7
  %v1826 = vsub.s32 1, %v1825
  %v1827 = vrot.slane %v1794, %v1826
  %v1828 = vlaneseq
  %v1829 = vshrl.u32 %v1828, 7
  %v1830 = vsub.s32 0, %v1829
  %v1831 = vrot.slane %v1808, %v1830
  %v1832 = vlaneseq
  %v1833 = vshrl.u32 %v1832, 7
  %v1834 = vsub.s32 1, %v1833
  %v1835 = vrot.slane %v1808, %v1834
  %v1836 = vlaneseq
  %v1837 = vshrl.u32 %v1836, 7
  %v1838 = vsub.s32 0, %v1837
  %v1839 = vrot.slane %v1816, %v1838
  %v1840 = vlaneseq
  %v1841 = vshrl.u32 %v1840, 7
  %v1842 = vsub.s32 1, %v1841
  %v1843 = vrot.slane %v1816, %v1842
  %v1844 = vlaneseq
  %v1845 = vshrl.u32 %v1844, 7
  %v1846 = vsub.s32 0, %v1845
  %v1847 = vrot.slane %v1818, %v1846
  %v1848 = vlaneseq
  %v1849 = vshrl.u32 %v1848, 7
  %v1850 = vsub.s32 1, %v1849
  %v1851 = vrot.slane %v1818, %v1850
  %v1852 = vlaneseq
  %v1853 = vshrl.u32 %v1852, 7
  %v1854 = vsub.s32 0, %v1853
  %v1855 = vrot.slane %v1801, %v1854
  %v1856 = vlaneseq
  %v1857 = vshrl.u32 %v1856, 7
  %v1858 = vsub.s32 1, %v1857
  %v1859 = vrot.slane %v1801, %v1858
  %v1860 = vlaneseq
  %v1861 = vshrl.u32 %v1860, 7
  %v1862 = vsub.s32 0, %v1861
  %v1863 = vrot.slane %v1815, %v1862
  %v1864 = vlaneseq
  %v1865 = vshrl.u32 %v1864, 7
  %v1866 = vsub.s32 1, %v1865
  %v1867 = vrot.slane %v1815, %v1866
  %v1868 = vlaneseq
  %v1869 = vshrl.u32 %v1868, 7
  %v1870 = vsub.s32 0, %v1869
  %v1871 = vrot.slane %v1817, %v1870
  %v1872 = vlaneseq
  %v1873 = vshrl.u32 %v1872, 7
  %v1874 = vsub.s32 1, %v1873
  %v1875 = vrot.slane %v1817, %v1874
  %v1876 = vlaneseq
  %v1877 = vshrl.u32 %v1876, 7
  %v1878 = vsub.s32 0, %v1877
  %v1879 = vrot.slane %v1819, %v1878
  %v1880 = vlaneseq
  %v1881 = vshrl.u32 %v1880, 7
  %v1882 = vsub.s32 1, %v1881
  %v1883 = vrot.slane %v1819, %v1882
  %v1900 = vadd.f32 %v1823, %v1721
  %v1901 = vadd.f32 %v1827, %v1723
  %v1902 = vadd.f32 %v1831, %v1721
  %v1903 = vadd.f32 %v1835, %v1723
  %v1904 = vadd.f32 %v1839, %v1721
  %v1905 = vadd.f32 %v1843, %v1723
  %v1906 = vadd.f32 %v1847, %v1721
  %v1907 = vadd.f32 %v1851, %v1723
  %v1908 = vadd.f32 %v1855, %v1721
  %v1909 = vadd.f32 %v1859, %v1723
  %v1910 = vadd.f32 %v1863, %v1721
  %v1911 = vadd.f32 %v1867, %v1723
  %v1912 = vadd.f32 %v1871, %v1721
  %v1913 = vadd.f32 %v1875, %v1723
  %v1914 = vadd.f32 %v1879, %v1721
  %v1915 = vadd.f32 %v1883, %v1723
  %vm1916 = vcmp.ge.f32.partialorder %v1900, 0.0
  %vm1917 = vcmp.ge.f32.partialorder %v1901, 0.0
  %vm1918 = vcmp.ge.f32.partialorder %v1902, 0.0
  %vm1919 = vcmp.ge.f32.partialorder %v1903, 0.0
  %vm1920 = vcmp.ge.f32.partialorder %v1904, 0.0
  %vm1921 = vcmp.ge.f32.partialorder %v1905, 0.0
  %vm1922 = vcmp.ge.f32.partialorder %v1906, 0.0
  %vm1923 = vcmp.ge.f32.partialorder %v1907, 0.0
  %vm1924 = vcmp.ge.f32.partialorder %v1908, 0.0
  %vm1925 = vcmp.ge.f32.partialorder %v1909, 0.0
  %vm1926 = vcmp.ge.f32.partialorder %v1910, 0.0
  %vm1927 = vcmp.ge.f32.partialorder %v1911, 0.0
  %vm1928 = vcmp.ge.f32.partialorder %v1912, 0.0
  %vm1929 = vcmp.ge.f32.partialorder %v1913, 0.0
  %vm1930 = vcmp.ge.f32.partialorder %v1914, 0.0
  %vm1931 = vcmp.ge.f32.partialorder %v1915, 0.0
  %v1932 = vmul.f32 %v1900, 0.2
  %v1933 = vmul.f32 %v1901, 0.2
  %v1934 = vmul.f32 %v1902, 0.2
  %v1935 = vmul.f32 %v1903, 0.2
  %v1936 = vmul.f32 %v1904, 0.2
  %v1937 = vmul.f32 %v1905, 0.2
  %v1938 = vmul.f32 %v1906, 0.2
  %v1939 = vmul.f32 %v1907, 0.2
  %v1940 = vmul.f32 %v1908, 0.2
  %v1941 = vmul.f32 %v1909, 0.2
  %v1942 = vmul.f32 %v1910, 0.2
  %v1943 = vmul.f32 %v1911, 0.2
  %v1944 = vmul.f32 %v1912, 0.2
  %v1945 = vmul.f32 %v1913, 0.2
  %v1946 = vmul.f32 %v1914, 0.2
  %v1947 = vmul.f32 %v1915, 0.2
  %v1948 = vsel %vm1916, %v1900, %v1932
  %v1949 = vsel %vm1917, %v1901, %v1933
  %v1950 = vsel %vm1918, %v1902, %v1934
  %v1951 = vsel %vm1919, %v1903, %v1935
  %v1952 = vsel %vm1920, %v1904, %v1936
  %v1953 = vsel %vm1921, %v1905, %v1937
  %v1954 = vsel %vm1922, %v1906, %v1938
  %v1955 = vsel %vm1923, %v1907, %v1939
  %v1956 = vsel %vm1924, %v1908, %v1940
  %v1957 = vsel %vm1925, %v1909, %v1941
  %v1958 = vsel %vm1926, %v1910, %v1942
  %v1959 = vsel %vm1927, %v1911, %v1943
  %v1960 = vsel %vm1928, %v1912, %v1944
  %v1961 = vsel %vm1929, %v1913, %v1945
  %v1962 = vsel %vm1930, %v1914, %v1946
  %v1963 = vsel %vm1931, %v1915, %v1947
  %s1964 = scalar_lea.vmem %s5, 128
  %v1965 = vld [vmem:[%s1964] sm:$0xf]
  %v1966 = vld [vmem:[%s1964 + $0x4] sm:$0xf]
  %v1967 = vld [vmem:[%s1964 + $0x8] sm:$0xf]
  %v1968 = vld [vmem:[%s1964 + $0xc] sm:$0xf]
  %v1969 = vld [vmem:[%s1964 + $0x10] sm:$0xf]
  %v1970 = vld [vmem:[%s1964 + $0x14] sm:$0xf]
  %v1971 = vld [vmem:[%s1964 + $0x18] sm:$0xf]
  %v1972 = vld [vmem:[%s1964 + $0x1c] sm:$0xf]
  %v1973 = vld [vmem:[%s1964 + $0x20] sm:$0xf]
  %v1974 = vld [vmem:[%s1964 + $0x24] sm:$0xf]
  %v1975 = vld [vmem:[%s1964 + $0x28] sm:$0xf]
  %v1976 = vld [vmem:[%s1964 + $0x2c] sm:$0xf]
  %v1977 = vld [vmem:[%s1964 + $0x30] sm:$0xf]
  %v1978 = vld [vmem:[%s1964 + $0x34] sm:$0xf]
  %v1979 = vld [vmem:[%s1964 + $0x38] sm:$0xf]
  %v1980 = vld [vmem:[%s1964 + $0x3c] sm:$0xf]
  %v1981 = vld [vmem:[%s1964 + $0x40] sm:$0xf]
  %v1982 = vld [vmem:[%s1964 + $0x44] sm:$0xf]
  %v1983 = vld [vmem:[%s1964 + $0x48] sm:$0xf]
  %v1984 = vld [vmem:[%s1964 + $0x4c] sm:$0xf]
  %v1985 = vld [vmem:[%s1964 + $0x50] sm:$0xf]
  %v1986 = vld [vmem:[%s1964 + $0x54] sm:$0xf]
  %v1987 = vld [vmem:[%s1964 + $0x58] sm:$0xf]
  %v1988 = vld [vmem:[%s1964 + $0x5c] sm:$0xf]
  %v1989 = vld [vmem:[%s1964 + $0x60] sm:$0xf]
  %v1990 = vld [vmem:[%s1964 + $0x64] sm:$0xf]
  %v1991 = vld [vmem:[%s1964 + $0x68] sm:$0xf]
  %v1992 = vld [vmem:[%s1964 + $0x6c] sm:$0xf]
  %v1993 = vld [vmem:[%s1964 + $0x70] sm:$0xf]
  %v1994 = vld [vmem:[%s1964 + $0x74] sm:$0xf]
  %v1995 = vld [vmem:[%s1964 + $0x78] sm:$0xf]
  %v1996 = vld [vmem:[%s1964 + $0x7c] sm:$0xf]
  %v1997 = vpack.c.bf16 %v1950, %v1948
  %v1998 = vpack.c.bf16 %v1951, %v1949
  %v1999 = vpack.c.bf16 %v1954, %v1952
  %v2000 = vpack.c.bf16 %v1955, %v1953
  %v2001 = vpack.c.bf16 %v1958, %v1956
  %v2002 = vpack.c.bf16 %v1959, %v1957
  %v2003 = vpack.c.bf16 %v1962, %v1960
  %v2004 = vpack.c.bf16 %v1963, %v1961
  %v2037 = vunpack.c.l.b16 %v1965
  %v2038 = vunpack.c.l.b16 %v1966
  %v2039 = vunpack.c.l.b16 %v1967
  %v2040 = vunpack.c.l.b16 %v1968
  %v2041 = vunpack.c.l.b16 %v1969
  %v2042 = vunpack.c.l.b16 %v1970
  %v2043 = vunpack.c.l.b16 %v1971
  %v2044 = vunpack.c.l.b16 %v1972
  %v2045 = vunpack.c.l.b16 %v1973
  %v2046 = vunpack.c.l.b16 %v1974
  %v2047 = vunpack.c.l.b16 %v1975
  %v2048 = vunpack.c.l.b16 %v1976
  %v2049 = vunpack.c.l.b16 %v1977
  %v2050 = vunpack.c.l.b16 %v1978
  %v2051 = vunpack.c.l.b16 %v1979
  %v2052 = vunpack.c.l.b16 %v1980
  %v2053 = vunpack.c.l.b16 %v1981
  %v2054 = vunpack.c.l.b16 %v1982
  %v2055 = vunpack.c.l.b16 %v1983
  %v2056 = vunpack.c.l.b16 %v1984
  %v2057 = vunpack.c.l.b16 %v1985
  %v2058 = vunpack.c.l.b16 %v1986
  %v2059 = vunpack.c.l.b16 %v1987
  %v2060 = vunpack.c.l.b16 %v1988
  %v2061 = vunpack.c.l.b16 %v1989
  %v2062 = vunpack.c.l.b16 %v1990
  %v2063 = vunpack.c.l.b16 %v1991
  %v2064 = vunpack.c.l.b16 %v1992
  %v2065 = vunpack.c.l.b16 %v1993
  %v2066 = vunpack.c.l.b16 %v1994
  %v2067 = vunpack.c.l.b16 %v1995
  %v2068 = vunpack.c.l.b16 %v1996
  %v2069 = vpack.c.b16 %v2038, %v2037
  %v2070 = vpack.c.b16 %v2040, %v2039
  %v2071 = vpack.c.b16 %v2042, %v2041
  %v2072 = vpack.c.b16 %v2044, %v2043
  %v2073 = vpack.c.b16 %v2046, %v2045
  %v2074 = vpack.c.b16 %v2048, %v2047
  %v2075 = vpack.c.b16 %v2050, %v2049
  %v2076 = vpack.c.b16 %v2052, %v2051
  %v2077 = vpack.c.b16 %v2054, %v2053
  %v2078 = vpack.c.b16 %v2056, %v2055
  %v2079 = vpack.c.b16 %v2058, %v2057
  %v2080 = vpack.c.b16 %v2060, %v2059
  %v2081 = vpack.c.b16 %v2062, %v2061
  %v2082 = vpack.c.b16 %v2064, %v2063
  %v2083 = vpack.c.b16 %v2066, %v2065
  %v2084 = vpack.c.b16 %v2068, %v2067
  %2101 = vmatprep.subr.bf16.mxu0 0
  %2102 = vmatpush1.bf16.msra.mxu0 %v2076
  %2103 = vmatprep.subr.bf16.mxu0 0
  %2104 = vmatpush1.bf16.msra.mxu0 %v2075
  %2105 = vmatprep.subr.bf16.mxu0 0
  %2106 = vmatpush1.bf16.msra.mxu0 %v2074
  %2107 = vmatprep.subr.bf16.mxu0 0
  %2108 = vmatpush1.bf16.msra.mxu0 %v2073
  %2109 = vmatprep.subr.bf16.mxu0 0
  %2110 = vmatpush1.bf16.msra.mxu0 %v2072
  %2111 = vmatprep.subr.bf16.mxu0 0
  %2112 = vmatpush1.bf16.msra.mxu0 %v2071
  %2113 = vmatprep.subr.bf16.mxu0 0
  %2114 = vmatpush1.bf16.msra.mxu0 %v2070
  %2115 = vmatprep.subr.bf16.mxu0 0
  %2116 = vmatpush1.bf16.msra.mxu0 %v2069
  %2117 = vmatprep.subr.bf16.mxu0 0
  %2118 = vmatpush2.bf16.msra.mxu0 %v2084
  %2119 = vmatprep.subr.bf16.mxu0 0
  %2120 = vmatpush2.bf16.msra.mxu0 %v2083
  %2121 = vmatprep.subr.bf16.mxu0 0
  %2122 = vmatpush2.bf16.msra.mxu0 %v2082
  %2123 = vmatprep.subr.bf16.mxu0 0
  %2124 = vmatpush2.bf16.msra.mxu0 %v2081
  %2125 = vmatprep.subr.bf16.mxu0 0
  %2126 = vmatpush2.bf16.msra.mxu0 %v2080
  %2127 = vmatprep.subr.bf16.mxu0 0
  %2128 = vmatpush2.bf16.msra.mxu0 %v2079
  %2129 = vmatprep.subr.bf16.mxu0 0
  %2130 = vmatpush2.bf16.msra.mxu0 %v2078
  %2131 = vmatprep.subr.bf16.mxu0 0
  %2132 = vmatpush2.bf16.msra.mxu0 %v2077
  %2133 = vmatprep.mubr.bf16.mxu0 %v1998
  %2134 = vmatmul.mubr.bf16.gmra.mxu0 %v1997
  %v2135 = vpop.f32.mrf.mxu0
  %v2136 = vadd.f32 0.0, %v2135
  %v2137 = vpop.f32.mrf.mxu0
  %v2138 = vpop.f32.mrf.mxu0
  %v2139 = vadd.f32 0.0, %v2138
  %v2140 = vpop.f32.mrf.mxu0
  %2141 = vmatprep.mubr.bf16.mxu0 %v2000
  %2142 = vmatmul.mubr.bf16.gmra.mxu0 %v1999
  %v2143 = vpop.f32.mrf.mxu0
  %v2144 = vadd.f32 0.0, %v2143
  %v2145 = vpop.f32.mrf.mxu0
  %v2146 = vpop.f32.mrf.mxu0
  %v2147 = vadd.f32 0.0, %v2146
  %v2148 = vpop.f32.mrf.mxu0
  %2149 = vmatprep.mubr.bf16.mxu0 %v2002
  %2150 = vmatmul.mubr.bf16.gmra.mxu0 %v2001
  %v2151 = vpop.f32.mrf.mxu0
  %v2152 = vadd.f32 0.0, %v2151
  %v2153 = vpop.f32.mrf.mxu0
  %v2154 = vpop.f32.mrf.mxu0
  %v2155 = vadd.f32 0.0, %v2154
  %v2156 = vpop.f32.mrf.mxu0
  %2157 = vmatprep.mubr.bf16.mxu0 %v2004
  %2158 = vmatmul.mubr.bf16.gmra.mxu0 %v2003
  %v2159 = vpop.f32.mrf.mxu0
  %v2160 = vadd.f32 0.0, %v2159
  %v2161 = vpop.f32.mrf.mxu0
  %v2162 = vpop.f32.mrf.mxu0
  %v2163 = vadd.f32 0.0, %v2162
  %v2164 = vpop.f32.mrf.mxu0
  %2165 = vdwg.mxu0
  %v2166 = vadd.f32 %v2136, %v183
  %v2167 = vadd.f32 %v2139, %v188
  %v2168 = vadd.f32 %v2144, %v193
  %v2169 = vadd.f32 %v2147, %v198
  %v2170 = vadd.f32 %v2152, %v203
  %v2171 = vadd.f32 %v2155, %v208
  %v2172 = vadd.f32 %v2160, %v213
  %v2173 = vadd.f32 %v2163, %v218
  %v2174 = vsel %vm781, %v2166, -inf
  %v2175 = vrot.slane %v2174, 4
  %v2176 = vmax.f32 %v2174, %v2175
  %v2177 = vrot.slane %v2176, 2
  %v2178 = vmax.f32 %v2176, %v2177
  %v2179 = vrot.slane %v2178, 1
  %v2180 = vmax.f32 %v2178, %v2179
  %v2181 = vsel %vm781, %v2167, -inf
  %v2182 = vrot.slane %v2181, 4
  %v2183 = vmax.f32 %v2181, %v2182
  %v2184 = vrot.slane %v2183, 2
  %v2185 = vmax.f32 %v2183, %v2184
  %v2186 = vrot.slane %v2185, 1
  %v2187 = vmax.f32 %v2185, %v2186
  %v2188 = vsel %vm781, %v2168, -inf
  %v2189 = vrot.slane %v2188, 4
  %v2190 = vmax.f32 %v2188, %v2189
  %v2191 = vrot.slane %v2190, 2
  %v2192 = vmax.f32 %v2190, %v2191
  %v2193 = vrot.slane %v2192, 1
  %v2194 = vmax.f32 %v2192, %v2193
  %v2195 = vsel %vm781, %v2169, -inf
  %v2196 = vrot.slane %v2195, 4
  %v2197 = vmax.f32 %v2195, %v2196
  %v2198 = vrot.slane %v2197, 2
  %v2199 = vmax.f32 %v2197, %v2198
  %v2200 = vrot.slane %v2199, 1
  %v2201 = vmax.f32 %v2199, %v2200
  %v2202 = vsel %vm781, %v2170, -inf
  %v2203 = vrot.slane %v2202, 4
  %v2204 = vmax.f32 %v2202, %v2203
  %v2205 = vrot.slane %v2204, 2
  %v2206 = vmax.f32 %v2204, %v2205
  %v2207 = vrot.slane %v2206, 1
  %v2208 = vmax.f32 %v2206, %v2207
  %v2209 = vsel %vm781, %v2171, -inf
  %v2210 = vrot.slane %v2209, 4
  %v2211 = vmax.f32 %v2209, %v2210
  %v2212 = vrot.slane %v2211, 2
  %v2213 = vmax.f32 %v2211, %v2212
  %v2214 = vrot.slane %v2213, 1
  %v2215 = vmax.f32 %v2213, %v2214
  %v2216 = vsel %vm781, %v2172, -inf
  %v2217 = vrot.slane %v2216, 4
  %v2218 = vmax.f32 %v2216, %v2217
  %v2219 = vrot.slane %v2218, 2
  %v2220 = vmax.f32 %v2218, %v2219
  %v2221 = vrot.slane %v2220, 1
  %v2222 = vmax.f32 %v2220, %v2221
  %v2223 = vsel %vm781, %v2173, -inf
  %v2224 = vrot.slane %v2223, 4
  %v2225 = vmax.f32 %v2223, %v2224
  %v2226 = vrot.slane %v2225, 2
  %v2227 = vmax.f32 %v2225, %v2226
  %v2228 = vrot.slane %v2227, 1
  %v2229 = vmax.f32 %v2227, %v2228
  %v2230 = vsub.f32 %v2166, %v2180
  %v2231 = vsub.f32 %v2167, %v2187
  %v2232 = vsub.f32 %v2168, %v2194
  %v2233 = vsub.f32 %v2169, %v2201
  %v2234 = vsub.f32 %v2170, %v2208
  %v2235 = vsub.f32 %v2171, %v2215
  %v2236 = vsub.f32 %v2172, %v2222
  %v2237 = vsub.f32 %v2173, %v2229
  %v2238 = vmul.f32 %v2230, 1.442695
  %v2239 = vpow.pop %v2238
  %v2240 = vmul.f32 %v2231, 1.442695
  %v2241 = vpow.pop %v2240
  %v2242 = vmul.f32 %v2232, 1.442695
  %v2243 = vpow.pop %v2242
  %v2244 = vmul.f32 %v2233, 1.442695
  %v2245 = vpow.pop %v2244
  %v2246 = vmul.f32 %v2234, 1.442695
  %v2247 = vpow.pop %v2246
  %v2248 = vmul.f32 %v2235, 1.442695
  %v2249 = vpow.pop %v2248
  %v2250 = vmul.f32 %v2236, 1.442695
  %v2251 = vpow.pop %v2250
  %v2252 = vmul.f32 %v2237, 1.442695
  %v2253 = vpow.pop %v2252
  %v2254 = vsel %vm781, %v2239, 0.0
  %v2255 = vrot.slane %v2254, 4
  %v2256 = vadd.f32 %v2254, %v2255
  %v2257 = vrot.slane %v2256, 2
  %v2258 = vadd.f32 %v2256, %v2257
  %v2259 = vrot.slane %v2258, 1
  %v2260 = vadd.f32 %v2258, %v2259
  %v2261 = vsel %vm781, %v2241, 0.0
  %v2262 = vrot.slane %v2261, 4
  %v2263 = vadd.f32 %v2261, %v2262
  %v2264 = vrot.slane %v2263, 2
  %v2265 = vadd.f32 %v2263, %v2264
  %v2266 = vrot.slane %v2265, 1
  %v2267 = vadd.f32 %v2265, %v2266
  %v2268 = vsel %vm781, %v2243, 0.0
  %v2269 = vrot.slane %v2268, 4
  %v2270 = vadd.f32 %v2268, %v2269
  %v2271 = vrot.slane %v2270, 2
  %v2272 = vadd.f32 %v2270, %v2271
  %v2273 = vrot.slane %v2272, 1
  %v2274 = vadd.f32 %v2272, %v2273
  %v2275 = vsel %vm781, %v2245, 0.0
  %v2276 = vrot.slane %v2275, 4
  %v2277 = vadd.f32 %v2275, %v2276
  %v2278 = vrot.slane %v2277, 2
  %v2279 = vadd.f32 %v2277, %v2278
  %v2280 = vrot.slane %v2279, 1
  %v2281 = vadd.f32 %v2279, %v2280
  %v2282 = vsel %vm781, %v2247, 0.0
  %v2283 = vrot.slane %v2282, 4
  %v2284 = vadd.f32 %v2282, %v2283
  %v2285 = vrot.slane %v2284, 2
  %v2286 = vadd.f32 %v2284, %v2285
  %v2287 = vrot.slane %v2286, 1
  %v2288 = vadd.f32 %v2286, %v2287
  %v2289 = vsel %vm781, %v2249, 0.0
  %v2290 = vrot.slane %v2289, 4
  %v2291 = vadd.f32 %v2289, %v2290
  %v2292 = vrot.slane %v2291, 2
  %v2293 = vadd.f32 %v2291, %v2292
  %v2294 = vrot.slane %v2293, 1
  %v2295 = vadd.f32 %v2293, %v2294
  %v2296 = vsel %vm781, %v2251, 0.0
  %v2297 = vrot.slane %v2296, 4
  %v2298 = vadd.f32 %v2296, %v2297
  %v2299 = vrot.slane %v2298, 2
  %v2300 = vadd.f32 %v2298, %v2299
  %v2301 = vrot.slane %v2300, 1
  %v2302 = vadd.f32 %v2300, %v2301
  %v2303 = vsel %vm781, %v2253, 0.0
  %v2304 = vrot.slane %v2303, 4
  %v2305 = vadd.f32 %v2303, %v2304
  %v2306 = vrot.slane %v2305, 2
  %v2307 = vadd.f32 %v2305, %v2306
  %v2308 = vrot.slane %v2307, 1
  %v2309 = vadd.f32 %v2307, %v2308
  %v2310 = vrcp.pop %v2260
  %v2311 = vrcp.pop %v2267
  %v2312 = vrcp.pop %v2274
  %v2313 = vrcp.pop %v2281
  %v2314 = vrcp.pop %v2288
  %v2315 = vrcp.pop %v2295
  %v2316 = vrcp.pop %v2302
  %v2317 = vrcp.pop %v2309
  %v2318 = vmul.f32 %v2239, %v2310
  %v2319 = vmul.f32 %v2241, %v2311
  %v2320 = vmul.f32 %v2243, %v2312
  %v2321 = vmul.f32 %v2245, %v2313
  %v2322 = vmul.f32 %v2247, %v2314
  %v2323 = vmul.f32 %v2249, %v2315
  %v2324 = vmul.f32 %v2251, %v2316
  %v2325 = vmul.f32 %v2253, %v2317
  %v2327 = vsel %vm781, %v2318, 0
  %v2330 = vsel %vm781, %v2319, 0
  %v2333 = vsel %vm781, %v2320, 0
  %v2336 = vsel %vm781, %v2321, 0
  %v2339 = vsel %vm781, %v2322, 0
  %v2342 = vsel %vm781, %v2323, 0
  %v2345 = vsel %vm781, %v2324, 0
  %v2348 = vsel %vm781, %v2325, 0
  %2350 = vmatprep.subr.mxu0 0.0
  %2351 = vmatpush1.msra.mxu0 0.0
  %2352 = vmatprep.subr.mxu0 0.0
  %2353 = vmatpush1.msra.mxu0 0.0
  %2354 = vmatprep.subr.mxu0 0.0
  %2355 = vmatpush1.msra.mxu0 0.0
  %2356 = vmatprep.subr.mxu0 0.0
  %2357 = vmatpush1.msra.mxu0 0.0
  %2358 = vmatprep.subr.mxu0 0.0
  %2359 = vmatpush1.msra.mxu0 0.0
  %2360 = vmatprep.subr.mxu0 0.0
  %2361 = vmatpush1.msra.mxu0 0.0
  %2362 = vmatprep.subr.mxu0 0.0
  %2363 = vmatpush1.msra.mxu0 0.0
  %2364 = vmatprep.subr.mxu0 0.0
  %2365 = vmatpush1.msra.mxu0 0.0
  %2366 = vmatprep.subr.mxu0 0.0
  %2367 = vmatpush1.msra.mxu0 0.0
  %2368 = vmatprep.subr.mxu0 0.0
  %2369 = vmatpush1.msra.mxu0 0.0
  %2370 = vmatprep.subr.mxu0 0.0
  %2371 = vmatpush1.msra.mxu0 0.0
  %2372 = vmatprep.subr.mxu0 0.0
  %2373 = vmatpush1.msra.mxu0 0.0
  %2374 = vmatprep.subr.mxu0 0.0
  %2375 = vmatpush1.msra.mxu0 0.0
  %2376 = vmatprep.subr.mxu0 0.0
  %2377 = vmatpush1.msra.mxu0 0.0
  %2378 = vmatprep.subr.mxu0 0.0
  %2379 = vmatpush1.msra.mxu0 0.0
  %2380 = vmatprep.subr.mxu0 %v37
  %2381 = vmatpush1.msra.mxu0 %v36
  %2382 = vmatprep.subr.mxu0 0.0
  %2383 = vmatpush2.msra.mxu0 0.0
  %2384 = vmatprep.subr.mxu0 0.0
  %2385 = vmatpush2.msra.mxu0 0.0
  %2386 = vmatprep.subr.mxu0 0.0
  %2387 = vmatpush2.msra.mxu0 0.0
  %2388 = vmatprep.subr.mxu0 0.0
  %2389 = vmatpush2.msra.mxu0 0.0
  %2390 = vmatprep.subr.mxu0 0.0
  %2391 = vmatpush2.msra.mxu0 0.0
  %2392 = vmatprep.subr.mxu0 0.0
  %2393 = vmatpush2.msra.mxu0 0.0
  %2394 = vmatprep.subr.mxu0 0.0
  %2395 = vmatpush2.msra.mxu0 0.0
  %2396 = vmatprep.subr.mxu0 0.0
  %2397 = vmatpush2.msra.mxu0 0.0
  %2398 = vmatprep.subr.mxu0 0.0
  %2399 = vmatpush2.msra.mxu0 0.0
  %2400 = vmatprep.subr.mxu0 0.0
  %2401 = vmatpush2.msra.mxu0 0.0
  %2402 = vmatprep.subr.mxu0 0.0
  %2403 = vmatpush2.msra.mxu0 0.0
  %2404 = vmatprep.subr.mxu0 0.0
  %2405 = vmatpush2.msra.mxu0 0.0
  %2406 = vmatprep.subr.mxu0 0.0
  %2407 = vmatpush2.msra.mxu0 0.0
  %2408 = vmatprep.subr.mxu0 0.0
  %2409 = vmatpush2.msra.mxu0 0.0
  %2410 = vmatprep.subr.mxu0 0.0
  %2411 = vmatpush2.msra.mxu0 0.0
  %2412 = vmatprep.subr.mxu0 0.0
  %2413 = vmatpush2.msra.mxu0 0.0
  %2414 = vmatprep.mubr.f32.mxu0 0.0
  %2415 = vmatmul.mubr.f32.gmra.mxu0 %v2327
  %v2416 = vpop.f32.mrf.mxu0
  %v2417 = vadd.f32 0.0, %v2416
  %v2418 = vpop.f32.mrf.mxu0
  %v2419 = vadd.f32 0.0, %v2418
  %2420 = vmatprep.mubr.f32.mxu0 0.0
  %2421 = vmatmul.mubr.f32.gmra.mxu0 %v2330
  %v2422 = vpop.f32.mrf.mxu0
  %v2423 = vadd.f32 0.0, %v2422
  %v2424 = vpop.f32.mrf.mxu0
  %v2425 = vadd.f32 0.0, %v2424
  %2426 = vmatprep.mubr.f32.mxu0 0.0
  %2427 = vmatmul.mubr.f32.gmra.mxu0 %v2333
  %v2428 = vpop.f32.mrf.mxu0
  %v2429 = vadd.f32 0.0, %v2428
  %v2430 = vpop.f32.mrf.mxu0
  %v2431 = vadd.f32 0.0, %v2430
  %2432 = vmatprep.mubr.f32.mxu0 0.0
  %2433 = vmatmul.mubr.f32.gmra.mxu0 %v2336
  %v2434 = vpop.f32.mrf.mxu0
  %v2435 = vadd.f32 0.0, %v2434
  %v2436 = vpop.f32.mrf.mxu0
  %v2437 = vadd.f32 0.0, %v2436
  %2438 = vmatprep.mubr.f32.mxu0 0.0
  %2439 = vmatmul.mubr.f32.gmra.mxu0 %v2339
  %v2440 = vpop.f32.mrf.mxu0
  %v2441 = vadd.f32 0.0, %v2440
  %v2442 = vpop.f32.mrf.mxu0
  %v2443 = vadd.f32 0.0, %v2442
  %2444 = vmatprep.mubr.f32.mxu0 0.0
  %2445 = vmatmul.mubr.f32.gmra.mxu0 %v2342
  %v2446 = vpop.f32.mrf.mxu0
  %v2447 = vadd.f32 0.0, %v2446
  %v2448 = vpop.f32.mrf.mxu0
  %v2449 = vadd.f32 0.0, %v2448
  %2450 = vmatprep.mubr.f32.mxu0 0.0
  %2451 = vmatmul.mubr.f32.gmra.mxu0 %v2345
  %v2452 = vpop.f32.mrf.mxu0
  %v2453 = vadd.f32 0.0, %v2452
  %v2454 = vpop.f32.mrf.mxu0
  %v2455 = vadd.f32 0.0, %v2454
  %2456 = vmatprep.mubr.f32.mxu0 0.0
  %2457 = vmatmul.mubr.f32.gmra.mxu0 %v2348
  %v2458 = vpop.f32.mrf.mxu0
  %v2459 = vadd.f32 0.0, %v2458
  %v2460 = vpop.f32.mrf.mxu0
  %v2461 = vadd.f32 0.0, %v2460
  %2462 = vdwg.mxu0
  %v2463 = vmul.f32 %v2417, %v1721
  %v2464 = vmul.f32 %v2419, %v1723
  %v2465 = vmul.f32 %v2423, %v1721
  %v2466 = vmul.f32 %v2425, %v1723
  %v2467 = vmul.f32 %v2429, %v1721
  %v2468 = vmul.f32 %v2431, %v1723
  %v2469 = vmul.f32 %v2435, %v1721
  %v2470 = vmul.f32 %v2437, %v1723
  %v2471 = vmul.f32 %v2441, %v1721
  %v2472 = vmul.f32 %v2443, %v1723
  %v2473 = vmul.f32 %v2447, %v1721
  %v2474 = vmul.f32 %v2449, %v1723
  %v2475 = vmul.f32 %v2453, %v1721
  %v2476 = vmul.f32 %v2455, %v1723
  %v2477 = vmul.f32 %v2459, %v1721
  %v2478 = vmul.f32 %v2461, %v1723
  %v2479 = vrot.slane %v2463, 4
  %v2480 = vadd.f32 %v2463, %v2479
  %v2481 = vrot.slane %v2480, 2
  %v2482 = vadd.f32 %v2480, %v2481
  %v2483 = vrot.slane %v2482, 1
  %v2484 = vadd.f32 %v2482, %v2483
  %v2485 = vrot.slane %v2464, 4
  %v2486 = vadd.f32 %v2464, %v2485
  %v2487 = vrot.slane %v2486, 2
  %v2488 = vadd.f32 %v2486, %v2487
  %v2489 = vrot.slane %v2488, 1
  %v2490 = vadd.f32 %v2488, %v2489
  %v2491 = vrot.slane %v2465, 4
  %v2492 = vadd.f32 %v2465, %v2491
  %v2493 = vrot.slane %v2492, 2
  %v2494 = vadd.f32 %v2492, %v2493
  %v2495 = vrot.slane %v2494, 1
  %v2496 = vadd.f32 %v2494, %v2495
  %v2497 = vrot.slane %v2466, 4
  %v2498 = vadd.f32 %v2466, %v2497
  %v2499 = vrot.slane %v2498, 2
  %v2500 = vadd.f32 %v2498, %v2499
  %v2501 = vrot.slane %v2500, 1
  %v2502 = vadd.f32 %v2500, %v2501
  %v2503 = vrot.slane %v2467, 4
  %v2504 = vadd.f32 %v2467, %v2503
  %v2505 = vrot.slane %v2504, 2
  %v2506 = vadd.f32 %v2504, %v2505
  %v2507 = vrot.slane %v2506, 1
  %v2508 = vadd.f32 %v2506, %v2507
  %v2509 = vrot.slane %v2468, 4
  %v2510 = vadd.f32 %v2468, %v2509
  %v2511 = vrot.slane %v2510, 2
  %v2512 = vadd.f32 %v2510, %v2511
  %v2513 = vrot.slane %v2512, 1
  %v2514 = vadd.f32 %v2512, %v2513
  %v2515 = vrot.slane %v2469, 4
  %v2516 = vadd.f32 %v2469, %v2515
  %v2517 = vrot.slane %v2516, 2
  %v2518 = vadd.f32 %v2516, %v2517
  %v2519 = vrot.slane %v2518, 1
  %v2520 = vadd.f32 %v2518, %v2519
  %v2521 = vrot.slane %v2470, 4
  %v2522 = vadd.f32 %v2470, %v2521
  %v2523 = vrot.slane %v2522, 2
  %v2524 = vadd.f32 %v2522, %v2523
  %v2525 = vrot.slane %v2524, 1
  %v2526 = vadd.f32 %v2524, %v2525
  %v2527 = vrot.slane %v2471, 4
  %v2528 = vadd.f32 %v2471, %v2527
  %v2529 = vrot.slane %v2528, 2
  %v2530 = vadd.f32 %v2528, %v2529
  %v2531 = vrot.slane %v2530, 1
  %v2532 = vadd.f32 %v2530, %v2531
  %v2533 = vrot.slane %v2472, 4
  %v2534 = vadd.f32 %v2472, %v2533
  %v2535 = vrot.slane %v2534, 2
  %v2536 = vadd.f32 %v2534, %v2535
  %v2537 = vrot.slane %v2536, 1
  %v2538 = vadd.f32 %v2536, %v2537
  %v2539 = vrot.slane %v2473, 4
  %v2540 = vadd.f32 %v2473, %v2539
  %v2541 = vrot.slane %v2540, 2
  %v2542 = vadd.f32 %v2540, %v2541
  %v2543 = vrot.slane %v2542, 1
  %v2544 = vadd.f32 %v2542, %v2543
  %v2545 = vrot.slane %v2474, 4
  %v2546 = vadd.f32 %v2474, %v2545
  %v2547 = vrot.slane %v2546, 2
  %v2548 = vadd.f32 %v2546, %v2547
  %v2549 = vrot.slane %v2548, 1
  %v2550 = vadd.f32 %v2548, %v2549
  %v2551 = vrot.slane %v2475, 4
  %v2552 = vadd.f32 %v2475, %v2551
  %v2553 = vrot.slane %v2552, 2
  %v2554 = vadd.f32 %v2552, %v2553
  %v2555 = vrot.slane %v2554, 1
  %v2556 = vadd.f32 %v2554, %v2555
  %v2557 = vrot.slane %v2476, 4
  %v2558 = vadd.f32 %v2476, %v2557
  %v2559 = vrot.slane %v2558, 2
  %v2560 = vadd.f32 %v2558, %v2559
  %v2561 = vrot.slane %v2560, 1
  %v2562 = vadd.f32 %v2560, %v2561
  %v2563 = vrot.slane %v2477, 4
  %v2564 = vadd.f32 %v2477, %v2563
  %v2565 = vrot.slane %v2564, 2
  %v2566 = vadd.f32 %v2564, %v2565
  %v2567 = vrot.slane %v2566, 1
  %v2568 = vadd.f32 %v2566, %v2567
  %v2569 = vrot.slane %v2478, 4
  %v2570 = vadd.f32 %v2478, %v2569
  %v2571 = vrot.slane %v2570, 2
  %v2572 = vadd.f32 %v2570, %v2571
  %v2573 = vrot.slane %v2572, 1
  %v2574 = vadd.f32 %v2572, %v2573
  %s2575 = scalar_lea.vmem %s6, 128
  %v2576 = vld [vmem:[%s2575] sm:$0xf]
  %v2577 = vld [vmem:[%s2575 + $0x4] sm:$0xf]
  %v2578 = vld [vmem:[%s2575 + $0x8] sm:$0xf]
  %v2579 = vld [vmem:[%s2575 + $0xc] sm:$0xf]
  %v2580 = vld [vmem:[%s2575 + $0x10] sm:$0xf]
  %v2581 = vld [vmem:[%s2575 + $0x14] sm:$0xf]
  %v2582 = vld [vmem:[%s2575 + $0x18] sm:$0xf]
  %v2583 = vld [vmem:[%s2575 + $0x1c] sm:$0xf]
  %v2584 = vld [vmem:[%s2575 + $0x20] sm:$0xf]
  %v2585 = vld [vmem:[%s2575 + $0x24] sm:$0xf]
  %v2586 = vld [vmem:[%s2575 + $0x28] sm:$0xf]
  %v2587 = vld [vmem:[%s2575 + $0x2c] sm:$0xf]
  %v2588 = vld [vmem:[%s2575 + $0x30] sm:$0xf]
  %v2589 = vld [vmem:[%s2575 + $0x34] sm:$0xf]
  %v2590 = vld [vmem:[%s2575 + $0x38] sm:$0xf]
  %v2591 = vld [vmem:[%s2575 + $0x3c] sm:$0xf]
  %v2592 = vld [vmem:[%s2575 + $0x40] sm:$0xf]
  %v2593 = vld [vmem:[%s2575 + $0x44] sm:$0xf]
  %v2594 = vld [vmem:[%s2575 + $0x48] sm:$0xf]
  %v2595 = vld [vmem:[%s2575 + $0x4c] sm:$0xf]
  %v2596 = vld [vmem:[%s2575 + $0x50] sm:$0xf]
  %v2597 = vld [vmem:[%s2575 + $0x54] sm:$0xf]
  %v2598 = vld [vmem:[%s2575 + $0x58] sm:$0xf]
  %v2599 = vld [vmem:[%s2575 + $0x5c] sm:$0xf]
  %v2600 = vld [vmem:[%s2575 + $0x60] sm:$0xf]
  %v2601 = vld [vmem:[%s2575 + $0x64] sm:$0xf]
  %v2602 = vld [vmem:[%s2575 + $0x68] sm:$0xf]
  %v2603 = vld [vmem:[%s2575 + $0x6c] sm:$0xf]
  %v2604 = vld [vmem:[%s2575 + $0x70] sm:$0xf]
  %v2605 = vld [vmem:[%s2575 + $0x74] sm:$0xf]
  %v2606 = vld [vmem:[%s2575 + $0x78] sm:$0xf]
  %v2607 = vld [vmem:[%s2575 + $0x7c] sm:$0xf]
  %v2608 = vpack.c.bf16 %v2484, %v2484
  %v2609 = vpack.c.bf16 %v2490, %v2490
  %v2610 = vpack.c.bf16 %v2496, %v2496
  %v2611 = vpack.c.bf16 %v2502, %v2502
  %v2612 = vpack.c.bf16 %v2508, %v2508
  %v2613 = vpack.c.bf16 %v2514, %v2514
  %v2614 = vpack.c.bf16 %v2520, %v2520
  %v2615 = vpack.c.bf16 %v2526, %v2526
  %v2616 = vpack.c.bf16 %v2532, %v2532
  %v2617 = vpack.c.bf16 %v2538, %v2538
  %v2618 = vpack.c.bf16 %v2544, %v2544
  %v2619 = vpack.c.bf16 %v2550, %v2550
  %v2620 = vpack.c.bf16 %v2556, %v2556
  %v2621 = vpack.c.bf16 %v2562, %v2562
  %v2622 = vpack.c.bf16 %v2568, %v2568
  %v2623 = vpack.c.bf16 %v2574, %v2574
  %v2624 = vlaneseq
  %v2625 = vshrl.u32 %v2624, 7
  %v2626 = vsub.s32 1, %v2625
  %v2627 = vrot.slane %v34, %v2626
  %v2644 = vunpack.c.l.b16 %v2608
  %v2645 = vunpack.c.l.b16 %v2609
  %v2646 = vunpack.c.l.b16 %v2610
  %v2647 = vunpack.c.l.b16 %v2611
  %v2648 = vunpack.c.l.b16 %v2612
  %v2649 = vunpack.c.l.b16 %v2613
  %v2650 = vunpack.c.l.b16 %v2614
  %v2651 = vunpack.c.l.b16 %v2615
  %v2652 = vunpack.c.l.b16 %v2616
  %v2653 = vunpack.c.l.b16 %v2617
  %v2654 = vunpack.c.l.b16 %v2618
  %v2655 = vunpack.c.l.b16 %v2619
  %v2656 = vunpack.c.l.b16 %v2620
  %v2657 = vunpack.c.l.b16 %v2621
  %v2658 = vunpack.c.l.b16 %v2622
  %v2659 = vunpack.c.l.b16 %v2623
  %v2660 = vsel %vm1267, %v2646, %v2644
  %v2661 = vsel %vm1269, %v2648, %v2660
  %v2662 = vsel %vm1271, %v2650, %v2661
  %v2663 = vsel %vm1273, %v2652, %v2662
  %v2664 = vsel %vm1275, %v2654, %v2663
  %v2665 = vsel %vm1277, %v2656, %v2664
  %v2666 = vsel %vm1279, %v2658, %v2665
  %v2667 = vsel %vm1267, %v2647, %v2645
  %v2668 = vsel %vm1269, %v2649, %v2667
  %v2669 = vsel %vm1271, %v2651, %v2668
  %v2670 = vsel %vm1273, %v2653, %v2669
  %v2671 = vsel %vm1275, %v2655, %v2670
  %v2672 = vsel %vm1277, %v2657, %v2671
  %v2673 = vsel %vm1279, %v2659, %v2672
  %v2674 = vpack.c.b16 %v2666, %v2666
  %v2675 = vpack.c.b16 %v2673, %v2673
  %v2710 = vunpack.c.l.b16 %v2576
  %v2711 = vunpack.c.l.b16 %v2577
  %v2712 = vunpack.c.l.b16 %v2578
  %v2713 = vunpack.c.l.b16 %v2579
  %v2714 = vunpack.c.l.b16 %v2580
  %v2715 = vunpack.c.l.b16 %v2581
  %v2716 = vunpack.c.l.b16 %v2582
  %v2717 = vunpack.c.l.b16 %v2583
  %v2718 = vunpack.c.l.b16 %v2584
  %v2719 = vunpack.c.l.b16 %v2585
  %v2720 = vunpack.c.l.b16 %v2586
  %v2721 = vunpack.c.l.b16 %v2587
  %v2722 = vunpack.c.l.b16 %v2588
  %v2723 = vunpack.c.l.b16 %v2589
  %v2724 = vunpack.c.l.b16 %v2590
  %v2725 = vunpack.c.l.b16 %v2591
  %v2726 = vunpack.c.l.b16 %v2592
  %v2727 = vunpack.c.l.b16 %v2593
  %v2728 = vunpack.c.l.b16 %v2594
  %v2729 = vunpack.c.l.b16 %v2595
  %v2730 = vunpack.c.l.b16 %v2596
  %v2731 = vunpack.c.l.b16 %v2597
  %v2732 = vunpack.c.l.b16 %v2598
  %v2733 = vunpack.c.l.b16 %v2599
  %v2734 = vunpack.c.l.b16 %v2600
  %v2735 = vunpack.c.l.b16 %v2601
  %v2736 = vunpack.c.l.b16 %v2602
  %v2737 = vunpack.c.l.b16 %v2603
  %v2738 = vunpack.c.l.b16 %v2604
  %v2739 = vunpack.c.l.b16 %v2605
  %v2740 = vunpack.c.l.b16 %v2606
  %v2741 = vunpack.c.l.b16 %v2607
  %v2742 = vpack.c.b16 %v2711, %v2710
  %v2743 = vpack.c.b16 %v2713, %v2712
  %v2744 = vpack.c.b16 %v2715, %v2714
  %v2745 = vpack.c.b16 %v2717, %v2716
  %v2746 = vpack.c.b16 %v2719, %v2718
  %v2747 = vpack.c.b16 %v2721, %v2720
  %v2748 = vpack.c.b16 %v2723, %v2722
  %v2749 = vpack.c.b16 %v2725, %v2724
  %v2750 = vpack.c.b16 %v2727, %v2726
  %v2751 = vpack.c.b16 %v2729, %v2728
  %v2752 = vpack.c.b16 %v2731, %v2730
  %v2753 = vpack.c.b16 %v2733, %v2732
  %v2754 = vpack.c.b16 %v2735, %v2734
  %v2755 = vpack.c.b16 %v2737, %v2736
  %v2756 = vpack.c.b16 %v2739, %v2738
  %v2757 = vpack.c.b16 %v2741, %v2740
  %2774 = vmatprep.subr.bf16.mxu0 0
  %2775 = vmatpush1.bf16.msra.mxu0 %v2749
  %2776 = vmatprep.subr.bf16.mxu0 0
  %2777 = vmatpush1.bf16.msra.mxu0 %v2748
  %2778 = vmatprep.subr.bf16.mxu0 0
  %2779 = vmatpush1.bf16.msra.mxu0 %v2747
  %2780 = vmatprep.subr.bf16.mxu0 0
  %2781 = vmatpush1.bf16.msra.mxu0 %v2746
  %2782 = vmatprep.subr.bf16.mxu0 0
  %2783 = vmatpush1.bf16.msra.mxu0 %v2745
  %2784 = vmatprep.subr.bf16.mxu0 0
  %2785 = vmatpush1.bf16.msra.mxu0 %v2744
  %2786 = vmatprep.subr.bf16.mxu0 0
  %2787 = vmatpush1.bf16.msra.mxu0 %v2743
  %2788 = vmatprep.subr.bf16.mxu0 0
  %2789 = vmatpush1.bf16.msra.mxu0 %v2742
  %2790 = vmatprep.subr.bf16.mxu0 0
  %2791 = vmatpush2.bf16.msra.mxu0 %v2757
  %2792 = vmatprep.subr.bf16.mxu0 0
  %2793 = vmatpush2.bf16.msra.mxu0 %v2756
  %2794 = vmatprep.subr.bf16.mxu0 0
  %2795 = vmatpush2.bf16.msra.mxu0 %v2755
  %2796 = vmatprep.subr.bf16.mxu0 0
  %2797 = vmatpush2.bf16.msra.mxu0 %v2754
  %2798 = vmatprep.subr.bf16.mxu0 0
  %2799 = vmatpush2.bf16.msra.mxu0 %v2753
  %2800 = vmatprep.subr.bf16.mxu0 0
  %2801 = vmatpush2.bf16.msra.mxu0 %v2752
  %2802 = vmatprep.subr.bf16.mxu0 0
  %2803 = vmatpush2.bf16.msra.mxu0 %v2751
  %2804 = vmatprep.subr.bf16.mxu0 0
  %2805 = vmatpush2.bf16.msra.mxu0 %v2750
  %2806 = vmatprep.mubr.bf16.mxu0 %v2675
  %2807 = vmatmul.mubr.bf16.gmra.mxu0 %v2674
  %v2808 = vpop.f32.mrf.mxu0
  %v2809 = vadd.f32 %v2627, %v2808
  %v2810 = vpop.f32.mrf.mxu0
  %v2811 = vpop.f32.mrf.mxu0
  %v2812 = vpop.f32.mrf.mxu0
  %2813 = vdwg.mxu0
  %v2814 = vadd.f32 %v2809, %v1609
  %v2815 = vsel %vm60, %v2814, 0.0
  %2816 = vadd.xlane.f32.xlu0 %v2815
  %v2817 = vpop.xlane.xlu0 %2816
  %v2818 = vmul.f32 %v2817, %v1432
  %v2819 = vsub.f32 %v2814, %v2818
  %v2820 = vmul.f32 %v2819, %v2819
  %v2821 = vsel %vm60, %v2820, 0.0
  %2822 = vadd.xlane.f32.xlu0 %v2821
  %v2823 = vpop.xlane.xlu0 %2822
  %v2824 = vmul.f32 %v2823, %v1432
  %v2825 = vadd.f32 %v2824, 1e-05
  %v2826 = vrsqrt.pop %v2825
  %v2827 = vmul.f32 %v2819, %v2826
  %v2828 = vlaneseq
  %v2829 = vshrl.u32 %v2828, 7
  %v2830 = vsub.s32 2, %v2829
  %v2831 = vrot.slane %v34, %v2830
  %v2832 = vmul.f32 %v2827, %v2831
  %v2833 = vlaneseq
  %v2834 = vshrl.u32 %v2833, 7
  %v2835 = vsub.s32 3, %v2834
  %v2836 = vrot.slane %v34, %v2835
  %v2837 = vadd.f32 %v2832, %v2836
  %s2838 = scalar_lea.vmem %s2, 64
  %v2839 = vld [vmem:[%s2838] sm:$0xf]
  %v2840 = vld [vmem:[%s2838 + $0x4] sm:$0xf]
  %v2841 = vld [vmem:[%s2838 + $0x8] sm:$0xf]
  %v2842 = vld [vmem:[%s2838 + $0xc] sm:$0xf]
  %v2843 = vpack.c.bf16 %v2837, %v2837
  %v2844 = vlaneseq
  %v2845 = vshrl.u32 %v2844, 7
  %v2846 = vsub.s32 4, %v2845
  %v2847 = vrot.slane %v34, %v2846
  %v2852 = vunpack.c.l.b16 %v2839
  %v2853 = vunpack.c.l.b16 %v2840
  %v2854 = vunpack.c.l.b16 %v2841
  %v2855 = vunpack.c.l.b16 %v2842
  %v2856 = vpack.c.b16 %v2853, %v2852
  %v2857 = vpack.c.b16 %v2855, %v2854
  %v2861 = vsel %vm60, %v2843, 0
  %2863 = vmatprep.subr.bf16.mxu0 0
  %2864 = vmatpush1.bf16.msra.mxu0 0
  %2865 = vmatprep.subr.bf16.mxu0 0
  %2866 = vmatpush1.bf16.msra.mxu0 0
  %2867 = vmatprep.subr.bf16.mxu0 0
  %2868 = vmatpush1.bf16.msra.mxu0 0
  %2869 = vmatprep.subr.bf16.mxu0 0
  %2870 = vmatpush1.bf16.msra.mxu0 0
  %2871 = vmatprep.subr.bf16.mxu0 0
  %2872 = vmatpush1.bf16.msra.mxu0 0
  %2873 = vmatprep.subr.bf16.mxu0 0
  %2874 = vmatpush1.bf16.msra.mxu0 0
  %2875 = vmatprep.subr.bf16.mxu0 0
  %2876 = vmatpush1.bf16.msra.mxu0 %v2857
  %2877 = vmatprep.subr.bf16.mxu0 0
  %2878 = vmatpush1.bf16.msra.mxu0 %v2856
  %2879 = vmatprep.subr.bf16.mxu0 0
  %2880 = vmatpush2.bf16.msra.mxu0 0
  %2881 = vmatprep.subr.bf16.mxu0 0
  %2882 = vmatpush2.bf16.msra.mxu0 0
  %2883 = vmatprep.subr.bf16.mxu0 0
  %2884 = vmatpush2.bf16.msra.mxu0 0
  %2885 = vmatprep.subr.bf16.mxu0 0
  %2886 = vmatpush2.bf16.msra.mxu0 0
  %2887 = vmatprep.subr.bf16.mxu0 0
  %2888 = vmatpush2.bf16.msra.mxu0 0
  %2889 = vmatprep.subr.bf16.mxu0 0
  %2890 = vmatpush2.bf16.msra.mxu0 0
  %2891 = vmatprep.subr.bf16.mxu0 0
  %2892 = vmatpush2.bf16.msra.mxu0 0
  %2893 = vmatprep.subr.bf16.mxu0 0
  %2894 = vmatpush2.bf16.msra.mxu0 0
  %2895 = vmatprep.mubr.bf16.mxu0 0
  %2896 = vmatmul.mubr.bf16.gmra.mxu0 %v2861
  %v2897 = vpop.f32.mrf.mxu0
  %v2898 = vadd.f32 %v2847, %v2897
  %v2899 = vpop.f32.mrf.mxu0
  %v2900 = vpop.f32.mrf.mxu0
  %v2901 = vpop.f32.mrf.mxu0
  %2902 = vdwg.mxu0
  %vm2903 = vcmp.ge.f32.partialorder %v2898, 0.0
  %v2904 = vmul.f32 %v2898, 0.01
  %v2905 = vsel %vm2903, %v2898, %v2904
  %s2906 = scalar_lea.vmem %s2, 80
  %v2907 = vld [vmem:[%s2906] sm:$0xf]
  %v2908 = vld [vmem:[%s2906 + $0x4] sm:$0xf]
  %v2909 = vld [vmem:[%s2906 + $0x8] sm:$0xf]
  %v2910 = vld [vmem:[%s2906 + $0xc] sm:$0xf]
  %v2911 = vpack.c.bf16 %v2905, %v2905
  %v2912 = vlaneseq
  %v2913 = vshrl.u32 %v2912, 7
  %v2914 = vsub.s32 5, %v2913
  %v2915 = vrot.slane %v34, %v2914
  %v2920 = vunpack.c.l.b16 %v2907
  %v2921 = vunpack.c.l.b16 %v2908
  %v2922 = vunpack.c.l.b16 %v2909
  %v2923 = vunpack.c.l.b16 %v2910
  %v2924 = vpack.c.b16 %v2921, %v2920
  %v2925 = vpack.c.b16 %v2923, %v2922
  %v2929 = vsel %vm60, %v2911, 0
  %2931 = vmatprep.subr.bf16.mxu0 0
  %2932 = vmatpush1.bf16.msra.mxu0 0
  %2933 = vmatprep.subr.bf16.mxu0 0
  %2934 = vmatpush1.bf16.msra.mxu0 0
  %2935 = vmatprep.subr.bf16.mxu0 0
  %2936 = vmatpush1.bf16.msra.mxu0 0
  %2937 = vmatprep.subr.bf16.mxu0 0
  %2938 = vmatpush1.bf16.msra.mxu0 0
  %2939 = vmatprep.subr.bf16.mxu0 0
  %2940 = vmatpush1.bf16.msra.mxu0 0
  %2941 = vmatprep.subr.bf16.mxu0 0
  %2942 = vmatpush1.bf16.msra.mxu0 0
  %2943 = vmatprep.subr.bf16.mxu0 0
  %2944 = vmatpush1.bf16.msra.mxu0 %v2925
  %2945 = vmatprep.subr.bf16.mxu0 0
  %2946 = vmatpush1.bf16.msra.mxu0 %v2924
  %2947 = vmatprep.subr.bf16.mxu0 0
  %2948 = vmatpush2.bf16.msra.mxu0 0
  %2949 = vmatprep.subr.bf16.mxu0 0
  %2950 = vmatpush2.bf16.msra.mxu0 0
  %2951 = vmatprep.subr.bf16.mxu0 0
  %2952 = vmatpush2.bf16.msra.mxu0 0
  %2953 = vmatprep.subr.bf16.mxu0 0
  %2954 = vmatpush2.bf16.msra.mxu0 0
  %2955 = vmatprep.subr.bf16.mxu0 0
  %2956 = vmatpush2.bf16.msra.mxu0 0
  %2957 = vmatprep.subr.bf16.mxu0 0
  %2958 = vmatpush2.bf16.msra.mxu0 0
  %2959 = vmatprep.subr.bf16.mxu0 0
  %2960 = vmatpush2.bf16.msra.mxu0 0
  %2961 = vmatprep.subr.bf16.mxu0 0
  %2962 = vmatpush2.bf16.msra.mxu0 0
  %2963 = vmatprep.mubr.bf16.mxu0 0
  %2964 = vmatmul.mubr.bf16.gmra.mxu0 %v2929
  %v2965 = vpop.f32.mrf.mxu0
  %v2966 = vadd.f32 %v2915, %v2965
  %v2967 = vpop.f32.mrf.mxu0
  %v2968 = vpop.f32.mrf.mxu0
  %v2969 = vpop.f32.mrf.mxu0
  %2970 = vdwg.mxu0
  %v2971 = vadd.f32 %v2966, %v2837
  %v2972 = vsel %vm60, %v2971, 0.0
  %2973 = vadd.xlane.f32.xlu0 %v2972
  %v2974 = vpop.xlane.xlu0 %2973
  %v2975 = vmul.f32 %v2974, %v1432
  %v2976 = vsub.f32 %v2971, %v2975
  %v2977 = vmul.f32 %v2976, %v2976
  %v2978 = vsel %vm60, %v2977, 0.0
  %2979 = vadd.xlane.f32.xlu0 %v2978
  %v2980 = vpop.xlane.xlu0 %2979
  %v2981 = vmul.f32 %v2980, %v1432
  %v2982 = vadd.f32 %v2981, 1e-05
  %v2983 = vrsqrt.pop %v2982
  %v2984 = vmul.f32 %v2976, %v2983
  %v2985 = vlaneseq
  %v2986 = vshrl.u32 %v2985, 7
  %v2987 = vsub.s32 6, %v2986
  %v2988 = vrot.slane %v34, %v2987
  %v2989 = vmul.f32 %v2984, %v2988
  %v2990 = vlaneseq
  %v2991 = vshrl.u32 %v2990, 7
  %v2992 = vsub.s32 7, %v2991
  %v2993 = vrot.slane %v34, %v2992
  %v2994 = vadd.f32 %v2989, %v2993
  %s2995 = scalar_lea.vmem %s2, 96
  %v2996 = vld [vmem:[%s2995] sm:$0xf]
  %v2997 = vld [vmem:[%s2995 + $0x4] sm:$0xf]
  %v2998 = vld [vmem:[%s2995 + $0x8] sm:$0xf]
  %v2999 = vld [vmem:[%s2995 + $0xc] sm:$0xf]
  %v3000 = vpack.c.bf16 %v2994, %v2994
  %v3001 = vlaneseq
  %v3002 = vshrl.u32 %v3001, 7
  %v3003 = vsub.s32 0, %v3002
  %v3004 = vrot.slane %v35, %v3003
  %v3009 = vunpack.c.l.b16 %v2996
  %v3010 = vunpack.c.l.b16 %v2997
  %v3011 = vunpack.c.l.b16 %v2998
  %v3012 = vunpack.c.l.b16 %v2999
  %v3013 = vpack.c.b16 %v3010, %v3009
  %v3014 = vpack.c.b16 %v3012, %v3011
  %v3018 = vsel %vm60, %v3000, 0
  %3020 = vmatprep.subr.bf16.mxu0 0
  %3021 = vmatpush1.bf16.msra.mxu0 0
  %3022 = vmatprep.subr.bf16.mxu0 0
  %3023 = vmatpush1.bf16.msra.mxu0 0
  %3024 = vmatprep.subr.bf16.mxu0 0
  %3025 = vmatpush1.bf16.msra.mxu0 0
  %3026 = vmatprep.subr.bf16.mxu0 0
  %3027 = vmatpush1.bf16.msra.mxu0 0
  %3028 = vmatprep.subr.bf16.mxu0 0
  %3029 = vmatpush1.bf16.msra.mxu0 0
  %3030 = vmatprep.subr.bf16.mxu0 0
  %3031 = vmatpush1.bf16.msra.mxu0 0
  %3032 = vmatprep.subr.bf16.mxu0 0
  %3033 = vmatpush1.bf16.msra.mxu0 %v3014
  %3034 = vmatprep.subr.bf16.mxu0 0
  %3035 = vmatpush1.bf16.msra.mxu0 %v3013
  %3036 = vmatprep.subr.bf16.mxu0 0
  %3037 = vmatpush2.bf16.msra.mxu0 0
  %3038 = vmatprep.subr.bf16.mxu0 0
  %3039 = vmatpush2.bf16.msra.mxu0 0
  %3040 = vmatprep.subr.bf16.mxu0 0
  %3041 = vmatpush2.bf16.msra.mxu0 0
  %3042 = vmatprep.subr.bf16.mxu0 0
  %3043 = vmatpush2.bf16.msra.mxu0 0
  %3044 = vmatprep.subr.bf16.mxu0 0
  %3045 = vmatpush2.bf16.msra.mxu0 0
  %3046 = vmatprep.subr.bf16.mxu0 0
  %3047 = vmatpush2.bf16.msra.mxu0 0
  %3048 = vmatprep.subr.bf16.mxu0 0
  %3049 = vmatpush2.bf16.msra.mxu0 0
  %3050 = vmatprep.subr.bf16.mxu0 0
  %3051 = vmatpush2.bf16.msra.mxu0 0
  %3052 = vmatprep.mubr.bf16.mxu0 0
  %3053 = vmatmul.mubr.bf16.gmra.mxu0 %v3018
  %v3054 = vpop.f32.mrf.mxu0
  %v3055 = vadd.f32 %v3004, %v3054
  %v3056 = vpop.f32.mrf.mxu0
  %v3057 = vpop.f32.mrf.mxu0
  %v3058 = vpop.f32.mrf.mxu0
  %3059 = vdwg.mxu0
  %vm3060 = vcmp.ge.f32.partialorder %v3055, 0.0
  %v3061 = vmul.f32 %v3055, 0.01
  %v3062 = vsel %vm3060, %v3055, %v3061
  %s3063 = scalar_lea.vmem %s2, 112
  %v3064 = vld [vmem:[%s3063] sm:$0xf]
  %v3065 = vld [vmem:[%s3063 + $0x4] sm:$0xf]
  %v3066 = vld [vmem:[%s3063 + $0x8] sm:$0xf]
  %v3067 = vld [vmem:[%s3063 + $0xc] sm:$0xf]
  %v3068 = vpack.c.bf16 %v3062, %v3062
  %v3069 = vlaneseq
  %v3070 = vshrl.u32 %v3069, 7
  %v3071 = vsub.s32 1, %v3070
  %v3072 = vrot.slane %v35, %v3071
  %v3077 = vunpack.c.l.b16 %v3064
  %v3078 = vunpack.c.l.b16 %v3065
  %v3079 = vunpack.c.l.b16 %v3066
  %v3080 = vunpack.c.l.b16 %v3067
  %v3081 = vpack.c.b16 %v3078, %v3077
  %v3082 = vpack.c.b16 %v3080, %v3079
  %v3086 = vsel %vm60, %v3068, 0
  %3088 = vmatprep.subr.bf16.mxu0 0
  %3089 = vmatpush1.bf16.msra.mxu0 0
  %3090 = vmatprep.subr.bf16.mxu0 0
  %3091 = vmatpush1.bf16.msra.mxu0 0
  %3092 = vmatprep.subr.bf16.mxu0 0
  %3093 = vmatpush1.bf16.msra.mxu0 0
  %3094 = vmatprep.subr.bf16.mxu0 0
  %3095 = vmatpush1.bf16.msra.mxu0 0
  %3096 = vmatprep.subr.bf16.mxu0 0
  %3097 = vmatpush1.bf16.msra.mxu0 0
  %3098 = vmatprep.subr.bf16.mxu0 0
  %3099 = vmatpush1.bf16.msra.mxu0 0
  %3100 = vmatprep.subr.bf16.mxu0 0
  %3101 = vmatpush1.bf16.msra.mxu0 %v3082
  %3102 = vmatprep.subr.bf16.mxu0 0
  %3103 = vmatpush1.bf16.msra.mxu0 %v3081
  %3104 = vmatprep.subr.bf16.mxu0 0
  %3105 = vmatpush2.bf16.msra.mxu0 0
  %3106 = vmatprep.subr.bf16.mxu0 0
  %3107 = vmatpush2.bf16.msra.mxu0 0
  %3108 = vmatprep.subr.bf16.mxu0 0
  %3109 = vmatpush2.bf16.msra.mxu0 0
  %3110 = vmatprep.subr.bf16.mxu0 0
  %3111 = vmatpush2.bf16.msra.mxu0 0
  %3112 = vmatprep.subr.bf16.mxu0 0
  %3113 = vmatpush2.bf16.msra.mxu0 0
  %3114 = vmatprep.subr.bf16.mxu0 0
  %3115 = vmatpush2.bf16.msra.mxu0 0
  %3116 = vmatprep.subr.bf16.mxu0 0
  %3117 = vmatpush2.bf16.msra.mxu0 0
  %3118 = vmatprep.subr.bf16.mxu0 0
  %3119 = vmatpush2.bf16.msra.mxu0 0
  %3120 = vmatprep.mubr.bf16.mxu0 0
  %3121 = vmatmul.mubr.bf16.gmra.mxu0 %v3086
  %v3122 = vpop.f32.mrf.mxu0
  %v3123 = vadd.f32 %v3072, %v3122
  %v3124 = vpop.f32.mrf.mxu0
  %v3125 = vpop.f32.mrf.mxu0
  %v3126 = vpop.f32.mrf.mxu0
  %3127 = vdwg.mxu0
  %vm3128 = vcmp.ge.f32.partialorder %v3123, 0.0
  %v3129 = vmul.f32 %v3123, 0.01
  %v3130 = vsel %vm3128, %v3123, %v3129
  %s3131 = scalar_lea.vmem %s2, 128
  %v3132 = vld [vmem:[%s3131] sm:$0xf]
  %v3133 = vld [vmem:[%s3131 + $0x4] sm:$0xf]
  %v3134 = vld [vmem:[%s3131 + $0x8] sm:$0xf]
  %v3135 = vld [vmem:[%s3131 + $0xc] sm:$0xf]
  %v3136 = vpack.c.bf16 %v3130, %v3130
  %v3137 = vlaneseq
  %v3138 = vshrl.u32 %v3137, 7
  %v3139 = vsub.s32 2, %v3138
  %v3140 = vrot.slane %v35, %v3139
  %v3145 = vunpack.c.l.b16 %v3132
  %v3146 = vunpack.c.l.b16 %v3133
  %v3147 = vunpack.c.l.b16 %v3134
  %v3148 = vunpack.c.l.b16 %v3135
  %v3149 = vpack.c.b16 %v3146, %v3145
  %v3150 = vpack.c.b16 %v3148, %v3147
  %v3154 = vsel %vm60, %v3136, 0
  %3156 = vmatprep.subr.bf16.mxu0 0
  %3157 = vmatpush1.bf16.msra.mxu0 0
  %3158 = vmatprep.subr.bf16.mxu0 0
  %3159 = vmatpush1.bf16.msra.mxu0 0
  %3160 = vmatprep.subr.bf16.mxu0 0
  %3161 = vmatpush1.bf16.msra.mxu0 0
  %3162 = vmatprep.subr.bf16.mxu0 0
  %3163 = vmatpush1.bf16.msra.mxu0 0
  %3164 = vmatprep.subr.bf16.mxu0 0
  %3165 = vmatpush1.bf16.msra.mxu0 0
  %3166 = vmatprep.subr.bf16.mxu0 0
  %3167 = vmatpush1.bf16.msra.mxu0 0
  %3168 = vmatprep.subr.bf16.mxu0 0
  %3169 = vmatpush1.bf16.msra.mxu0 %v3150
  %3170 = vmatprep.subr.bf16.mxu0 0
  %3171 = vmatpush1.bf16.msra.mxu0 %v3149
  %3172 = vmatprep.subr.bf16.mxu0 0
  %3173 = vmatpush2.bf16.msra.mxu0 0
  %3174 = vmatprep.subr.bf16.mxu0 0
  %3175 = vmatpush2.bf16.msra.mxu0 0
  %3176 = vmatprep.subr.bf16.mxu0 0
  %3177 = vmatpush2.bf16.msra.mxu0 0
  %3178 = vmatprep.subr.bf16.mxu0 0
  %3179 = vmatpush2.bf16.msra.mxu0 0
  %3180 = vmatprep.subr.bf16.mxu0 0
  %3181 = vmatpush2.bf16.msra.mxu0 0
  %3182 = vmatprep.subr.bf16.mxu0 0
  %3183 = vmatpush2.bf16.msra.mxu0 0
  %3184 = vmatprep.subr.bf16.mxu0 0
  %3185 = vmatpush2.bf16.msra.mxu0 0
  %3186 = vmatprep.subr.bf16.mxu0 0
  %3187 = vmatpush2.bf16.msra.mxu0 0
  %3188 = vmatprep.mubr.bf16.mxu0 0
  %3189 = vmatmul.mubr.bf16.gmra.mxu0 %v3154
  %v3190 = vpop.f32.mrf.mxu0
  %v3191 = vadd.f32 %v3140, %v3190
  %v3192 = vpop.f32.mrf.mxu0
  %v3193 = vpop.f32.mrf.mxu0
  %v3194 = vpop.f32.mrf.mxu0
  %3195 = vdwg.mxu0
  %v3196 = vmul.f32 %v3191, 0.5
  %v3197 = vtanh.pop %v3196
  %v3198 = vadd.f32 %v3197, 1.0
  %v3199 = vmul.f32 %v3198, 0.5
  %vm3200 = vcmask 7168
  %3201 = vst.msk [vmem:[%s9] sm:$0xff] %vm3200, %v3199
  // Predicated region
  $region38: #{network_finetuning_forward.1} parent=0 // pred_check
    _
  $region39: #{network_finetuning_forward.1} parent=0 // pred_check_branch
    %3203 = sbr.rel (0) target = $region41
  $region40: #{network_finetuning_forward.1} parent=0 // pred_region
    _
  $region41: #{network_finetuning_forward.1} parent=0 // pred_fallthru
    _
  // Predicated region
  $region42: #{network_finetuning_forward.1} parent=0 // pred_check
    _
  $region43: #{network_finetuning_forward.1} parent=0 // pred_check_branch
    %3205 = sbr.rel (0) target = $region45
  $region44: #{network_finetuning_forward.1} parent=0 // pred_region
    _
  $region45: #{network_finetuning_forward.1} parent=0 // pred_fallthru
    _

</llo_original>
